<compile_context>
chip_gen: v5e
topology: v5e:2x2
jax: 0.10.0
libtpu: 0.0.40
codegen_flags: <defaults>
</compile_context>

<pallas_src>
import jax
import jax.numpy as jnp
from jax import lax
from jax.experimental import pallas as pl
from jax.experimental.pallas import tpu as pltpu


def _round_up(x, m):
    return ((x + m - 1) // m) * m


# ----------------------------------------------------------------------------
# Fused kernel: 4 encoders batched, single invocation (grid=(1,)).
# ----------------------------------------------------------------------------
def fused_state_kernel(len_ref, emb_ref, wih_ref, bih_ref, whh_ref, bhn_ref,
                       whead_ref, bhead_ref, out_ref, gi_ref):
    # len_ref   : (4, Bp, 1)      int32
    # emb_ref   : (4, S*Bp, Hp)   bf16   (time-major, flattened per encoder)
    # wih_ref   : (4, Hp, 3Hp)    bf16   bih_ref : (4, 1, 3Hp) f32 (b_ih + b_hr/z)
    # whh_ref   : (4, Hp, 3Hp)    bf16   bhn_ref : (4, 1, Hp)  f32 (n-gate b_hn)
    # whead_ref : (4, Hp, 2Hp)    bf16   bhead_ref: (1, 2Hp)   f32 ([bx | bh])
    # out_ref   : (Bp, 2Hp)       f32    gi_ref  : (4, S*Bp, 3Hp) f32 scratch
    E, SB, Hp = emb_ref.shape
    Bp = len_ref.shape[1]
    S = SB // Bp
    wdt = whh_ref.dtype

    # ---- Hoisted input-gate pre-activations: one big weight-stationary MXU
    # pass per encoder (4 back-to-back pushes), parked in VMEM scratch.
    for e in range(E):                                   # static python loop
        gi_ref[e] = (jnp.dot(emb_ref[e], wih_ref[e],
                             preferred_element_type=jnp.float32)
                     + bih_ref[e])

    # ---- Serial GRU recurrence, all 4 encoders batched per step.
    whh = whh_ref[...]                                   # (4, Hp, 3Hp) bf16
    lengths = len_ref[...]                               # (4, Bp, 1) int32
    bhn = jnp.broadcast_to(bhn_ref[...], (E, Bp, Hp))    # hoisted broadcast

    def step(t, h):                                      # h: (4, Bp, Hp) f32
        off = pl.multiple_of(t * Bp, Bp)
        gi_t = gi_ref[:, pl.ds(off, Bp), :]              # (4, Bp, 3Hp) f32
        gh = jnp.einsum("ebh,ehg->ebg", h.astype(wdt), whh,
                        preferred_element_type=jnp.float32)
        r = jax.nn.sigmoid(gi_t[..., 0:Hp] + gh[..., 0:Hp])
        z = jax.nn.sigmoid(gi_t[..., Hp:2 * Hp] + gh[..., Hp:2 * Hp])
        n = jnp.tanh(gi_t[..., 2 * Hp:] + r * (gh[..., 2 * Hp:] + bhn))
        h_new = (1.0 - z) * n + z * h
        # Packed-sequence semantics: padded timesteps do not advance the state.
        return jnp.where(t < lengths, h_new, h)

    h_last = lax.fori_loop(0, S, step, jnp.zeros((E, Bp, Hp), jnp.float32),
                           unroll=min(S, 8))

    # ---- Fused heads: out = relu(sum_e h_e @ [Wx_e | Wh_e] + [bx | bh]).
    acc = jnp.zeros((Bp, whead_ref.shape[2]), jnp.float32)
    for e in range(E):
        acc += jnp.dot(h_last[e].astype(wdt), whead_ref[e],
                       preferred_element_type=jnp.float32)
    out_ref[...] = jnp.maximum(acc + bhead_ref[...], 0.0)


# ----------------------------------------------------------------------------
# Host-side wrapper (glue: embedding gather, lengths, padding, param layout).
# ----------------------------------------------------------------------------
def state_network_forward(obs, params, hidden_size):
    """obs: (4, B, S) int32.  Returns (x: (B, H), h: (1, B, H))."""
    H = hidden_size
    num_enc, B, S = obs.shape
    assert num_enc == 4
    wdt = jnp.bfloat16

    Hp = _round_up(H, 128)       # lane width
    Bp = _round_up(B, 8)         # f32 sublane tile

    # Embeddings, time-major, padded, flattened to (S*Bp, Hp) per encoder.
    # TODO(synk): gather embeddings in-kernel (scalar-prefetch token ids,
    # VMEM-resident tables) to drop this (4, S*Bp, Hp) HBM array.
    embs = []
    for e in range(4):
        emb = params["emb_w"][e][obs[e]]                      # (B, S, H)
        emb = jnp.transpose(emb, (1, 0, 2))                   # (S, B, H)
        emb = jnp.pad(emb, ((0, 0), (0, Bp - B), (0, Hp - H)))
        embs.append(emb.reshape(S * Bp, Hp))
    emb_all = jnp.stack(embs, axis=0).astype(wdt)             # (4, S*Bp, Hp)

    # lengths[b] = last nonzero index + 1 (matches torch.nonzero(n)[-1] + 1).
    # NOTE: an all-zero row yields length S here; the PyTorch original raises.
    nz = (obs != 0)
    last_nz = (S - 1) - jnp.argmax(jnp.flip(nz, axis=-1), axis=-1)     # (4, B)
    lengths = jnp.pad((last_nz + 1).astype(jnp.int32),
                      ((0, 0), (0, Bp - B)))[..., None]                # (4, Bp, 1)

    # GRU weights: pre-transposed, each [r|z|n] gate block padded to Hp lanes.
    def pack_gate_w(w):          # (3H, H) torch layout -> (Hp, 3Hp)
        wt = w.T
        return jnp.concatenate(
            [jnp.pad(wt[:, g * H:(g + 1) * H], ((0, Hp - H), (0, Hp - H)))
             for g in range(3)], axis=1)

    def pack_gate_b(b):          # (3H,) -> (1, 3Hp)
        return jnp.concatenate(
            [jnp.pad(b[g * H:(g + 1) * H], (0, Hp - H)) for g in range(3)])[None, :]

    wih = jnp.stack([pack_gate_w(params["w_ih"][e]) for e in range(4)]).astype(wdt)
    whh = jnp.stack([pack_gate_w(params["w_hh"][e]) for e in range(4)]).astype(wdt)
    # Fold r/z pieces of b_hh into the hoisted bias; keep only b_hn (scaled by r).
    bih = jnp.stack([pack_gate_b(
        params["b_ih"][e] + jnp.concatenate(
            [params["b_hh"][e][:2 * H], jnp.zeros((H,), jnp.float32)]))
        for e in range(4)])                                            # (4,1,3Hp) f32
    bhn = jnp.stack([jnp.pad(params["b_hh"][e][2 * H:], (0, Hp - H))[None, :]
                     for e in range(4)])                               # (4,1,Hp)  f32

    # Heads fused into one (Hp, 2Hp) weight per encoder: [fcx_e | fch_e].
    def head_slice(w, e):
        return jnp.pad(w[:, e * H:(e + 1) * H].T, ((0, Hp - H), (0, Hp - H)))

    whead = jnp.stack([jnp.concatenate(
        [head_slice(params["fcx_w"], e), head_slice(params["fch_w"], e)], axis=1)
        for e in range(4)]).astype(wdt)                                # (4,Hp,2Hp)
    bhead = jnp.concatenate([jnp.pad(params["fcx_b"], (0, Hp - H)),
                             jnp.pad(params["fch_b"], (0, Hp - H))])[None, :]

    out = pl.pallas_call(
        fused_state_kernel,
        out_shape=jax.ShapeDtypeStruct((Bp, 2 * Hp), jnp.float32),
        grid=(1,),
        in_specs=[
            pl.BlockSpec((4, Bp, 1), lambda i: (0, 0, 0)),             # lengths
            pl.BlockSpec((4, S * Bp, Hp), lambda i: (0, 0, 0)),        # embeddings
            pl.BlockSpec((4, Hp, 3 * Hp), lambda i: (0, 0, 0)),        # W_ih^T
            pl.BlockSpec((4, 1, 3 * Hp), lambda i: (0, 0, 0)),         # b_ih (+b_hr/z)
            pl.BlockSpec((4, Hp, 3 * Hp), lambda i: (0, 0, 0)),        # W_hh^T
            pl.BlockSpec((4, 1, Hp), lambda i: (0, 0, 0)),             # b_hn
            pl.BlockSpec((4, Hp, 2 * Hp), lambda i: (0, 0, 0)),        # [fcx|fch]^T
            pl.BlockSpec((1, 2 * Hp), lambda i: (0, 0)),               # [bx|bh]
        ],
        out_specs=pl.BlockSpec((Bp, 2 * Hp), lambda i: (0, 0)),
        scratch_shapes=[
            # Hoisted input-gate pre-activations.  f32 is fine at test shapes;
            # for production S*B use bf16 + an S-chunk grid axis (VMEM budget).
            pltpu.VMEM((4, S * Bp, 3 * Hp), jnp.float32),
        ],
        compiler_params=pltpu.CompilerParams(
            dimension_semantics=("arbitrary",)),
    )(lengths, emb_all, wih, bih, whh, bhn, whead, bhead)

    x = out[:B, :H]
    h = out[:B, Hp:Hp + H]
    return x, h[None, :, :]          # h matches torch shape (1, B, H)


# ----------------------------------------------------------------------------
# Pure-JAX f32 reference (mirrors the PyTorch forward) for correctness checks.
# ----------------------------------------------------------------------------
def reference_forward(obs, params, hidden_size):
    H = hidden_size
    _, B, S = obs.shape
    nz = (obs != 0)
    last_nz = (S - 1) - jnp.argmax(jnp.flip(nz, axis=-1), axis=-1)
    lengths = last_nz + 1

    def gru_last(e):
        emb = params["emb_w"][e][obs[e]].transpose(1, 0, 2)  # (S, B, H)
        m = (jnp.arange(S)[:, None] < lengths[e][None, :]).astype(jnp.float32)[..., None]
        w_ih, w_hh = params["w_ih"][e], params["w_hh"][e]
        b_ih, b_hh = params["b_ih"][e], params["b_hh"][e]

        def step(h, inp):
            x_t, m_t = inp
            gi = x_t @ w_ih.T + b_ih
            gh = h @ w_hh.T + b_hh
            r = jax.nn.sigmoid(gi[:, :H] + gh[:, :H])
            z = jax.nn.sigmoid(gi[:, H:2 * H] + gh[:, H:2 * H])
            n = jnp.tanh(gi[:, 2 * H:] + r * gh[:, 2 * H:])
            h_new = (1.0 - z) * n + z * h
            return m_t * h_new + (1.0 - m_t) * h, None

        h, _ = lax.scan(step, jnp.zeros((B, H), jnp.float32), (emb, m))
        return h

    hs = [gru_last(e) for e in range(4)]
    cat = jnp.concatenate(hs, axis=1)  # (B, 4H)
    x = jax.nn.relu(cat @ params["fcx_w"].T + params["fcx_b"])
    h = jax.nn.relu(cat @ params["fch_w"].T + params["fch_b"])
    return x, h[None, :, :]


def init_params(key, vocab_size, hidden_size):
    H = hidden_size
    scale = 1.0 / jnp.sqrt(H)
    keys = jax.random.split(key, 32)
    ki = iter(keys)

    def u(k, shape):
        return jax.random.uniform(k, shape, jnp.float32, -scale, scale)

    params = {"emb_w": [], "w_ih": [], "w_hh": [], "b_ih": [], "b_hh": []}
    for _ in range(4):
        params["emb_w"].append(jax.random.normal(next(ki), (vocab_size, H), jnp.float32) * 0.1)
        params["w_ih"].append(u(next(ki), (3 * H, H)))
        params["w_hh"].append(u(next(ki), (3 * H, H)))
        params["b_ih"].append(u(next(ki), (3 * H,)))
        params["b_hh"].append(u(next(ki), (3 * H,)))
    params["fcx_w"] = u(next(ki), (H, 4 * H))
    params["fcx_b"] = u(next(ki), (H,))
    params["fch_w"] = u(next(ki), (H, 4 * H))
    params["fch_b"] = u(next(ki), (H,))
    return params


if __name__ == "__main__":
    VOCAB = 50
    HIDDEN = 32
    BATCH = 2
    SEQ = 8

    key = jax.random.PRNGKey(0)
    k_tok, k_len, k_par = jax.random.split(key, 3)

    # Tokens in [1, VOCAB) with random valid lengths (>=2); zeros are padding.
    tokens = jax.random.randint(k_tok, (4, BATCH, SEQ), 1, VOCAB, dtype=jnp.int32)
    lens = jax.random.randint(k_len, (4, BATCH), 2, SEQ + 1, dtype=jnp.int32)
    pad_mask = jnp.arange(SEQ)[None, None, :] < lens[:, :, None]
    obs = jnp.where(pad_mask, tokens, 0).astype(jnp.int32)   # (4, B, S)

    params = init_params(k_par, VOCAB, HIDDEN)

    x, h = state_network_forward(obs, params, HIDDEN)
    x = jax.block_until_ready(x)
    h = jax.block_until_ready(h)

    x_ref, h_ref = reference_forward(obs, params, HIDDEN)
    assert x.shape == (BATCH, HIDDEN) and h.shape == (1, BATCH, HIDDEN)
    # bf16 matmul operands (f32 accumulation) -> loosened tolerance vs f32 ref.
    err_x = float(jnp.max(jnp.abs(x - x_ref)))
    err_h = float(jnp.max(jnp.abs(h - h_ref)))
    assert jnp.allclose(x, x_ref, atol=2e-2), f"x mismatch vs reference (max abs err {err_x})"
    assert jnp.allclose(h, h_ref, atol=2e-2), f"h mismatch vs reference (max abs err {err_h})"

    print("KERNEL_OK")
</pallas_src>

<mosaic_0001>
module attributes {stable_mosaic.version = 11 : i64} {
  func.func @fused_state_kernel(%arg0: i32, %arg1: memref<4x8x1xi32, #tpu.memory_space<vmem>>, %arg2: memref<4x64x128xbf16, #tpu.memory_space<vmem>>, %arg3: memref<4x128x384xbf16, #tpu.memory_space<vmem>>, %arg4: memref<4x1x384xf32, #tpu.memory_space<vmem>>, %arg5: memref<4x128x384xbf16, #tpu.memory_space<vmem>>, %arg6: memref<4x1x128xf32, #tpu.memory_space<vmem>>, %arg7: memref<4x128x256xbf16, #tpu.memory_space<vmem>>, %arg8: memref<1x256xf32, #tpu.memory_space<vmem>>, %arg9: memref<8x256xf32, #tpu.memory_space<vmem>>, %arg10: memref<4x64x384xf32, #tpu.memory_space<vmem>>) attributes {dimension_semantics = [#tpu.dimension_semantics<arbitrary>], iteration_bounds = array<i64: 1>, scalar_prefetch = 0 : i64, scratch_operands = 1 : i64, tpu.core_type = #tpu.core_type<tc>, window_params = [{pipeline_mode = #tpu.pipeline_mode<synchronous>, transform_indices = @transform_0, window_bounds = array<i64: 4, 8, 1>}, {pipeline_mode = #tpu.pipeline_mode<synchronous>, transform_indices = @transform_1, window_bounds = array<i64: 4, 64, 128>}, {pipeline_mode = #tpu.pipeline_mode<synchronous>, transform_indices = @transform_2, window_bounds = array<i64: 4, 128, 384>}, {pipeline_mode = #tpu.pipeline_mode<synchronous>, transform_indices = @transform_3, window_bounds = array<i64: 4, 1, 384>}, {pipeline_mode = #tpu.pipeline_mode<synchronous>, transform_indices = @transform_4, window_bounds = array<i64: 4, 128, 384>}, {pipeline_mode = #tpu.pipeline_mode<synchronous>, transform_indices = @transform_5, window_bounds = array<i64: 4, 1, 128>}, {pipeline_mode = #tpu.pipeline_mode<synchronous>, transform_indices = @transform_6, window_bounds = array<i64: 4, 128, 256>}, {pipeline_mode = #tpu.pipeline_mode<synchronous>, transform_indices = @transform_7, window_bounds = array<i64: 1, 256>}, {pipeline_mode = #tpu.pipeline_mode<synchronous>, transform_indices = @transform_8, window_bounds = array<i64: 8, 256>}]} {
    %c0 = arith.constant 0 : index
    %c0_0 = arith.constant 0 : index
    %c0_1 = arith.constant 0 : index
    %0 = vector.load %arg2[%c0, %c0_0, %c0_1] : memref<4x64x128xbf16, #tpu.memory_space<vmem>>, vector<1x64x128xbf16>
    %1 = vector.shape_cast %0 : vector<1x64x128xbf16> to vector<64x128xbf16>
    %c0_2 = arith.constant 0 : index
    %c0_3 = arith.constant 0 : index
    %c0_4 = arith.constant 0 : index
    %2 = vector.load %arg3[%c0_2, %c0_3, %c0_4] : memref<4x128x384xbf16, #tpu.memory_space<vmem>>, vector<1x128x384xbf16>
    %3 = vector.shape_cast %2 : vector<1x128x384xbf16> to vector<128x384xbf16>
    %cst = arith.constant dense<0.000000e+00> : vector<64x384xf32>
    %4 = tpu.matmul %1, %3, %cst {dimension_numbers = #tpu.dot_dimension_numbers<[1], [0], [0], [1], [0, 0, 1, 1], [], []>} : vector<64x128xbf16>, vector<128x384xbf16>, vector<64x384xf32> -> vector<64x384xf32>
    %c0_5 = arith.constant 0 : index
    %c0_6 = arith.constant 0 : index
    %c0_7 = arith.constant 0 : index
    %5 = vector.load %arg4[%c0_5, %c0_6, %c0_7] : memref<4x1x384xf32, #tpu.memory_space<vmem>>, vector<1x1x384xf32>
    %6 = vector.shape_cast %5 : vector<1x1x384xf32> to vector<1x384xf32>
    %7 = vector.broadcast %6 : vector<1x384xf32> to vector<64x384xf32>
    %8 = arith.addf %4, %7 : vector<64x384xf32>
    %c0_8 = arith.constant 0 : index
    %c0_9 = arith.constant 0 : index
    %c0_10 = arith.constant 0 : index
    %9 = vector.load %arg10[%c0_8, %c0_9, %c0_10] : memref<4x64x384xf32, #tpu.memory_space<vmem>>, vector<1x64x384xf32>
    %10 = vector.shape_cast %9 : vector<1x64x384xf32> to vector<64x384xf32>
    %11 = vector.shape_cast %8 : vector<64x384xf32> to vector<1x64x384xf32>
    tpu.vector_store %arg10[%c0_8, %c0_9, %c0_10], %11 {strides = array<i32>} : memref<4x64x384xf32, #tpu.memory_space<vmem>>, vector<1x64x384xf32>,
    %c1 = arith.constant 1 : index
    %c0_11 = arith.constant 0 : index
    %c0_12 = arith.constant 0 : index
    %12 = vector.load %arg2[%c1, %c0_11, %c0_12] : memref<4x64x128xbf16, #tpu.memory_space<vmem>>, vector<1x64x128xbf16>
    %13 = vector.shape_cast %12 : vector<1x64x128xbf16> to vector<64x128xbf16>
    %c1_13 = arith.constant 1 : index
    %c0_14 = arith.constant 0 : index
    %c0_15 = arith.constant 0 : index
    %14 = vector.load %arg3[%c1_13, %c0_14, %c0_15] : memref<4x128x384xbf16, #tpu.memory_space<vmem>>, vector<1x128x384xbf16>
    %15 = vector.shape_cast %14 : vector<1x128x384xbf16> to vector<128x384xbf16>
    %cst_16 = arith.constant dense<0.000000e+00> : vector<64x384xf32>
    %16 = tpu.matmul %13, %15, %cst_16 {dimension_numbers = #tpu.dot_dimension_numbers<[1], [0], [0], [1], [0, 0, 1, 1], [], []>} : vector<64x128xbf16>, vector<128x384xbf16>, vector<64x384xf32> -> vector<64x384xf32>
    %c1_17 = arith.constant 1 : index
    %c0_18 = arith.constant 0 : index
    %c0_19 = arith.constant 0 : index
    %17 = vector.load %arg4[%c1_17, %c0_18, %c0_19] : memref<4x1x384xf32, #tpu.memory_space<vmem>>, vector<1x1x384xf32>
    %18 = vector.shape_cast %17 : vector<1x1x384xf32> to vector<1x384xf32>
    %19 = vector.broadcast %18 : vector<1x384xf32> to vector<64x384xf32>
    %20 = arith.addf %16, %19 : vector<64x384xf32>
    %c1_20 = arith.constant 1 : index
    %c0_21 = arith.constant 0 : index
    %c0_22 = arith.constant 0 : index
    %21 = vector.load %arg10[%c1_20, %c0_21, %c0_22] : memref<4x64x384xf32, #tpu.memory_space<vmem>>, vector<1x64x384xf32>
    %22 = vector.shape_cast %21 : vector<1x64x384xf32> to vector<64x384xf32>
    %23 = vector.shape_cast %20 : vector<64x384xf32> to vector<1x64x384xf32>
    tpu.vector_store %arg10[%c1_20, %c0_21, %c0_22], %23 {strides = array<i32>} : memref<4x64x384xf32, #tpu.memory_space<vmem>>, vector<1x64x384xf32>,
    %c2 = arith.constant 2 : index
    %c0_23 = arith.constant 0 : index
    %c0_24 = arith.constant 0 : index
    %24 = vector.load %arg2[%c2, %c0_23, %c0_24] : memref<4x64x128xbf16, #tpu.memory_space<vmem>>, vector<1x64x128xbf16>
    %25 = vector.shape_cast %24 : vector<1x64x128xbf16> to vector<64x128xbf16>
    %c2_25 = arith.constant 2 : index
    %c0_26 = arith.constant 0 : index
    %c0_27 = arith.constant 0 : index
    %26 = vector.load %arg3[%c2_25, %c0_26, %c0_27] : memref<4x128x384xbf16, #tpu.memory_space<vmem>>, vector<1x128x384xbf16>
    %27 = vector.shape_cast %26 : vector<1x128x384xbf16> to vector<128x384xbf16>
    %cst_28 = arith.constant dense<0.000000e+00> : vector<64x384xf32>
    %28 = tpu.matmul %25, %27, %cst_28 {dimension_numbers = #tpu.dot_dimension_numbers<[1], [0], [0], [1], [0, 0, 1, 1], [], []>} : vector<64x128xbf16>, vector<128x384xbf16>, vector<64x384xf32> -> vector<64x384xf32>
    %c2_29 = arith.constant 2 : index
    %c0_30 = arith.constant 0 : index
    %c0_31 = arith.constant 0 : index
    %29 = vector.load %arg4[%c2_29, %c0_30, %c0_31] : memref<4x1x384xf32, #tpu.memory_space<vmem>>, vector<1x1x384xf32>
    %30 = vector.shape_cast %29 : vector<1x1x384xf32> to vector<1x384xf32>
    %31 = vector.broadcast %30 : vector<1x384xf32> to vector<64x384xf32>
    %32 = arith.addf %28, %31 : vector<64x384xf32>
    %c2_32 = arith.constant 2 : index
    %c0_33 = arith.constant 0 : index
    %c0_34 = arith.constant 0 : index
    %33 = vector.load %arg10[%c2_32, %c0_33, %c0_34] : memref<4x64x384xf32, #tpu.memory_space<vmem>>, vector<1x64x384xf32>
    %34 = vector.shape_cast %33 : vector<1x64x384xf32> to vector<64x384xf32>
    %35 = vector.shape_cast %32 : vector<64x384xf32> to vector<1x64x384xf32>
    tpu.vector_store %arg10[%c2_32, %c0_33, %c0_34], %35 {strides = array<i32>} : memref<4x64x384xf32, #tpu.memory_space<vmem>>, vector<1x64x384xf32>,
    %c3 = arith.constant 3 : index
    %c0_35 = arith.constant 0 : index
    %c0_36 = arith.constant 0 : index
    %36 = vector.load %arg2[%c3, %c0_35, %c0_36] : memref<4x64x128xbf16, #tpu.memory_space<vmem>>, vector<1x64x128xbf16>
    %37 = vector.shape_cast %36 : vector<1x64x128xbf16> to vector<64x128xbf16>
    %c3_37 = arith.constant 3 : index
    %c0_38 = arith.constant 0 : index
    %c0_39 = arith.constant 0 : index
    %38 = vector.load %arg3[%c3_37, %c0_38, %c0_39] : memref<4x128x384xbf16, #tpu.memory_space<vmem>>, vector<1x128x384xbf16>
    %39 = vector.shape_cast %38 : vector<1x128x384xbf16> to vector<128x384xbf16>
    %cst_40 = arith.constant dense<0.000000e+00> : vector<64x384xf32>
    %40 = tpu.matmul %37, %39, %cst_40 {dimension_numbers = #tpu.dot_dimension_numbers<[1], [0], [0], [1], [0, 0, 1, 1], [], []>} : vector<64x128xbf16>, vector<128x384xbf16>, vector<64x384xf32> -> vector<64x384xf32>
    %c3_41 = arith.constant 3 : index
    %c0_42 = arith.constant 0 : index
    %c0_43 = arith.constant 0 : index
    %41 = vector.load %arg4[%c3_41, %c0_42, %c0_43] : memref<4x1x384xf32, #tpu.memory_space<vmem>>, vector<1x1x384xf32>
    %42 = vector.shape_cast %41 : vector<1x1x384xf32> to vector<1x384xf32>
    %43 = vector.broadcast %42 : vector<1x384xf32> to vector<64x384xf32>
    %44 = arith.addf %40, %43 : vector<64x384xf32>
    %c3_44 = arith.constant 3 : index
    %c0_45 = arith.constant 0 : index
    %c0_46 = arith.constant 0 : index
    %45 = vector.load %arg10[%c3_44, %c0_45, %c0_46] : memref<4x64x384xf32, #tpu.memory_space<vmem>>, vector<1x64x384xf32>
    %46 = vector.shape_cast %45 : vector<1x64x384xf32> to vector<64x384xf32>
    %47 = vector.shape_cast %44 : vector<64x384xf32> to vector<1x64x384xf32>
    tpu.vector_store %arg10[%c3_44, %c0_45, %c0_46], %47 {strides = array<i32>} : memref<4x64x384xf32, #tpu.memory_space<vmem>>, vector<1x64x384xf32>,
    %c0_47 = arith.constant 0 : index
    %c0_48 = arith.constant 0 : index
    %c0_49 = arith.constant 0 : index
    %48 = vector.load %arg5[%c0_47, %c0_48, %c0_49] : memref<4x128x384xbf16, #tpu.memory_space<vmem>>, vector<4x128x384xbf16>
    %c0_50 = arith.constant 0 : index
    %c0_51 = arith.constant 0 : index
    %c0_52 = arith.constant 0 : index
    %49 = vector.load %arg1[%c0_50, %c0_51, %c0_52] : memref<4x8x1xi32, #tpu.memory_space<vmem>>, vector<4x8x1xi32>
    %c0_53 = arith.constant 0 : index
    %c0_54 = arith.constant 0 : index
    %c0_55 = arith.constant 0 : index
    %50 = vector.load %arg6[%c0_53, %c0_54, %c0_55] : memref<4x1x128xf32, #tpu.memory_space<vmem>>, vector<4x1x128xf32>
    %51 = vector.shape_cast %50 : vector<4x1x128xf32> to vector<4x1x128xf32>
    %52 = vector.broadcast %51 : vector<4x1x128xf32> to vector<4x8x128xf32>
    %cst_56 = arith.constant 0.000000e+00 : f32
    %53 = vector.broadcast %cst_56 : f32 to vector<4x8x128xf32>
    %c0_i32 = arith.constant 0 : i32
    %c8_i32 = arith.constant 8 : i32
    %54 = arith.muli %c0_i32, %c8_i32 : i32
    %55 = tpu.assume_multiple %54, 8 : i32
    %c0_57 = arith.constant 0 : index
    %56 = arith.index_cast %55 : i32 to index
    %c0_58 = arith.constant 0 : index
    %57 = vector.load %arg10[%c0_57, %56, %c0_58] : memref<4x64x384xf32, #tpu.memory_space<vmem>>, vector<4x8x384xf32>
    %58 = arith.truncf %53 : vector<4x8x128xf32> to vector<4x8x128xbf16>
    "tpu.trace_start"() <{level = 10 : i32, message = "ebh,ehg->ebg"}> : () -> ()
    %cst_59 = arith.constant dense<0.000000e+00> : vector<4x8x384xf32>
    %59 = tpu.matmul %58, %48, %cst_59 {dimension_numbers = #tpu.dot_dimension_numbers<[2], [1], [1], [2], [0, 0, 0, 1, 1, 2], [0], [0]>} : vector<4x8x128xbf16>, vector<4x128x384xbf16>, vector<4x8x384xf32> -> vector<4x8x384xf32>
    "tpu.trace_stop"() : () -> ()
    %60 = vector.extract_strided_slice %57 {offsets = [0, 0, 0], sizes = [4, 8, 128], strides = [1, 1, 1]} : vector<4x8x384xf32> to vector<4x8x128xf32>
    %61 = vector.extract_strided_slice %59 {offsets = [0, 0, 0], sizes = [4, 8, 128], strides = [1, 1, 1]} : vector<4x8x384xf32> to vector<4x8x128xf32>
    %62 = arith.addf %60, %61 : vector<4x8x128xf32>
    %63 = arith.negf %62 : vector<4x8x128xf32>
    %64 = math.exp %63 : vector<4x8x128xf32>
    %cst_60 = arith.constant 1.000000e+00 : f32
    %65 = vector.broadcast %cst_60 : f32 to vector<4x8x128xf32>
    %66 = arith.addf %65, %64 : vector<4x8x128xf32>
    %67 = arith.divf %65, %66 : vector<4x8x128xf32>
    %68 = vector.extract_strided_slice %57 {offsets = [0, 0, 128], sizes = [4, 8, 128], strides = [1, 1, 1]} : vector<4x8x384xf32> to vector<4x8x128xf32>
    %69 = vector.extract_strided_slice %59 {offsets = [0, 0, 128], sizes = [4, 8, 128], strides = [1, 1, 1]} : vector<4x8x384xf32> to vector<4x8x128xf32>
    %70 = arith.addf %68, %69 : vector<4x8x128xf32>
    %71 = arith.negf %70 : vector<4x8x128xf32>
    %72 = math.exp %71 : vector<4x8x128xf32>
    %cst_61 = arith.constant 1.000000e+00 : f32
    %73 = vector.broadcast %cst_61 : f32 to vector<4x8x128xf32>
    %74 = arith.addf %73, %72 : vector<4x8x128xf32>
    %75 = arith.divf %73, %74 : vector<4x8x128xf32>
    %76 = vector.extract_strided_slice %57 {offsets = [0, 0, 256], sizes = [4, 8, 128], strides = [1, 1, 1]} : vector<4x8x384xf32> to vector<4x8x128xf32>
    %77 = vector.extract_strided_slice %59 {offsets = [0, 0, 256], sizes = [4, 8, 128], strides = [1, 1, 1]} : vector<4x8x384xf32> to vector<4x8x128xf32>
    %78 = arith.addf %77, %52 : vector<4x8x128xf32>
    %79 = arith.mulf %67, %78 : vector<4x8x128xf32>
    %80 = arith.addf %76, %79 : vector<4x8x128xf32>
    %81 = math.tanh %80 : vector<4x8x128xf32>
    %cst_62 = arith.constant 1.000000e+00 : f32
    %82 = vector.broadcast %cst_62 : f32 to vector<4x8x128xf32>
    %83 = arith.subf %82, %75 : vector<4x8x128xf32>
    %84 = arith.mulf %83, %81 : vector<4x8x128xf32>
    %85 = arith.mulf %75, %53 : vector<4x8x128xf32>
    %86 = arith.addf %84, %85 : vector<4x8x128xf32>
    %87 = vector.broadcast %c0_i32 : i32 to vector<4x8x1xi32>
    %88 = arith.cmpi slt, %87, %49 : vector<4x8x1xi32>
    %89 = vector.shape_cast %88 : vector<4x8x1xi1> to vector<4x8x1xi1>
    %90 = vector.broadcast %89 : vector<4x8x1xi1> to vector<4x8x128xi1>
    %91 = arith.select %90, %86, %53 : vector<4x8x128xi1>, vector<4x8x128xf32>
    %c1_i32 = arith.constant 1 : i32
    %c8_i32_63 = arith.constant 8 : i32
    %92 = arith.muli %c1_i32, %c8_i32_63 : i32
    %93 = tpu.assume_multiple %92, 8 : i32
    %c0_64 = arith.constant 0 : index
    %94 = arith.index_cast %93 : i32 to index
    %c0_65 = arith.constant 0 : index
    %95 = vector.load %arg10[%c0_64, %94, %c0_65] : memref<4x64x384xf32, #tpu.memory_space<vmem>>, vector<4x8x384xf32>
    %96 = arith.truncf %91 : vector<4x8x128xf32> to vector<4x8x128xbf16>
    "tpu.trace_start"() <{level = 10 : i32, message = "ebh,ehg->ebg"}> : () -> ()
    %cst_66 = arith.constant dense<0.000000e+00> : vector<4x8x384xf32>
    %97 = tpu.matmul %96, %48, %cst_66 {dimension_numbers = #tpu.dot_dimension_numbers<[2], [1], [1], [2], [0, 0, 0, 1, 1, 2], [0], [0]>} : vector<4x8x128xbf16>, vector<4x128x384xbf16>, vector<4x8x384xf32> -> vector<4x8x384xf32>
    "tpu.trace_stop"() : () -> ()
    %98 = vector.extract_strided_slice %95 {offsets = [0, 0, 0], sizes = [4, 8, 128], strides = [1, 1, 1]} : vector<4x8x384xf32> to vector<4x8x128xf32>
    %99 = vector.extract_strided_slice %97 {offsets = [0, 0, 0], sizes = [4, 8, 128], strides = [1, 1, 1]} : vector<4x8x384xf32> to vector<4x8x128xf32>
    %100 = arith.addf %98, %99 : vector<4x8x128xf32>
    %101 = arith.negf %100 : vector<4x8x128xf32>
    %102 = math.exp %101 : vector<4x8x128xf32>
    %cst_67 = arith.constant 1.000000e+00 : f32
    %103 = vector.broadcast %cst_67 : f32 to vector<4x8x128xf32>
    %104 = arith.addf %103, %102 : vector<4x8x128xf32>
    %105 = arith.divf %103, %104 : vector<4x8x128xf32>
    %106 = vector.extract_strided_slice %95 {offsets = [0, 0, 128], sizes = [4, 8, 128], strides = [1, 1, 1]} : vector<4x8x384xf32> to vector<4x8x128xf32>
    %107 = vector.extract_strided_slice %97 {offsets = [0, 0, 128], sizes = [4, 8, 128], strides = [1, 1, 1]} : vector<4x8x384xf32> to vector<4x8x128xf32>
    %108 = arith.addf %106, %107 : vector<4x8x128xf32>
    %109 = arith.negf %108 : vector<4x8x128xf32>
    %110 = math.exp %109 : vector<4x8x128xf32>
    %cst_68 = arith.constant 1.000000e+00 : f32
    %111 = vector.broadcast %cst_68 : f32 to vector<4x8x128xf32>
    %112 = arith.addf %111, %110 : vector<4x8x128xf32>
    %113 = arith.divf %111, %112 : vector<4x8x128xf32>
    %114 = vector.extract_strided_slice %95 {offsets = [0, 0, 256], sizes = [4, 8, 128], strides = [1, 1, 1]} : vector<4x8x384xf32> to vector<4x8x128xf32>
    %115 = vector.extract_strided_slice %97 {offsets = [0, 0, 256], sizes = [4, 8, 128], strides = [1, 1, 1]} : vector<4x8x384xf32> to vector<4x8x128xf32>
    %116 = arith.addf %115, %52 : vector<4x8x128xf32>
    %117 = arith.mulf %105, %116 : vector<4x8x128xf32>
    %118 = arith.addf %114, %117 : vector<4x8x128xf32>
    %119 = math.tanh %118 : vector<4x8x128xf32>
    %cst_69 = arith.constant 1.000000e+00 : f32
    %120 = vector.broadcast %cst_69 : f32 to vector<4x8x128xf32>
    %121 = arith.subf %120, %113 : vector<4x8x128xf32>
    %122 = arith.mulf %121, %119 : vector<4x8x128xf32>
    %123 = arith.mulf %113, %91 : vector<4x8x128xf32>
    %124 = arith.addf %122, %123 : vector<4x8x128xf32>
    %125 = vector.broadcast %c1_i32 : i32 to vector<4x8x1xi32>
    %126 = arith.cmpi slt, %125, %49 : vector<4x8x1xi32>
    %127 = vector.shape_cast %126 : vector<4x8x1xi1> to vector<4x8x1xi1>
    %128 = vector.broadcast %127 : vector<4x8x1xi1> to vector<4x8x128xi1>
    %129 = arith.select %128, %124, %91 : vector<4x8x128xi1>, vector<4x8x128xf32>
    %c2_i32 = arith.constant 2 : i32
    %c8_i32_70 = arith.constant 8 : i32
    %130 = arith.muli %c2_i32, %c8_i32_70 : i32
    %131 = tpu.assume_multiple %130, 8 : i32
    %c0_71 = arith.constant 0 : index
    %132 = arith.index_cast %131 : i32 to index
    %c0_72 = arith.constant 0 : index
    %133 = vector.load %arg10[%c0_71, %132, %c0_72] : memref<4x64x384xf32, #tpu.memory_space<vmem>>, vector<4x8x384xf32>
    %134 = arith.truncf %129 : vector<4x8x128xf32> to vector<4x8x128xbf16>
    "tpu.trace_start"() <{level = 10 : i32, message = "ebh,ehg->ebg"}> : () -> ()
    %cst_73 = arith.constant dense<0.000000e+00> : vector<4x8x384xf32>
    %135 = tpu.matmul %134, %48, %cst_73 {dimension_numbers = #tpu.dot_dimension_numbers<[2], [1], [1], [2], [0, 0, 0, 1, 1, 2], [0], [0]>} : vector<4x8x128xbf16>, vector<4x128x384xbf16>, vector<4x8x384xf32> -> vector<4x8x384xf32>
    "tpu.trace_stop"() : () -> ()
    %136 = vector.extract_strided_slice %133 {offsets = [0, 0, 0], sizes = [4, 8, 128], strides = [1, 1, 1]} : vector<4x8x384xf32> to vector<4x8x128xf32>
    %137 = vector.extract_strided_slice %135 {offsets = [0, 0, 0], sizes = [4, 8, 128], strides = [1, 1, 1]} : vector<4x8x384xf32> to vector<4x8x128xf32>
    %138 = arith.addf %136, %137 : vector<4x8x128xf32>
    %139 = arith.negf %138 : vector<4x8x128xf32>
    %140 = math.exp %139 : vector<4x8x128xf32>
    %cst_74 = arith.constant 1.000000e+00 : f32
    %141 = vector.broadcast %cst_74 : f32 to vector<4x8x128xf32>
    %142 = arith.addf %141, %140 : vector<4x8x128xf32>
    %143 = arith.divf %141, %142 : vector<4x8x128xf32>
    %144 = vector.extract_strided_slice %133 {offsets = [0, 0, 128], sizes = [4, 8, 128], strides = [1, 1, 1]} : vector<4x8x384xf32> to vector<4x8x128xf32>
    %145 = vector.extract_strided_slice %135 {offsets = [0, 0, 128], sizes = [4, 8, 128], strides = [1, 1, 1]} : vector<4x8x384xf32> to vector<4x8x128xf32>
    %146 = arith.addf %144, %145 : vector<4x8x128xf32>
    %147 = arith.negf %146 : vector<4x8x128xf32>
    %148 = math.exp %147 : vector<4x8x128xf32>
    %cst_75 = arith.constant 1.000000e+00 : f32
    %149 = vector.broadcast %cst_75 : f32 to vector<4x8x128xf32>
    %150 = arith.addf %149, %148 : vector<4x8x128xf32>
    %151 = arith.divf %149, %150 : vector<4x8x128xf32>
    %152 = vector.extract_strided_slice %133 {offsets = [0, 0, 256], sizes = [4, 8, 128], strides = [1, 1, 1]} : vector<4x8x384xf32> to vector<4x8x128xf32>
    %153 = vector.extract_strided_slice %135 {offsets = [0, 0, 256], sizes = [4, 8, 128], strides = [1, 1, 1]} : vector<4x8x384xf32> to vector<4x8x128xf32>
    %154 = arith.addf %153, %52 : vector<4x8x128xf32>
    %155 = arith.mulf %143, %154 : vector<4x8x128xf32>
    %156 = arith.addf %152, %155 : vector<4x8x128xf32>
    %157 = math.tanh %156 : vector<4x8x128xf32>
    %cst_76 = arith.constant 1.000000e+00 : f32
    %158 = vector.broadcast %cst_76 : f32 to vector<4x8x128xf32>
    %159 = arith.subf %158, %151 : vector<4x8x128xf32>
    %160 = arith.mulf %159, %157 : vector<4x8x128xf32>
    %161 = arith.mulf %151, %129 : vector<4x8x128xf32>
    %162 = arith.addf %160, %161 : vector<4x8x128xf32>
    %163 = vector.broadcast %c2_i32 : i32 to vector<4x8x1xi32>
    %164 = arith.cmpi slt, %163, %49 : vector<4x8x1xi32>
    %165 = vector.shape_cast %164 : vector<4x8x1xi1> to vector<4x8x1xi1>
    %166 = vector.broadcast %165 : vector<4x8x1xi1> to vector<4x8x128xi1>
    %167 = arith.select %166, %162, %129 : vector<4x8x128xi1>, vector<4x8x128xf32>
    %c3_i32 = arith.constant 3 : i32
    %c8_i32_77 = arith.constant 8 : i32
    %168 = arith.muli %c3_i32, %c8_i32_77 : i32
    %169 = tpu.assume_multiple %168, 8 : i32
    %c0_78 = arith.constant 0 : index
    %170 = arith.index_cast %169 : i32 to index
    %c0_79 = arith.constant 0 : index
    %171 = vector.load %arg10[%c0_78, %170, %c0_79] : memref<4x64x384xf32, #tpu.memory_space<vmem>>, vector<4x8x384xf32>
    %172 = arith.truncf %167 : vector<4x8x128xf32> to vector<4x8x128xbf16>
    "tpu.trace_start"() <{level = 10 : i32, message = "ebh,ehg->ebg"}> : () -> ()
    %cst_80 = arith.constant dense<0.000000e+00> : vector<4x8x384xf32>
    %173 = tpu.matmul %172, %48, %cst_80 {dimension_numbers = #tpu.dot_dimension_numbers<[2], [1], [1], [2], [0, 0, 0, 1, 1, 2], [0], [0]>} : vector<4x8x128xbf16>, vector<4x128x384xbf16>, vector<4x8x384xf32> -> vector<4x8x384xf32>
    "tpu.trace_stop"() : () -> ()
    %174 = vector.extract_strided_slice %171 {offsets = [0, 0, 0], sizes = [4, 8, 128], strides = [1, 1, 1]} : vector<4x8x384xf32> to vector<4x8x128xf32>
    %175 = vector.extract_strided_slice %173 {offsets = [0, 0, 0], sizes = [4, 8, 128], strides = [1, 1, 1]} : vector<4x8x384xf32> to vector<4x8x128xf32>
    %176 = arith.addf %174, %175 : vector<4x8x128xf32>
    %177 = arith.negf %176 : vector<4x8x128xf32>
    %178 = math.exp %177 : vector<4x8x128xf32>
    %cst_81 = arith.constant 1.000000e+00 : f32
    %179 = vector.broadcast %cst_81 : f32 to vector<4x8x128xf32>
    %180 = arith.addf %179, %178 : vector<4x8x128xf32>
    %181 = arith.divf %179, %180 : vector<4x8x128xf32>
    %182 = vector.extract_strided_slice %171 {offsets = [0, 0, 128], sizes = [4, 8, 128], strides = [1, 1, 1]} : vector<4x8x384xf32> to vector<4x8x128xf32>
    %183 = vector.extract_strided_slice %173 {offsets = [0, 0, 128], sizes = [4, 8, 128], strides = [1, 1, 1]} : vector<4x8x384xf32> to vector<4x8x128xf32>
    %184 = arith.addf %182, %183 : vector<4x8x128xf32>
    %185 = arith.negf %184 : vector<4x8x128xf32>
    %186 = math.exp %185 : vector<4x8x128xf32>
    %cst_82 = arith.constant 1.000000e+00 : f32
    %187 = vector.broadcast %cst_82 : f32 to vector<4x8x128xf32>
    %188 = arith.addf %187, %186 : vector<4x8x128xf32>
    %189 = arith.divf %187, %188 : vector<4x8x128xf32>
    %190 = vector.extract_strided_slice %171 {offsets = [0, 0, 256], sizes = [4, 8, 128], strides = [1, 1, 1]} : vector<4x8x384xf32> to vector<4x8x128xf32>
    %191 = vector.extract_strided_slice %173 {offsets = [0, 0, 256], sizes = [4, 8, 128], strides = [1, 1, 1]} : vector<4x8x384xf32> to vector<4x8x128xf32>
    %192 = arith.addf %191, %52 : vector<4x8x128xf32>
    %193 = arith.mulf %181, %192 : vector<4x8x128xf32>
    %194 = arith.addf %190, %193 : vector<4x8x128xf32>
    %195 = math.tanh %194 : vector<4x8x128xf32>
    %cst_83 = arith.constant 1.000000e+00 : f32
    %196 = vector.broadcast %cst_83 : f32 to vector<4x8x128xf32>
    %197 = arith.subf %196, %189 : vector<4x8x128xf32>
    %198 = arith.mulf %197, %195 : vector<4x8x128xf32>
    %199 = arith.mulf %189, %167 : vector<4x8x128xf32>
    %200 = arith.addf %198, %199 : vector<4x8x128xf32>
    %201 = vector.broadcast %c3_i32 : i32 to vector<4x8x1xi32>
    %202 = arith.cmpi slt, %201, %49 : vector<4x8x1xi32>
    %203 = vector.shape_cast %202 : vector<4x8x1xi1> to vector<4x8x1xi1>
    %204 = vector.broadcast %203 : vector<4x8x1xi1> to vector<4x8x128xi1>
    %205 = arith.select %204, %200, %167 : vector<4x8x128xi1>, vector<4x8x128xf32>
    %c4_i32 = arith.constant 4 : i32
    %c8_i32_84 = arith.constant 8 : i32
    %206 = arith.muli %c4_i32, %c8_i32_84 : i32
    %207 = tpu.assume_multiple %206, 8 : i32
    %c0_85 = arith.constant 0 : index
    %208 = arith.index_cast %207 : i32 to index
    %c0_86 = arith.constant 0 : index
    %209 = vector.load %arg10[%c0_85, %208, %c0_86] : memref<4x64x384xf32, #tpu.memory_space<vmem>>, vector<4x8x384xf32>
    %210 = arith.truncf %205 : vector<4x8x128xf32> to vector<4x8x128xbf16>
    "tpu.trace_start"() <{level = 10 : i32, message = "ebh,ehg->ebg"}> : () -> ()
    %cst_87 = arith.constant dense<0.000000e+00> : vector<4x8x384xf32>
    %211 = tpu.matmul %210, %48, %cst_87 {dimension_numbers = #tpu.dot_dimension_numbers<[2], [1], [1], [2], [0, 0, 0, 1, 1, 2], [0], [0]>} : vector<4x8x128xbf16>, vector<4x128x384xbf16>, vector<4x8x384xf32> -> vector<4x8x384xf32>
    "tpu.trace_stop"() : () -> ()
    %212 = vector.extract_strided_slice %209 {offsets = [0, 0, 0], sizes = [4, 8, 128], strides = [1, 1, 1]} : vector<4x8x384xf32> to vector<4x8x128xf32>
    %213 = vector.extract_strided_slice %211 {offsets = [0, 0, 0], sizes = [4, 8, 128], strides = [1, 1, 1]} : vector<4x8x384xf32> to vector<4x8x128xf32>
    %214 = arith.addf %212, %213 : vector<4x8x128xf32>
    %215 = arith.negf %214 : vector<4x8x128xf32>
    %216 = math.exp %215 : vector<4x8x128xf32>
    %cst_88 = arith.constant 1.000000e+00 : f32
    %217 = vector.broadcast %cst_88 : f32 to vector<4x8x128xf32>
    %218 = arith.addf %217, %216 : vector<4x8x128xf32>
    %219 = arith.divf %217, %218 : vector<4x8x128xf32>
    %220 = vector.extract_strided_slice %209 {offsets = [0, 0, 128], sizes = [4, 8, 128], strides = [1, 1, 1]} : vector<4x8x384xf32> to vector<4x8x128xf32>
    %221 = vector.extract_strided_slice %211 {offsets = [0, 0, 128], sizes = [4, 8, 128], strides = [1, 1, 1]} : vector<4x8x384xf32> to vector<4x8x128xf32>
    %222 = arith.addf %220, %221 : vector<4x8x128xf32>
    %223 = arith.negf %222 : vector<4x8x128xf32>
    %224 = math.exp %223 : vector<4x8x128xf32>
    %cst_89 = arith.constant 1.000000e+00 : f32
    %225 = vector.broadcast %cst_89 : f32 to vector<4x8x128xf32>
    %226 = arith.addf %225, %224 : vector<4x8x128xf32>
    %227 = arith.divf %225, %226 : vector<4x8x128xf32>
    %228 = vector.extract_strided_slice %209 {offsets = [0, 0, 256], sizes = [4, 8, 128], strides = [1, 1, 1]} : vector<4x8x384xf32> to vector<4x8x128xf32>
    %229 = vector.extract_strided_slice %211 {offsets = [0, 0, 256], sizes = [4, 8, 128], strides = [1, 1, 1]} : vector<4x8x384xf32> to vector<4x8x128xf32>
    %230 = arith.addf %229, %52 : vector<4x8x128xf32>
    %231 = arith.mulf %219, %230 : vector<4x8x128xf32>
    %232 = arith.addf %228, %231 : vector<4x8x128xf32>
    %233 = math.tanh %232 : vector<4x8x128xf32>
    %cst_90 = arith.constant 1.000000e+00 : f32
    %234 = vector.broadcast %cst_90 : f32 to vector<4x8x128xf32>
    %235 = arith.subf %234, %227 : vector<4x8x128xf32>
    %236 = arith.mulf %235, %233 : vector<4x8x128xf32>
    %237 = arith.mulf %227, %205 : vector<4x8x128xf32>
    %238 = arith.addf %236, %237 : vector<4x8x128xf32>
    %239 = vector.broadcast %c4_i32 : i32 to vector<4x8x1xi32>
    %240 = arith.cmpi slt, %239, %49 : vector<4x8x1xi32>
    %241 = vector.shape_cast %240 : vector<4x8x1xi1> to vector<4x8x1xi1>
    %242 = vector.broadcast %241 : vector<4x8x1xi1> to vector<4x8x128xi1>
    %243 = arith.select %242, %238, %205 : vector<4x8x128xi1>, vector<4x8x128xf32>
    %c5_i32 = arith.constant 5 : i32
    %c8_i32_91 = arith.constant 8 : i32
    %244 = arith.muli %c5_i32, %c8_i32_91 : i32
    %245 = tpu.assume_multiple %244, 8 : i32
    %c0_92 = arith.constant 0 : index
    %246 = arith.index_cast %245 : i32 to index
    %c0_93 = arith.constant 0 : index
    %247 = vector.load %arg10[%c0_92, %246, %c0_93] : memref<4x64x384xf32, #tpu.memory_space<vmem>>, vector<4x8x384xf32>
    %248 = arith.truncf %243 : vector<4x8x128xf32> to vector<4x8x128xbf16>
    "tpu.trace_start"() <{level = 10 : i32, message = "ebh,ehg->ebg"}> : () -> ()
    %cst_94 = arith.constant dense<0.000000e+00> : vector<4x8x384xf32>
    %249 = tpu.matmul %248, %48, %cst_94 {dimension_numbers = #tpu.dot_dimension_numbers<[2], [1], [1], [2], [0, 0, 0, 1, 1, 2], [0], [0]>} : vector<4x8x128xbf16>, vector<4x128x384xbf16>, vector<4x8x384xf32> -> vector<4x8x384xf32>
    "tpu.trace_stop"() : () -> ()
    %250 = vector.extract_strided_slice %247 {offsets = [0, 0, 0], sizes = [4, 8, 128], strides = [1, 1, 1]} : vector<4x8x384xf32> to vector<4x8x128xf32>
    %251 = vector.extract_strided_slice %249 {offsets = [0, 0, 0], sizes = [4, 8, 128], strides = [1, 1, 1]} : vector<4x8x384xf32> to vector<4x8x128xf32>
    %252 = arith.addf %250, %251 : vector<4x8x128xf32>
    %253 = arith.negf %252 : vector<4x8x128xf32>
    %254 = math.exp %253 : vector<4x8x128xf32>
    %cst_95 = arith.constant 1.000000e+00 : f32
    %255 = vector.broadcast %cst_95 : f32 to vector<4x8x128xf32>
    %256 = arith.addf %255, %254 : vector<4x8x128xf32>
    %257 = arith.divf %255, %256 : vector<4x8x128xf32>
    %258 = vector.extract_strided_slice %247 {offsets = [0, 0, 128], sizes = [4, 8, 128], strides = [1, 1, 1]} : vector<4x8x384xf32> to vector<4x8x128xf32>
    %259 = vector.extract_strided_slice %249 {offsets = [0, 0, 128], sizes = [4, 8, 128], strides = [1, 1, 1]} : vector<4x8x384xf32> to vector<4x8x128xf32>
    %260 = arith.addf %258, %259 : vector<4x8x128xf32>
    %261 = arith.negf %260 : vector<4x8x128xf32>
    %262 = math.exp %261 : vector<4x8x128xf32>
    %cst_96 = arith.constant 1.000000e+00 : f32
    %263 = vector.broadcast %cst_96 : f32 to vector<4x8x128xf32>
    %264 = arith.addf %263, %262 : vector<4x8x128xf32>
    %265 = arith.divf %263, %264 : vector<4x8x128xf32>
    %266 = vector.extract_strided_slice %247 {offsets = [0, 0, 256], sizes = [4, 8, 128], strides = [1, 1, 1]} : vector<4x8x384xf32> to vector<4x8x128xf32>
    %267 = vector.extract_strided_slice %249 {offsets = [0, 0, 256], sizes = [4, 8, 128], strides = [1, 1, 1]} : vector<4x8x384xf32> to vector<4x8x128xf32>
    %268 = arith.addf %267, %52 : vector<4x8x128xf32>
    %269 = arith.mulf %257, %268 : vector<4x8x128xf32>
    %270 = arith.addf %266, %269 : vector<4x8x128xf32>
    %271 = math.tanh %270 : vector<4x8x128xf32>
    %cst_97 = arith.constant 1.000000e+00 : f32
    %272 = vector.broadcast %cst_97 : f32 to vector<4x8x128xf32>
    %273 = arith.subf %272, %265 : vector<4x8x128xf32>
    %274 = arith.mulf %273, %271 : vector<4x8x128xf32>
    %275 = arith.mulf %265, %243 : vector<4x8x128xf32>
    %276 = arith.addf %274, %275 : vector<4x8x128xf32>
    %277 = vector.broadcast %c5_i32 : i32 to vector<4x8x1xi32>
    %278 = arith.cmpi slt, %277, %49 : vector<4x8x1xi32>
    %279 = vector.shape_cast %278 : vector<4x8x1xi1> to vector<4x8x1xi1>
    %280 = vector.broadcast %279 : vector<4x8x1xi1> to vector<4x8x128xi1>
    %281 = arith.select %280, %276, %243 : vector<4x8x128xi1>, vector<4x8x128xf32>
    %c6_i32 = arith.constant 6 : i32
    %c8_i32_98 = arith.constant 8 : i32
    %282 = arith.muli %c6_i32, %c8_i32_98 : i32
    %283 = tpu.assume_multiple %282, 8 : i32
    %c0_99 = arith.constant 0 : index
    %284 = arith.index_cast %283 : i32 to index
    %c0_100 = arith.constant 0 : index
    %285 = vector.load %arg10[%c0_99, %284, %c0_100] : memref<4x64x384xf32, #tpu.memory_space<vmem>>, vector<4x8x384xf32>
    %286 = arith.truncf %281 : vector<4x8x128xf32> to vector<4x8x128xbf16>
    "tpu.trace_start"() <{level = 10 : i32, message = "ebh,ehg->ebg"}> : () -> ()
    %cst_101 = arith.constant dense<0.000000e+00> : vector<4x8x384xf32>
    %287 = tpu.matmul %286, %48, %cst_101 {dimension_numbers = #tpu.dot_dimension_numbers<[2], [1], [1], [2], [0, 0, 0, 1, 1, 2], [0], [0]>} : vector<4x8x128xbf16>, vector<4x128x384xbf16>, vector<4x8x384xf32> -> vector<4x8x384xf32>
    "tpu.trace_stop"() : () -> ()
    %288 = vector.extract_strided_slice %285 {offsets = [0, 0, 0], sizes = [4, 8, 128], strides = [1, 1, 1]} : vector<4x8x384xf32> to vector<4x8x128xf32>
    %289 = vector.extract_strided_slice %287 {offsets = [0, 0, 0], sizes = [4, 8, 128], strides = [1, 1, 1]} : vector<4x8x384xf32> to vector<4x8x128xf32>
    %290 = arith.addf %288, %289 : vector<4x8x128xf32>
    %291 = arith.negf %290 : vector<4x8x128xf32>
    %292 = math.exp %291 : vector<4x8x128xf32>
    %cst_102 = arith.constant 1.000000e+00 : f32
    %293 = vector.broadcast %cst_102 : f32 to vector<4x8x128xf32>
    %294 = arith.addf %293, %292 : vector<4x8x128xf32>
    %295 = arith.divf %293, %294 : vector<4x8x128xf32>
    %296 = vector.extract_strided_slice %285 {offsets = [0, 0, 128], sizes = [4, 8, 128], strides = [1, 1, 1]} : vector<4x8x384xf32> to vector<4x8x128xf32>
    %297 = vector.extract_strided_slice %287 {offsets = [0, 0, 128], sizes = [4, 8, 128], strides = [1, 1, 1]} : vector<4x8x384xf32> to vector<4x8x128xf32>
    %298 = arith.addf %296, %297 : vector<4x8x128xf32>
    %299 = arith.negf %298 : vector<4x8x128xf32>
    %300 = math.exp %299 : vector<4x8x128xf32>
    %cst_103 = arith.constant 1.000000e+00 : f32
    %301 = vector.broadcast %cst_103 : f32 to vector<4x8x128xf32>
    %302 = arith.addf %301, %300 : vector<4x8x128xf32>
    %303 = arith.divf %301, %302 : vector<4x8x128xf32>
    %304 = vector.extract_strided_slice %285 {offsets = [0, 0, 256], sizes = [4, 8, 128], strides = [1, 1, 1]} : vector<4x8x384xf32> to vector<4x8x128xf32>
    %305 = vector.extract_strided_slice %287 {offsets = [0, 0, 256], sizes = [4, 8, 128], strides = [1, 1, 1]} : vector<4x8x384xf32> to vector<4x8x128xf32>
    %306 = arith.addf %305, %52 : vector<4x8x128xf32>
    %307 = arith.mulf %295, %306 : vector<4x8x128xf32>
    %308 = arith.addf %304, %307 : vector<4x8x128xf32>
    %309 = math.tanh %308 : vector<4x8x128xf32>
    %cst_104 = arith.constant 1.000000e+00 : f32
    %310 = vector.broadcast %cst_104 : f32 to vector<4x8x128xf32>
    %311 = arith.subf %310, %303 : vector<4x8x128xf32>
    %312 = arith.mulf %311, %309 : vector<4x8x128xf32>
    %313 = arith.mulf %303, %281 : vector<4x8x128xf32>
    %314 = arith.addf %312, %313 : vector<4x8x128xf32>
    %315 = vector.broadcast %c6_i32 : i32 to vector<4x8x1xi32>
    %316 = arith.cmpi slt, %315, %49 : vector<4x8x1xi32>
    %317 = vector.shape_cast %316 : vector<4x8x1xi1> to vector<4x8x1xi1>
    %318 = vector.broadcast %317 : vector<4x8x1xi1> to vector<4x8x128xi1>
    %319 = arith.select %318, %314, %281 : vector<4x8x128xi1>, vector<4x8x128xf32>
    %c7_i32 = arith.constant 7 : i32
    %c8_i32_105 = arith.constant 8 : i32
    %320 = arith.muli %c7_i32, %c8_i32_105 : i32
    %321 = tpu.assume_multiple %320, 8 : i32
    %c0_106 = arith.constant 0 : index
    %322 = arith.index_cast %321 : i32 to index
    %c0_107 = arith.constant 0 : index
    %323 = vector.load %arg10[%c0_106, %322, %c0_107] : memref<4x64x384xf32, #tpu.memory_space<vmem>>, vector<4x8x384xf32>
    %324 = arith.truncf %319 : vector<4x8x128xf32> to vector<4x8x128xbf16>
    "tpu.trace_start"() <{level = 10 : i32, message = "ebh,ehg->ebg"}> : () -> ()
    %cst_108 = arith.constant dense<0.000000e+00> : vector<4x8x384xf32>
    %325 = tpu.matmul %324, %48, %cst_108 {dimension_numbers = #tpu.dot_dimension_numbers<[2], [1], [1], [2], [0, 0, 0, 1, 1, 2], [0], [0]>} : vector<4x8x128xbf16>, vector<4x128x384xbf16>, vector<4x8x384xf32> -> vector<4x8x384xf32>
    "tpu.trace_stop"() : () -> ()
    %326 = vector.extract_strided_slice %323 {offsets = [0, 0, 0], sizes = [4, 8, 128], strides = [1, 1, 1]} : vector<4x8x384xf32> to vector<4x8x128xf32>
    %327 = vector.extract_strided_slice %325 {offsets = [0, 0, 0], sizes = [4, 8, 128], strides = [1, 1, 1]} : vector<4x8x384xf32> to vector<4x8x128xf32>
    %328 = arith.addf %326, %327 : vector<4x8x128xf32>
    %329 = arith.negf %328 : vector<4x8x128xf32>
    %330 = math.exp %329 : vector<4x8x128xf32>
    %cst_109 = arith.constant 1.000000e+00 : f32
    %331 = vector.broadcast %cst_109 : f32 to vector<4x8x128xf32>
    %332 = arith.addf %331, %330 : vector<4x8x128xf32>
    %333 = arith.divf %331, %332 : vector<4x8x128xf32>
    %334 = vector.extract_strided_slice %323 {offsets = [0, 0, 128], sizes = [4, 8, 128], strides = [1, 1, 1]} : vector<4x8x384xf32> to vector<4x8x128xf32>
    %335 = vector.extract_strided_slice %325 {offsets = [0, 0, 128], sizes = [4, 8, 128], strides = [1, 1, 1]} : vector<4x8x384xf32> to vector<4x8x128xf32>
    %336 = arith.addf %334, %335 : vector<4x8x128xf32>
    %337 = arith.negf %336 : vector<4x8x128xf32>
    %338 = math.exp %337 : vector<4x8x128xf32>
    %cst_110 = arith.constant 1.000000e+00 : f32
    %339 = vector.broadcast %cst_110 : f32 to vector<4x8x128xf32>
    %340 = arith.addf %339, %338 : vector<4x8x128xf32>
    %341 = arith.divf %339, %340 : vector<4x8x128xf32>
    %342 = vector.extract_strided_slice %323 {offsets = [0, 0, 256], sizes = [4, 8, 128], strides = [1, 1, 1]} : vector<4x8x384xf32> to vector<4x8x128xf32>
    %343 = vector.extract_strided_slice %325 {offsets = [0, 0, 256], sizes = [4, 8, 128], strides = [1, 1, 1]} : vector<4x8x384xf32> to vector<4x8x128xf32>
    %344 = arith.addf %343, %52 : vector<4x8x128xf32>
    %345 = arith.mulf %333, %344 : vector<4x8x128xf32>
    %346 = arith.addf %342, %345 : vector<4x8x128xf32>
    %347 = math.tanh %346 : vector<4x8x128xf32>
    %cst_111 = arith.constant 1.000000e+00 : f32
    %348 = vector.broadcast %cst_111 : f32 to vector<4x8x128xf32>
    %349 = arith.subf %348, %341 : vector<4x8x128xf32>
    %350 = arith.mulf %349, %347 : vector<4x8x128xf32>
    %351 = arith.mulf %341, %319 : vector<4x8x128xf32>
    %352 = arith.addf %350, %351 : vector<4x8x128xf32>
    %353 = vector.broadcast %c7_i32 : i32 to vector<4x8x1xi32>
    %354 = arith.cmpi slt, %353, %49 : vector<4x8x1xi32>
    %355 = vector.shape_cast %354 : vector<4x8x1xi1> to vector<4x8x1xi1>
    %356 = vector.broadcast %355 : vector<4x8x1xi1> to vector<4x8x128xi1>
    %357 = arith.select %356, %352, %319 : vector<4x8x128xi1>, vector<4x8x128xf32>
    %c8_i32_112 = arith.constant 8 : i32
    %cst_113 = arith.constant 0.000000e+00 : f32
    %358 = vector.broadcast %cst_113 : f32 to vector<8x256xf32>
    %359 = vector.extract_strided_slice %357 {offsets = [0, 0, 0], sizes = [1, 8, 128], strides = [1, 1, 1]} : vector<4x8x128xf32> to vector<1x8x128xf32>
    %360 = vector.shape_cast %359 : vector<1x8x128xf32> to vector<8x128xf32>
    %361 = arith.truncf %360 : vector<8x128xf32> to vector<8x128xbf16>
    %c0_114 = arith.constant 0 : index
    %c0_115 = arith.constant 0 : index
    %c0_116 = arith.constant 0 : index
    %362 = vector.load %arg7[%c0_114, %c0_115, %c0_116] : memref<4x128x256xbf16, #tpu.memory_space<vmem>>, vector<1x128x256xbf16>
    %363 = vector.shape_cast %362 : vector<1x128x256xbf16> to vector<128x256xbf16>
    %cst_117 = arith.constant dense<0.000000e+00> : vector<8x256xf32>
    %364 = tpu.matmul %361, %363, %cst_117 {dimension_numbers = #tpu.dot_dimension_numbers<[1], [0], [0], [1], [0, 0, 1, 1], [], []>} : vector<8x128xbf16>, vector<128x256xbf16>, vector<8x256xf32> -> vector<8x256xf32>
    %365 = arith.addf %358, %364 : vector<8x256xf32>
    %366 = vector.extract_strided_slice %357 {offsets = [1, 0, 0], sizes = [1, 8, 128], strides = [1, 1, 1]} : vector<4x8x128xf32> to vector<1x8x128xf32>
    %367 = vector.shape_cast %366 : vector<1x8x128xf32> to vector<8x128xf32>
    %368 = arith.truncf %367 : vector<8x128xf32> to vector<8x128xbf16>
    %c1_118 = arith.constant 1 : index
    %c0_119 = arith.constant 0 : index
    %c0_120 = arith.constant 0 : index
    %369 = vector.load %arg7[%c1_118, %c0_119, %c0_120] : memref<4x128x256xbf16, #tpu.memory_space<vmem>>, vector<1x128x256xbf16>
    %370 = vector.shape_cast %369 : vector<1x128x256xbf16> to vector<128x256xbf16>
    %cst_121 = arith.constant dense<0.000000e+00> : vector<8x256xf32>
    %371 = tpu.matmul %368, %370, %cst_121 {dimension_numbers = #tpu.dot_dimension_numbers<[1], [0], [0], [1], [0, 0, 1, 1], [], []>} : vector<8x128xbf16>, vector<128x256xbf16>, vector<8x256xf32> -> vector<8x256xf32>
    %372 = arith.addf %365, %371 : vector<8x256xf32>
    %373 = vector.extract_strided_slice %357 {offsets = [2, 0, 0], sizes = [1, 8, 128], strides = [1, 1, 1]} : vector<4x8x128xf32> to vector<1x8x128xf32>
    %374 = vector.shape_cast %373 : vector<1x8x128xf32> to vector<8x128xf32>
    %375 = arith.truncf %374 : vector<8x128xf32> to vector<8x128xbf16>
    %c2_122 = arith.constant 2 : index
    %c0_123 = arith.constant 0 : index
    %c0_124 = arith.constant 0 : index
    %376 = vector.load %arg7[%c2_122, %c0_123, %c0_124] : memref<4x128x256xbf16, #tpu.memory_space<vmem>>, vector<1x128x256xbf16>
    %377 = vector.shape_cast %376 : vector<1x128x256xbf16> to vector<128x256xbf16>
    %cst_125 = arith.constant dense<0.000000e+00> : vector<8x256xf32>
    %378 = tpu.matmul %375, %377, %cst_125 {dimension_numbers = #tpu.dot_dimension_numbers<[1], [0], [0], [1], [0, 0, 1, 1], [], []>} : vector<8x128xbf16>, vector<128x256xbf16>, vector<8x256xf32> -> vector<8x256xf32>
    %379 = arith.addf %372, %378 : vector<8x256xf32>
    %380 = vector.extract_strided_slice %357 {offsets = [3, 0, 0], sizes = [1, 8, 128], strides = [1, 1, 1]} : vector<4x8x128xf32> to vector<1x8x128xf32>
    %381 = vector.shape_cast %380 : vector<1x8x128xf32> to vector<8x128xf32>
    %382 = arith.truncf %381 : vector<8x128xf32> to vector<8x128xbf16>
    %c3_126 = arith.constant 3 : index
    %c0_127 = arith.constant 0 : index
    %c0_128 = arith.constant 0 : index
    %383 = vector.load %arg7[%c3_126, %c0_127, %c0_128] : memref<4x128x256xbf16, #tpu.memory_space<vmem>>, vector<1x128x256xbf16>
    %384 = vector.shape_cast %383 : vector<1x128x256xbf16> to vector<128x256xbf16>
    %cst_129 = arith.constant dense<0.000000e+00> : vector<8x256xf32>
    %385 = tpu.matmul %382, %384, %cst_129 {dimension_numbers = #tpu.dot_dimension_numbers<[1], [0], [0], [1], [0, 0, 1, 1], [], []>} : vector<8x128xbf16>, vector<128x256xbf16>, vector<8x256xf32> -> vector<8x256xf32>
    %386 = arith.addf %379, %385 : vector<8x256xf32>
    %c0_130 = arith.constant 0 : index
    %c0_131 = arith.constant 0 : index
    %387 = vector.load %arg8[%c0_130, %c0_131] : memref<1x256xf32, #tpu.memory_space<vmem>>, vector<1x256xf32>
    %388 = vector.broadcast %387 : vector<1x256xf32> to vector<8x256xf32>
    %389 = arith.addf %386, %388 : vector<8x256xf32>
    %cst_132 = arith.constant 0.000000e+00 : f32
    %390 = vector.broadcast %cst_132 : f32 to vector<8x256xf32>
    %391 = arith.maximumf %389, %390 : vector<8x256xf32>
    %c0_133 = arith.constant 0 : index
    %c0_134 = arith.constant 0 : index
    %392 = vector.load %arg9[%c0_133, %c0_134] : memref<8x256xf32, #tpu.memory_space<vmem>>, vector<8x256xf32>
    tpu.vector_store %arg9[%c0_133, %c0_134], %391 {strides = array<i32>} : memref<8x256xf32, #tpu.memory_space<vmem>>, vector<8x256xf32>,
    return
  }
  func.func @transform_0(%arg0: i32) -> (i32, i32, i32) {
    %c0_i32 = arith.constant 0 : i32
    %c0_i32_0 = arith.constant 0 : i32
    %c0_i32_1 = arith.constant 0 : i32
    %c0_i32_2 = arith.constant 0 : i32
    return %c0_i32, %c0_i32_0, %c0_i32_1 : i32, i32, i32
  }
  func.func @transform_1(%arg0: i32) -> (i32, i32, i32) {
    %c0_i32 = arith.constant 0 : i32
    %c0_i32_0 = arith.constant 0 : i32
    %c0_i32_1 = arith.constant 0 : i32
    %c0_i32_2 = arith.constant 0 : i32
    return %c0_i32, %c0_i32_0, %c0_i32_1 : i32, i32, i32
  }
  func.func @transform_2(%arg0: i32) -> (i32, i32, i32) {
    %c0_i32 = arith.constant 0 : i32
    %c0_i32_0 = arith.constant 0 : i32
    %c0_i32_1 = arith.constant 0 : i32
    %c0_i32_2 = arith.constant 0 : i32
    return %c0_i32, %c0_i32_0, %c0_i32_1 : i32, i32, i32
  }
  func.func @transform_3(%arg0: i32) -> (i32, i32, i32) {
    %c0_i32 = arith.constant 0 : i32
    %c0_i32_0 = arith.constant 0 : i32
    %c0_i32_1 = arith.constant 0 : i32
    %c0_i32_2 = arith.constant 0 : i32
    return %c0_i32, %c0_i32_0, %c0_i32_1 : i32, i32, i32
  }
  func.func @transform_4(%arg0: i32) -> (i32, i32, i32) {
    %c0_i32 = arith.constant 0 : i32
    %c0_i32_0 = arith.constant 0 : i32
    %c0_i32_1 = arith.constant 0 : i32
    %c0_i32_2 = arith.constant 0 : i32
    return %c0_i32, %c0_i32_0, %c0_i32_1 : i32, i32, i32
  }
  func.func @transform_5(%arg0: i32) -> (i32, i32, i32) {
    %c0_i32 = arith.constant 0 : i32
    %c0_i32_0 = arith.constant 0 : i32
    %c0_i32_1 = arith.constant 0 : i32
    %c0_i32_2 = arith.constant 0 : i32
    return %c0_i32, %c0_i32_0, %c0_i32_1 : i32, i32, i32
  }
  func.func @transform_6(%arg0: i32) -> (i32, i32, i32) {
    %c0_i32 = arith.constant 0 : i32
    %c0_i32_0 = arith.constant 0 : i32
    %c0_i32_1 = arith.constant 0 : i32
    %c0_i32_2 = arith.constant 0 : i32
    return %c0_i32, %c0_i32_0, %c0_i32_1 : i32, i32, i32
  }
  func.func @transform_7(%arg0: i32) -> (i32, i32) {
    %c0_i32 = arith.constant 0 : i32
    %c0_i32_0 = arith.constant 0 : i32
    %c0_i32_1 = arith.constant 0 : i32
    return %c0_i32, %c0_i32_0 : i32, i32
  }
  func.func @transform_8(%arg0: i32) -> (i32, i32) {
    %c0_i32 = arith.constant 0 : i32
    %c0_i32_0 = arith.constant 0 : i32
    %c0_i32_1 = arith.constant 0 : i32
    return %c0_i32, %c0_i32_0 : i32, i32
  }
}

</mosaic_0001>

<llo_original>
// kernel: tpu_custom_call.1
$region0: #{tpu_custom_call.1}
  #allocation0 [shape = 'u32[]', space=smem, size = 0x4, offset = 0x4, fixed_abs, tag = 'smem constant byte address 0x4 - core index']
  #allocation1 [shape = 'u32[72,128]{1,0:T(1,128)}', space=vmem, size = 0x9000, scoped, tag = 'internal scratch']
  #allocation2 [shape = 'f32[4,64,384]{2,1,0:T(8,128)}', space=vmem, size = 0x60000, scoped, tag = 'scratch operand']
  %s0 = inlined_call_operand.vmem [shape: s32[4,8,1], index: 0, kind: input, shape index: {}]
  %s1 = inlined_call_operand.hbm [shape: bf16[4,64,128], index: 1, kind: input, shape index: {}]
  %s2 = inlined_call_operand.hbm [shape: bf16[4,128,384], index: 2, kind: input, shape index: {}]
  %s3 = inlined_call_operand.vmem [shape: f32[4,1,384], index: 3, kind: input, shape index: {}]
  %s4 = inlined_call_operand.hbm [shape: bf16[4,128,384], index: 4, kind: input, shape index: {}]
  %s5 = inlined_call_operand.vmem [shape: f32[4,1,128], index: 5, kind: input, shape index: {}]
  %s6 = inlined_call_operand.hbm [shape: bf16[4,128,256], index: 6, kind: input, shape index: {}]
  %s7 = inlined_call_operand.vmem [shape: f32[1,256], index: 7, kind: input, shape index: {}]
  %s8 = inlined_call_operand.hbm [shape: f32[8,256], index: 8, kind: output, shape index: {}]
  %s9 = sld [smem:[#allocation0]]
  $region58: #{tpu_custom_call.1} parent=0
    _
  %s11 = ssub.s32 1, %s9
  %s12 = scalar_select 0, %s11, %s9
  $region1: #{tpu_custom_call.1} parent=0
    #allocation3 [shape = 'u8[65536]{0}', space=vmem, size = 0x10000, scoped, tag = 'input window, operand 1, single buffered']
    #allocation4 [shape = 's32[1]{0}', space=sflag, size = 0x4, scoped, tag = 'scoped memory for tpu_custom_call.1']
    #allocation5 [shape = 's32[1]{0}', space=sflag, size = 0x4, scoped, tag = 'scoped memory for tpu_custom_call.1']
    #allocation6 [shape = 'u8[393216]{0}', space=vmem, size = 0x60000, scoped, tag = 'input window, operand 2, single buffered']
    #allocation7 [shape = 's32[1]{0}', space=sflag, size = 0x4, scoped, tag = 'scoped memory for tpu_custom_call.1']
    #allocation8 [shape = 'u8[393216]{0}', space=vmem, size = 0x60000, scoped, tag = 'input window, operand 4, single buffered']
    #allocation9 [shape = 'u8[262144]{0}', space=vmem, size = 0x40000, scoped, tag = 'input window, operand 6, single buffered']
    #allocation10 [shape = 's32[1]{0}', space=sflag, size = 0x4, scoped, tag = 'scoped memory for tpu_custom_call.1']
    #allocation11 [shape = 'u8[8192]{0}', space=vmem, size = 0x2000, scoped, tag = 'output window, operand 0, single buffered']
    %13 = vsyncpa [#allocation4], 0
    %14 = vsyncpa [#allocation7], 0
    %15 = vsyncpa [#allocation10], 0
    %16 = vsyncpa [#allocation5], 0
    // Predicated region
    $region2: #{tpu_custom_call.1} parent=1 // pred_check
      _
    $region3: #{tpu_custom_call.1} parent=1 // pred_check_branch
      %18 = sbr.rel (0) target = $region5
    $region4: #{tpu_custom_call.1} parent=1 // pred_region
      _
    $region5: #{tpu_custom_call.1} parent=1 // pred_fallthru
      _
    // Predicated region
    $region6: #{tpu_custom_call.1} parent=1 // pred_check
      _
    $region7: #{tpu_custom_call.1} parent=1 // pred_check_branch
      %20 = sbr.rel (0) target = $region9
    $region8: #{tpu_custom_call.1} parent=1 // pred_region
      %22 = vsyncadd [#allocation4], 0
      %s23 = sshll.u32 %s1, 4
      %s24 = int_to_ptr.hbm [resolvable:$true] %s23
      %s25 = sshll.u32 [#allocation3], 4
      %s26 = int_to_ptr.vmem [resolvable:$true] %s25
      %31 = dma.hbm_to_vmem [thread:$0]  %s24, 2048, %s26, [#allocation4], 64, 64, 4
    $region9: #{tpu_custom_call.1} parent=1 // pred_fallthru
      _
    // Predicated region
    $region10: #{tpu_custom_call.1} parent=1 // pred_check
      _
    $region11: #{tpu_custom_call.1} parent=1 // pred_check_branch
      %33 = sbr.rel (0) target = $region13
    $region12: #{tpu_custom_call.1} parent=1 // pred_region
      %35 = vsyncadd [#allocation7], 0
      %s36 = sshll.u32 %s2, 4
      %s37 = int_to_ptr.hbm [resolvable:$true] %s36
      %s38 = sshll.u32 [#allocation6], 4
      %s39 = int_to_ptr.vmem [resolvable:$true] %s38
      %44 = dma.hbm_to_vmem [thread:$0]  %s37, 12288, %s39, [#allocation7], 192, 192, 12
    $region13: #{tpu_custom_call.1} parent=1 // pred_fallthru
      _
    // Predicated region
    $region14: #{tpu_custom_call.1} parent=1 // pred_check
      _
    $region15: #{tpu_custom_call.1} parent=1 // pred_check_branch
      %46 = sbr.rel (0) target = $region17
    $region16: #{tpu_custom_call.1} parent=1 // pred_region
      _
    $region17: #{tpu_custom_call.1} parent=1 // pred_fallthru
      _
    // Predicated region
    $region18: #{tpu_custom_call.1} parent=1 // pred_check
      _
    $region19: #{tpu_custom_call.1} parent=1 // pred_check_branch
      %48 = sbr.rel (0) target = $region21
    $region20: #{tpu_custom_call.1} parent=1 // pred_region
      %50 = vsyncadd [#allocation7], 0
      %s51 = sshll.u32 %s4, 4
      %s52 = int_to_ptr.hbm [resolvable:$true] %s51
      %s53 = sshll.u32 [#allocation8], 4
      %s54 = int_to_ptr.vmem [resolvable:$true] %s53
      %59 = dma.hbm_to_vmem [thread:$0]  %s52, 12288, %s54, [#allocation7], 192, 192, 12
    $region21: #{tpu_custom_call.1} parent=1 // pred_fallthru
      _
    // Predicated region
    $region22: #{tpu_custom_call.1} parent=1 // pred_check
      _
    $region23: #{tpu_custom_call.1} parent=1 // pred_check_branch
      %61 = sbr.rel (0) target = $region25
    $region24: #{tpu_custom_call.1} parent=1 // pred_region
      _
    $region25: #{tpu_custom_call.1} parent=1 // pred_fallthru
      _
    // Predicated region
    $region26: #{tpu_custom_call.1} parent=1 // pred_check
      _
    $region27: #{tpu_custom_call.1} parent=1 // pred_check_branch
      %63 = sbr.rel (0) target = $region29
    $region28: #{tpu_custom_call.1} parent=1 // pred_region
      %65 = vsyncadd [#allocation10], 0
      %s66 = sshll.u32 %s6, 4
      %s67 = int_to_ptr.hbm [resolvable:$true] %s66
      %s68 = sshll.u32 [#allocation9], 4
      %s69 = int_to_ptr.vmem [resolvable:$true] %s68
      %74 = dma.hbm_to_vmem [thread:$0]  %s67, 8192, %s69, [#allocation10], 128, 128, 8
    $region29: #{tpu_custom_call.1} parent=1 // pred_fallthru
      _
    // Predicated region
    $region30: #{tpu_custom_call.1} parent=1 // pred_check
      _
    $region31: #{tpu_custom_call.1} parent=1 // pred_check_branch
      %76 = sbr.rel (0) target = $region33
    $region32: #{tpu_custom_call.1} parent=1 // pred_region
      _
    $region33: #{tpu_custom_call.1} parent=1 // pred_fallthru
      _
    // Predicated region
    $region34: #{tpu_custom_call.1} parent=1 // pred_check
      _
    $region35: #{tpu_custom_call.1} parent=1 // pred_check_branch
      %78 = sbr.rel (0) target = $region37
    $region36: #{tpu_custom_call.1} parent=1 // pred_region
      %80 = dma.done [#allocation4], 2048
    $region37: #{tpu_custom_call.1} parent=1 // pred_fallthru
      _
    // Predicated region
    $region38: #{tpu_custom_call.1} parent=1 // pred_check
      _
    $region39: #{tpu_custom_call.1} parent=1 // pred_check_branch
      %82 = sbr.rel (0) target = $region41
    $region40: #{tpu_custom_call.1} parent=1 // pred_region
      %84 = dma.done [#allocation7], 12288
    $region41: #{tpu_custom_call.1} parent=1 // pred_fallthru
      _
    // Predicated region
    $region42: #{tpu_custom_call.1} parent=1 // pred_check
      _
    $region43: #{tpu_custom_call.1} parent=1 // pred_check_branch
      %86 = sbr.rel (0) target = $region45
    $region44: #{tpu_custom_call.1} parent=1 // pred_region
      %88 = dma.done [#allocation7], 12288
    $region45: #{tpu_custom_call.1} parent=1 // pred_fallthru
      _
    // Predicated region
    $region46: #{tpu_custom_call.1} parent=1 // pred_check
      _
    $region47: #{tpu_custom_call.1} parent=1 // pred_check_branch
      %90 = sbr.rel (0) target = $region49
    $region48: #{tpu_custom_call.1} parent=1 // pred_region
      %92 = dma.done [#allocation10], 8192
    $region49: #{tpu_custom_call.1} parent=1 // pred_fallthru
      _
    %v94 = vld [vmem:[#allocation3] sm:$0xf]
    %v95 = vld [vmem:[#allocation3 + $0x4] sm:$0xf]
    %v96 = vld [vmem:[#allocation3 + $0x8] sm:$0xf]
    %v97 = vld [vmem:[#allocation3 + $0xc] sm:$0xf]
    %v98 = vld [vmem:[#allocation3 + $0x10] sm:$0xf]
    %v99 = vld [vmem:[#allocation3 + $0x14] sm:$0xf]
    %v100 = vld [vmem:[#allocation3 + $0x18] sm:$0xf]
    %v101 = vld [vmem:[#allocation3 + $0x1c] sm:$0xf]
    %v102 = vld [vmem:[#allocation6] sm:$0xff]
    %v103 = vld [vmem:[#allocation6 + $0x8] sm:$0xf]
    %v104 = vld [vmem:[#allocation6 + $0xc] sm:$0xff]
    %v105 = vld [vmem:[#allocation6 + $0x14] sm:$0xf]
    %v106 = vld [vmem:[#allocation6 + $0x18] sm:$0xff]
    %v107 = vld [vmem:[#allocation6 + $0x20] sm:$0xf]
    %v108 = vld [vmem:[#allocation6 + $0x24] sm:$0xff]
    %v109 = vld [vmem:[#allocation6 + $0x2c] sm:$0xf]
    %v110 = vld [vmem:[#allocation6 + $0x30] sm:$0xff]
    %v111 = vld [vmem:[#allocation6 + $0x38] sm:$0xf]
    %v112 = vld [vmem:[#allocation6 + $0x3c] sm:$0xff]
    %v113 = vld [vmem:[#allocation6 + $0x44] sm:$0xf]
    %v114 = vld [vmem:[#allocation6 + $0x48] sm:$0xff]
    %v115 = vld [vmem:[#allocation6 + $0x50] sm:$0xf]
    %v116 = vld [vmem:[#allocation6 + $0x54] sm:$0xff]
    %v117 = vld [vmem:[#allocation6 + $0x5c] sm:$0xf]
    %v118 = vld [vmem:[#allocation6 + $0x60] sm:$0xff]
    %v119 = vld [vmem:[#allocation6 + $0x68] sm:$0xf]
    %v120 = vld [vmem:[#allocation6 + $0x6c] sm:$0xff]
    %v121 = vld [vmem:[#allocation6 + $0x74] sm:$0xf]
    %v122 = vld [vmem:[#allocation6 + $0x78] sm:$0xff]
    %v123 = vld [vmem:[#allocation6 + $0x80] sm:$0xf]
    %v124 = vld [vmem:[#allocation6 + $0x84] sm:$0xff]
    %v125 = vld [vmem:[#allocation6 + $0x8c] sm:$0xf]
    %v126 = vld [vmem:[#allocation6 + $0x90] sm:$0xff]
    %v127 = vld [vmem:[#allocation6 + $0x98] sm:$0xf]
    %v128 = vld [vmem:[#allocation6 + $0x9c] sm:$0xff]
    %v129 = vld [vmem:[#allocation6 + $0xa4] sm:$0xf]
    %v130 = vld [vmem:[#allocation6 + $0xa8] sm:$0xff]
    %v131 = vld [vmem:[#allocation6 + $0xb0] sm:$0xf]
    %v132 = vld [vmem:[#allocation6 + $0xb4] sm:$0xff]
    %v133 = vld [vmem:[#allocation6 + $0xbc] sm:$0xf]
    %v134 = vld [vmem:[%s3] sm:$0x7]
    %v136 = vperm.slane %v134, 0
    %v137 = vperm.slane %v134, 1
    %v138 = vperm.slane %v134, 2
    %v150 = vunpack.c.l.b16 %v94
    %v151 = vunpack.c.l.b16 %v95
    %v152 = vunpack.c.l.b16 %v96
    %v153 = vunpack.c.l.b16 %v97
    %v154 = vunpack.c.l.b16 %v98
    %v155 = vunpack.c.l.b16 %v99
    %v156 = vunpack.c.l.b16 %v100
    %v157 = vunpack.c.l.b16 %v101
    %v158 = vpack.c.b16 %v151, %v150
    %v159 = vpack.c.b16 %v153, %v152
    %v160 = vpack.c.b16 %v155, %v154
    %v161 = vpack.c.b16 %v157, %v156
    %v198 = vunpack.c.l.b16 %v102
    %v199 = vunpack.c.h.b16 %v102
    %v200 = vunpack.c.l.b16 %v103
    %v201 = vunpack.c.l.b16 %v104
    %v202 = vunpack.c.h.b16 %v104
    %v203 = vunpack.c.l.b16 %v105
    %v204 = vunpack.c.l.b16 %v106
    %v205 = vunpack.c.h.b16 %v106
    %v206 = vunpack.c.l.b16 %v107
    %v207 = vunpack.c.l.b16 %v108
    %v208 = vunpack.c.h.b16 %v108
    %v209 = vunpack.c.l.b16 %v109
    %v210 = vunpack.c.l.b16 %v110
    %v211 = vunpack.c.h.b16 %v110
    %v212 = vunpack.c.l.b16 %v111
    %v213 = vunpack.c.l.b16 %v112
    %v214 = vunpack.c.h.b16 %v112
    %v215 = vunpack.c.l.b16 %v113
    %v216 = vunpack.c.l.b16 %v114
    %v217 = vunpack.c.h.b16 %v114
    %v218 = vunpack.c.l.b16 %v115
    %v219 = vunpack.c.l.b16 %v116
    %v220 = vunpack.c.h.b16 %v116
    %v221 = vunpack.c.l.b16 %v117
    %v222 = vunpack.c.l.b16 %v118
    %v223 = vunpack.c.h.b16 %v118
    %v224 = vunpack.c.l.b16 %v119
    %v225 = vunpack.c.l.b16 %v120
    %v226 = vunpack.c.h.b16 %v120
    %v227 = vunpack.c.l.b16 %v121
    %v228 = vunpack.c.l.b16 %v122
    %v229 = vunpack.c.h.b16 %v122
    %v230 = vunpack.c.l.b16 %v123
    %v231 = vunpack.c.l.b16 %v124
    %v232 = vunpack.c.h.b16 %v124
    %v233 = vunpack.c.l.b16 %v125
    %v234 = vunpack.c.l.b16 %v126
    %v235 = vunpack.c.h.b16 %v126
    %v236 = vunpack.c.l.b16 %v127
    %v237 = vunpack.c.l.b16 %v128
    %v238 = vunpack.c.h.b16 %v128
    %v239 = vunpack.c.l.b16 %v129
    %v240 = vunpack.c.l.b16 %v130
    %v241 = vunpack.c.h.b16 %v130
    %v242 = vunpack.c.l.b16 %v131
    %v243 = vunpack.c.l.b16 %v132
    %v244 = vunpack.c.h.b16 %v132
    %v245 = vunpack.c.l.b16 %v133
    %v246 = vpack.c.b16 %v201, %v198
    %v247 = vpack.c.b16 %v202, %v199
    %v248 = vpack.c.b16 %v203, %v200
    %v249 = vpack.c.b16 %v207, %v204
    %v250 = vpack.c.b16 %v208, %v205
    %v251 = vpack.c.b16 %v209, %v206
    %v252 = vpack.c.b16 %v213, %v210
    %v253 = vpack.c.b16 %v214, %v211
    %v254 = vpack.c.b16 %v215, %v212
    %v255 = vpack.c.b16 %v219, %v216
    %v256 = vpack.c.b16 %v220, %v217
    %v257 = vpack.c.b16 %v221, %v218
    %v258 = vpack.c.b16 %v225, %v222
    %v259 = vpack.c.b16 %v226, %v223
    %v260 = vpack.c.b16 %v227, %v224
    %v261 = vpack.c.b16 %v231, %v228
    %v262 = vpack.c.b16 %v232, %v229
    %v263 = vpack.c.b16 %v233, %v230
    %v264 = vpack.c.b16 %v237, %v234
    %v265 = vpack.c.b16 %v238, %v235
    %v266 = vpack.c.b16 %v239, %v236
    %v267 = vpack.c.b16 %v243, %v240
    %v268 = vpack.c.b16 %v244, %v241
    %v269 = vpack.c.b16 %v245, %v242
    %294 = vmatpush.bf16.msra.mxu0 %v267
    %295 = vmatpush.bf16.msra.mxu0 %v264
    %296 = vmatpush.bf16.msra.mxu0 %v261
    %297 = vmatpush.bf16.msra.mxu0 %v258
    %298 = vmatpush.bf16.msra.mxu0 %v255
    %299 = vmatpush.bf16.msra.mxu0 %v252
    %300 = vmatpush.bf16.msra.mxu0 %v249
    %301 = vmatpush.bf16.msra.mxu0 %v246
    %302 = vmatmul.bf16.gmra.mxu0 %v158
    %v303 = vpop.f32.mrf.mxu0
    %v304 = vadd.f32 %v136, %v303
    %v305 = vpop.f32.mrf.mxu0
    %v306 = vadd.f32 %v136, %v305
    %307 = vmatmul.bf16.gmra.mxu0 %v159
    %v308 = vpop.f32.mrf.mxu0
    %v309 = vadd.f32 %v136, %v308
    %v310 = vpop.f32.mrf.mxu0
    %v311 = vadd.f32 %v136, %v310
    %312 = vmatmul.bf16.gmra.mxu0 %v160
    %v313 = vpop.f32.mrf.mxu0
    %v314 = vadd.f32 %v136, %v313
    %v315 = vpop.f32.mrf.mxu0
    %v316 = vadd.f32 %v136, %v315
    %317 = vmatmul.bf16.gmra.mxu0 %v161
    %v318 = vpop.f32.mrf.mxu0
    %v319 = vadd.f32 %v136, %v318
    %v320 = vpop.f32.mrf.mxu0
    %v321 = vadd.f32 %v136, %v320
    %322 = vdwg.mxu0
    %323 = vmatpush.bf16.msra.mxu0 %v268
    %324 = vmatpush.bf16.msra.mxu0 %v265
    %325 = vmatpush.bf16.msra.mxu0 %v262
    %326 = vmatpush.bf16.msra.mxu0 %v259
    %327 = vmatpush.bf16.msra.mxu0 %v256
    %328 = vmatpush.bf16.msra.mxu0 %v253
    %329 = vmatpush.bf16.msra.mxu0 %v250
    %330 = vmatpush.bf16.msra.mxu0 %v247
    %331 = vmatmul.bf16.gmra.mxu0 %v158
    %v332 = vpop.f32.mrf.mxu0
    %v333 = vadd.f32 %v137, %v332
    %v334 = vpop.f32.mrf.mxu0
    %v335 = vadd.f32 %v137, %v334
    %336 = vmatmul.bf16.gmra.mxu0 %v159
    %v337 = vpop.f32.mrf.mxu0
    %v338 = vadd.f32 %v137, %v337
    %v339 = vpop.f32.mrf.mxu0
    %v340 = vadd.f32 %v137, %v339
    %341 = vmatmul.bf16.gmra.mxu0 %v160
    %v342 = vpop.f32.mrf.mxu0
    %v343 = vadd.f32 %v137, %v342
    %v344 = vpop.f32.mrf.mxu0
    %v345 = vadd.f32 %v137, %v344
    %346 = vmatmul.bf16.gmra.mxu0 %v161
    %v347 = vpop.f32.mrf.mxu0
    %v348 = vadd.f32 %v137, %v347
    %v349 = vpop.f32.mrf.mxu0
    %v350 = vadd.f32 %v137, %v349
    %351 = vdwg.mxu0
    %352 = vmatpush.bf16.msra.mxu0 %v269
    %353 = vmatpush.bf16.msra.mxu0 %v266
    %354 = vmatpush.bf16.msra.mxu0 %v263
    %355 = vmatpush.bf16.msra.mxu0 %v260
    %356 = vmatpush.bf16.msra.mxu0 %v257
    %357 = vmatpush.bf16.msra.mxu0 %v254
    %358 = vmatpush.bf16.msra.mxu0 %v251
    %359 = vmatpush.bf16.msra.mxu0 %v248
    %360 = vmatmul.bf16.gmra.mxu0 %v158
    %v361 = vpop.f32.mrf.mxu0
    %v362 = vadd.f32 %v138, %v361
    %v363 = vpop.f32.mrf.mxu0
    %v364 = vadd.f32 %v138, %v363
    %365 = vmatmul.bf16.gmra.mxu0 %v159
    %v366 = vpop.f32.mrf.mxu0
    %v367 = vadd.f32 %v138, %v366
    %v368 = vpop.f32.mrf.mxu0
    %v369 = vadd.f32 %v138, %v368
    %370 = vmatmul.bf16.gmra.mxu0 %v160
    %v371 = vpop.f32.mrf.mxu0
    %v372 = vadd.f32 %v138, %v371
    %v373 = vpop.f32.mrf.mxu0
    %v374 = vadd.f32 %v138, %v373
    %375 = vmatmul.bf16.gmra.mxu0 %v161
    %v376 = vpop.f32.mrf.mxu0
    %v377 = vadd.f32 %v138, %v376
    %v378 = vpop.f32.mrf.mxu0
    %v379 = vadd.f32 %v138, %v378
    %380 = vdwg.mxu0
    %381 = vst [vmem:[#allocation2] sm:$0xff] %v304
    %382 = vst [vmem:[#allocation2 + $0x8] sm:$0xff] %v333
    %383 = vst [vmem:[#allocation2 + $0x10] sm:$0xff] %v362
    %384 = vst [vmem:[#allocation2 + $0x18] sm:$0xff] %v306
    %385 = vst [vmem:[#allocation2 + $0x20] sm:$0xff] %v335
    %386 = vst [vmem:[#allocation2 + $0x28] sm:$0xff] %v364
    %387 = vst [vmem:[#allocation2 + $0x30] sm:$0xff] %v309
    %388 = vst [vmem:[#allocation2 + $0x38] sm:$0xff] %v338
    %389 = vst [vmem:[#allocation2 + $0x40] sm:$0xff] %v367
    %390 = vst [vmem:[#allocation2 + $0x48] sm:$0xff] %v311
    %391 = vst [vmem:[#allocation2 + $0x50] sm:$0xff] %v340
    %392 = vst [vmem:[#allocation2 + $0x58] sm:$0xff] %v369
    %393 = vst [vmem:[#allocation2 + $0x60] sm:$0xff] %v314
    %394 = vst [vmem:[#allocation2 + $0x68] sm:$0xff] %v343
    %395 = vst [vmem:[#allocation2 + $0x70] sm:$0xff] %v372
    %396 = vst [vmem:[#allocation2 + $0x78] sm:$0xff] %v316
    %397 = vst [vmem:[#allocation2 + $0x80] sm:$0xff] %v345
    %398 = vst [vmem:[#allocation2 + $0x88] sm:$0xff] %v374
    %399 = vst [vmem:[#allocation2 + $0x90] sm:$0xff] %v319
    %400 = vst [vmem:[#allocation2 + $0x98] sm:$0xff] %v348
    %401 = vst [vmem:[#allocation2 + $0xa0] sm:$0xff] %v377
    %402 = vst [vmem:[#allocation2 + $0xa8] sm:$0xff] %v321
    %403 = vst [vmem:[#allocation2 + $0xb0] sm:$0xff] %v350
    %404 = vst [vmem:[#allocation2 + $0xb8] sm:$0xff] %v379
    %s405 = scalar_lea.vmem [#allocation3], 32
    %v406 = vld [vmem:[%s405] sm:$0xf]
    %v407 = vld [vmem:[%s405 + $0x4] sm:$0xf]
    %v408 = vld [vmem:[%s405 + $0x8] sm:$0xf]
    %v409 = vld [vmem:[%s405 + $0xc] sm:$0xf]
    %v410 = vld [vmem:[%s405 + $0x10] sm:$0xf]
    %v411 = vld [vmem:[%s405 + $0x14] sm:$0xf]
    %v412 = vld [vmem:[%s405 + $0x18] sm:$0xf]
    %v413 = vld [vmem:[%s405 + $0x1c] sm:$0xf]
    %s414 = scalar_lea.vmem [#allocation6], 192
    %v415 = vld [vmem:[%s414] sm:$0xff]
    %v416 = vld [vmem:[%s414 + $0x8] sm:$0xf]
    %v417 = vld [vmem:[%s414 + $0xc] sm:$0xff]
    %v418 = vld [vmem:[%s414 + $0x14] sm:$0xf]
    %v419 = vld [vmem:[%s414 + $0x18] sm:$0xff]
    %v420 = vld [vmem:[%s414 + $0x20] sm:$0xf]
    %v421 = vld [vmem:[%s414 + $0x24] sm:$0xff]
    %v422 = vld [vmem:[%s414 + $0x2c] sm:$0xf]
    %v423 = vld [vmem:[%s414 + $0x30] sm:$0xff]
    %v424 = vld [vmem:[%s414 + $0x38] sm:$0xf]
    %v425 = vld [vmem:[%s414 + $0x3c] sm:$0xff]
    %v426 = vld [vmem:[%s414 + $0x44] sm:$0xf]
    %v427 = vld [vmem:[%s414 + $0x48] sm:$0xff]
    %v428 = vld [vmem:[%s414 + $0x50] sm:$0xf]
    %v429 = vld [vmem:[%s414 + $0x54] sm:$0xff]
    %v430 = vld [vmem:[%s414 + $0x5c] sm:$0xf]
    %v431 = vld [vmem:[%s414 + $0x60] sm:$0xff]
    %v432 = vld [vmem:[%s414 + $0x68] sm:$0xf]
    %v433 = vld [vmem:[%s414 + $0x6c] sm:$0xff]
    %v434 = vld [vmem:[%s414 + $0x74] sm:$0xf]
    %v435 = vld [vmem:[%s414 + $0x78] sm:$0xff]
    %v436 = vld [vmem:[%s414 + $0x80] sm:$0xf]
    %v437 = vld [vmem:[%s414 + $0x84] sm:$0xff]
    %v438 = vld [vmem:[%s414 + $0x8c] sm:$0xf]
    %v439 = vld [vmem:[%s414 + $0x90] sm:$0xff]
    %v440 = vld [vmem:[%s414 + $0x98] sm:$0xf]
    %v441 = vld [vmem:[%s414 + $0x9c] sm:$0xff]
    %v442 = vld [vmem:[%s414 + $0xa4] sm:$0xf]
    %v443 = vld [vmem:[%s414 + $0xa8] sm:$0xff]
    %v444 = vld [vmem:[%s414 + $0xb0] sm:$0xf]
    %v445 = vld [vmem:[%s414 + $0xb4] sm:$0xff]
    %v446 = vld [vmem:[%s414 + $0xbc] sm:$0xf]
    %s447 = scalar_lea.vmem %s3, 3
    %v448 = vld [vmem:[%s447] sm:$0x7]
    %v450 = vperm.slane %v448, 0
    %v451 = vperm.slane %v448, 1
    %v452 = vperm.slane %v448, 2
    %v464 = vunpack.c.l.b16 %v406
    %v465 = vunpack.c.l.b16 %v407
    %v466 = vunpack.c.l.b16 %v408
    %v467 = vunpack.c.l.b16 %v409
    %v468 = vunpack.c.l.b16 %v410
    %v469 = vunpack.c.l.b16 %v411
    %v470 = vunpack.c.l.b16 %v412
    %v471 = vunpack.c.l.b16 %v413
    %v472 = vpack.c.b16 %v465, %v464
    %v473 = vpack.c.b16 %v467, %v466
    %v474 = vpack.c.b16 %v469, %v468
    %v475 = vpack.c.b16 %v471, %v470
    %v512 = vunpack.c.l.b16 %v415
    %v513 = vunpack.c.h.b16 %v415
    %v514 = vunpack.c.l.b16 %v416
    %v515 = vunpack.c.l.b16 %v417
    %v516 = vunpack.c.h.b16 %v417
    %v517 = vunpack.c.l.b16 %v418
    %v518 = vunpack.c.l.b16 %v419
    %v519 = vunpack.c.h.b16 %v419
    %v520 = vunpack.c.l.b16 %v420
    %v521 = vunpack.c.l.b16 %v421
    %v522 = vunpack.c.h.b16 %v421
    %v523 = vunpack.c.l.b16 %v422
    %v524 = vunpack.c.l.b16 %v423
    %v525 = vunpack.c.h.b16 %v423
    %v526 = vunpack.c.l.b16 %v424
    %v527 = vunpack.c.l.b16 %v425
    %v528 = vunpack.c.h.b16 %v425
    %v529 = vunpack.c.l.b16 %v426
    %v530 = vunpack.c.l.b16 %v427
    %v531 = vunpack.c.h.b16 %v427
    %v532 = vunpack.c.l.b16 %v428
    %v533 = vunpack.c.l.b16 %v429
    %v534 = vunpack.c.h.b16 %v429
    %v535 = vunpack.c.l.b16 %v430
    %v536 = vunpack.c.l.b16 %v431
    %v537 = vunpack.c.h.b16 %v431
    %v538 = vunpack.c.l.b16 %v432
    %v539 = vunpack.c.l.b16 %v433
    %v540 = vunpack.c.h.b16 %v433
    %v541 = vunpack.c.l.b16 %v434
    %v542 = vunpack.c.l.b16 %v435
    %v543 = vunpack.c.h.b16 %v435
    %v544 = vunpack.c.l.b16 %v436
    %v545 = vunpack.c.l.b16 %v437
    %v546 = vunpack.c.h.b16 %v437
    %v547 = vunpack.c.l.b16 %v438
    %v548 = vunpack.c.l.b16 %v439
    %v549 = vunpack.c.h.b16 %v439
    %v550 = vunpack.c.l.b16 %v440
    %v551 = vunpack.c.l.b16 %v441
    %v552 = vunpack.c.h.b16 %v441
    %v553 = vunpack.c.l.b16 %v442
    %v554 = vunpack.c.l.b16 %v443
    %v555 = vunpack.c.h.b16 %v443
    %v556 = vunpack.c.l.b16 %v444
    %v557 = vunpack.c.l.b16 %v445
    %v558 = vunpack.c.h.b16 %v445
    %v559 = vunpack.c.l.b16 %v446
    %v560 = vpack.c.b16 %v515, %v512
    %v561 = vpack.c.b16 %v516, %v513
    %v562 = vpack.c.b16 %v517, %v514
    %v563 = vpack.c.b16 %v521, %v518
    %v564 = vpack.c.b16 %v522, %v519
    %v565 = vpack.c.b16 %v523, %v520
    %v566 = vpack.c.b16 %v527, %v524
    %v567 = vpack.c.b16 %v528, %v525
    %v568 = vpack.c.b16 %v529, %v526
    %v569 = vpack.c.b16 %v533, %v530
    %v570 = vpack.c.b16 %v534, %v531
    %v571 = vpack.c.b16 %v535, %v532
    %v572 = vpack.c.b16 %v539, %v536
    %v573 = vpack.c.b16 %v540, %v537
    %v574 = vpack.c.b16 %v541, %v538
    %v575 = vpack.c.b16 %v545, %v542
    %v576 = vpack.c.b16 %v546, %v543
    %v577 = vpack.c.b16 %v547, %v544
    %v578 = vpack.c.b16 %v551, %v548
    %v579 = vpack.c.b16 %v552, %v549
    %v580 = vpack.c.b16 %v553, %v550
    %v581 = vpack.c.b16 %v557, %v554
    %v582 = vpack.c.b16 %v558, %v555
    %v583 = vpack.c.b16 %v559, %v556
    %608 = vmatpush.bf16.msra.mxu0 %v581
    %609 = vmatpush.bf16.msra.mxu0 %v578
    %610 = vmatpush.bf16.msra.mxu0 %v575
    %611 = vmatpush.bf16.msra.mxu0 %v572
    %612 = vmatpush.bf16.msra.mxu0 %v569
    %613 = vmatpush.bf16.msra.mxu0 %v566
    %614 = vmatpush.bf16.msra.mxu0 %v563
    %615 = vmatpush.bf16.msra.mxu0 %v560
    %616 = vmatmul.bf16.gmra.mxu0 %v472
    %v617 = vpop.f32.mrf.mxu0
    %v618 = vadd.f32 %v450, %v617
    %v619 = vpop.f32.mrf.mxu0
    %v620 = vadd.f32 %v450, %v619
    %621 = vmatmul.bf16.gmra.mxu0 %v473
    %v622 = vpop.f32.mrf.mxu0
    %v623 = vadd.f32 %v450, %v622
    %v624 = vpop.f32.mrf.mxu0
    %v625 = vadd.f32 %v450, %v624
    %626 = vmatmul.bf16.gmra.mxu0 %v474
    %v627 = vpop.f32.mrf.mxu0
    %v628 = vadd.f32 %v450, %v627
    %v629 = vpop.f32.mrf.mxu0
    %v630 = vadd.f32 %v450, %v629
    %631 = vmatmul.bf16.gmra.mxu0 %v475
    %v632 = vpop.f32.mrf.mxu0
    %v633 = vadd.f32 %v450, %v632
    %v634 = vpop.f32.mrf.mxu0
    %v635 = vadd.f32 %v450, %v634
    %636 = vdwg.mxu0
    %637 = vmatpush.bf16.msra.mxu0 %v582
    %638 = vmatpush.bf16.msra.mxu0 %v579
    %639 = vmatpush.bf16.msra.mxu0 %v576
    %640 = vmatpush.bf16.msra.mxu0 %v573
    %641 = vmatpush.bf16.msra.mxu0 %v570
    %642 = vmatpush.bf16.msra.mxu0 %v567
    %643 = vmatpush.bf16.msra.mxu0 %v564
    %644 = vmatpush.bf16.msra.mxu0 %v561
    %645 = vmatmul.bf16.gmra.mxu0 %v472
    %v646 = vpop.f32.mrf.mxu0
    %v647 = vadd.f32 %v451, %v646
    %v648 = vpop.f32.mrf.mxu0
    %v649 = vadd.f32 %v451, %v648
    %650 = vmatmul.bf16.gmra.mxu0 %v473
    %v651 = vpop.f32.mrf.mxu0
    %v652 = vadd.f32 %v451, %v651
    %v653 = vpop.f32.mrf.mxu0
    %v654 = vadd.f32 %v451, %v653
    %655 = vmatmul.bf16.gmra.mxu0 %v474
    %v656 = vpop.f32.mrf.mxu0
    %v657 = vadd.f32 %v451, %v656
    %v658 = vpop.f32.mrf.mxu0
    %v659 = vadd.f32 %v451, %v658
    %660 = vmatmul.bf16.gmra.mxu0 %v475
    %v661 = vpop.f32.mrf.mxu0
    %v662 = vadd.f32 %v451, %v661
    %v663 = vpop.f32.mrf.mxu0
    %v664 = vadd.f32 %v451, %v663
    %665 = vdwg.mxu0
    %666 = vmatpush.bf16.msra.mxu0 %v583
    %667 = vmatpush.bf16.msra.mxu0 %v580
    %668 = vmatpush.bf16.msra.mxu0 %v577
    %669 = vmatpush.bf16.msra.mxu0 %v574
    %670 = vmatpush.bf16.msra.mxu0 %v571
    %671 = vmatpush.bf16.msra.mxu0 %v568
    %672 = vmatpush.bf16.msra.mxu0 %v565
    %673 = vmatpush.bf16.msra.mxu0 %v562
    %674 = vmatmul.bf16.gmra.mxu0 %v472
    %v675 = vpop.f32.mrf.mxu0
    %v676 = vadd.f32 %v452, %v675
    %v677 = vpop.f32.mrf.mxu0
    %v678 = vadd.f32 %v452, %v677
    %679 = vmatmul.bf16.gmra.mxu0 %v473
    %v680 = vpop.f32.mrf.mxu0
    %v681 = vadd.f32 %v452, %v680
    %v682 = vpop.f32.mrf.mxu0
    %v683 = vadd.f32 %v452, %v682
    %684 = vmatmul.bf16.gmra.mxu0 %v474
    %v685 = vpop.f32.mrf.mxu0
    %v686 = vadd.f32 %v452, %v685
    %v687 = vpop.f32.mrf.mxu0
    %v688 = vadd.f32 %v452, %v687
    %689 = vmatmul.bf16.gmra.mxu0 %v475
    %v690 = vpop.f32.mrf.mxu0
    %v691 = vadd.f32 %v452, %v690
    %v692 = vpop.f32.mrf.mxu0
    %v693 = vadd.f32 %v452, %v692
    %694 = vdwg.mxu0
    %s695 = scalar_lea.vmem [#allocation2], 192
    %696 = vst [vmem:[%s695] sm:$0xff] %v618
    %697 = vst [vmem:[%s695 + $0x8] sm:$0xff] %v647
    %698 = vst [vmem:[%s695 + $0x10] sm:$0xff] %v676
    %699 = vst [vmem:[%s695 + $0x18] sm:$0xff] %v620
    %700 = vst [vmem:[%s695 + $0x20] sm:$0xff] %v649
    %701 = vst [vmem:[%s695 + $0x28] sm:$0xff] %v678
    %702 = vst [vmem:[%s695 + $0x30] sm:$0xff] %v623
    %703 = vst [vmem:[%s695 + $0x38] sm:$0xff] %v652
    %704 = vst [vmem:[%s695 + $0x40] sm:$0xff] %v681
    %705 = vst [vmem:[%s695 + $0x48] sm:$0xff] %v625
    %706 = vst [vmem:[%s695 + $0x50] sm:$0xff] %v654
    %707 = vst [vmem:[%s695 + $0x58] sm:$0xff] %v683
    %708 = vst [vmem:[%s695 + $0x60] sm:$0xff] %v628
    %709 = vst [vmem:[%s695 + $0x68] sm:$0xff] %v657
    %710 = vst [vmem:[%s695 + $0x70] sm:$0xff] %v686
    %711 = vst [vmem:[%s695 + $0x78] sm:$0xff] %v630
    %712 = vst [vmem:[%s695 + $0x80] sm:$0xff] %v659
    %713 = vst [vmem:[%s695 + $0x88] sm:$0xff] %v688
    %714 = vst [vmem:[%s695 + $0x90] sm:$0xff] %v633
    %715 = vst [vmem:[%s695 + $0x98] sm:$0xff] %v662
    %716 = vst [vmem:[%s695 + $0xa0] sm:$0xff] %v691
    %717 = vst [vmem:[%s695 + $0xa8] sm:$0xff] %v635
    %718 = vst [vmem:[%s695 + $0xb0] sm:$0xff] %v664
    %719 = vst [vmem:[%s695 + $0xb8] sm:$0xff] %v693
    %s720 = scalar_lea.vmem [#allocation3], 64
    %v721 = vld [vmem:[%s720] sm:$0xf]
    %v722 = vld [vmem:[%s720 + $0x4] sm:$0xf]
    %v723 = vld [vmem:[%s720 + $0x8] sm:$0xf]
    %v724 = vld [vmem:[%s720 + $0xc] sm:$0xf]
    %v725 = vld [vmem:[%s720 + $0x10] sm:$0xf]
    %v726 = vld [vmem:[%s720 + $0x14] sm:$0xf]
    %v727 = vld [vmem:[%s720 + $0x18] sm:$0xf]
    %v728 = vld [vmem:[%s720 + $0x1c] sm:$0xf]
    %s729 = scalar_lea.vmem [#allocation6], 384
    %v730 = vld [vmem:[%s729] sm:$0xff]
    %v731 = vld [vmem:[%s729 + $0x8] sm:$0xf]
    %v732 = vld [vmem:[%s729 + $0xc] sm:$0xff]
    %v733 = vld [vmem:[%s729 + $0x14] sm:$0xf]
    %v734 = vld [vmem:[%s729 + $0x18] sm:$0xff]
    %v735 = vld [vmem:[%s729 + $0x20] sm:$0xf]
    %v736 = vld [vmem:[%s729 + $0x24] sm:$0xff]
    %v737 = vld [vmem:[%s729 + $0x2c] sm:$0xf]
    %v738 = vld [vmem:[%s729 + $0x30] sm:$0xff]
    %v739 = vld [vmem:[%s729 + $0x38] sm:$0xf]
    %v740 = vld [vmem:[%s729 + $0x3c] sm:$0xff]
    %v741 = vld [vmem:[%s729 + $0x44] sm:$0xf]
    %v742 = vld [vmem:[%s729 + $0x48] sm:$0xff]
    %v743 = vld [vmem:[%s729 + $0x50] sm:$0xf]
    %v744 = vld [vmem:[%s729 + $0x54] sm:$0xff]
    %v745 = vld [vmem:[%s729 + $0x5c] sm:$0xf]
    %v746 = vld [vmem:[%s729 + $0x60] sm:$0xff]
    %v747 = vld [vmem:[%s729 + $0x68] sm:$0xf]
    %v748 = vld [vmem:[%s729 + $0x6c] sm:$0xff]
    %v749 = vld [vmem:[%s729 + $0x74] sm:$0xf]
    %v750 = vld [vmem:[%s729 + $0x78] sm:$0xff]
    %v751 = vld [vmem:[%s729 + $0x80] sm:$0xf]
    %v752 = vld [vmem:[%s729 + $0x84] sm:$0xff]
    %v753 = vld [vmem:[%s729 + $0x8c] sm:$0xf]
    %v754 = vld [vmem:[%s729 + $0x90] sm:$0xff]
    %v755 = vld [vmem:[%s729 + $0x98] sm:$0xf]
    %v756 = vld [vmem:[%s729 + $0x9c] sm:$0xff]
    %v757 = vld [vmem:[%s729 + $0xa4] sm:$0xf]
    %v758 = vld [vmem:[%s729 + $0xa8] sm:$0xff]
    %v759 = vld [vmem:[%s729 + $0xb0] sm:$0xf]
    %v760 = vld [vmem:[%s729 + $0xb4] sm:$0xff]
    %v761 = vld [vmem:[%s729 + $0xbc] sm:$0xf]
    %s762 = scalar_lea.vmem %s3, 6
    %v763 = vld [vmem:[%s762] sm:$0x7]
    %v765 = vperm.slane %v763, 0
    %v766 = vperm.slane %v763, 1
    %v767 = vperm.slane %v763, 2
    %v779 = vunpack.c.l.b16 %v721
    %v780 = vunpack.c.l.b16 %v722
    %v781 = vunpack.c.l.b16 %v723
    %v782 = vunpack.c.l.b16 %v724
    %v783 = vunpack.c.l.b16 %v725
    %v784 = vunpack.c.l.b16 %v726
    %v785 = vunpack.c.l.b16 %v727
    %v786 = vunpack.c.l.b16 %v728
    %v787 = vpack.c.b16 %v780, %v779
    %v788 = vpack.c.b16 %v782, %v781
    %v789 = vpack.c.b16 %v784, %v783
    %v790 = vpack.c.b16 %v786, %v785
    %v827 = vunpack.c.l.b16 %v730
    %v828 = vunpack.c.h.b16 %v730
    %v829 = vunpack.c.l.b16 %v731
    %v830 = vunpack.c.l.b16 %v732
    %v831 = vunpack.c.h.b16 %v732
    %v832 = vunpack.c.l.b16 %v733
    %v833 = vunpack.c.l.b16 %v734
    %v834 = vunpack.c.h.b16 %v734
    %v835 = vunpack.c.l.b16 %v735
    %v836 = vunpack.c.l.b16 %v736
    %v837 = vunpack.c.h.b16 %v736
    %v838 = vunpack.c.l.b16 %v737
    %v839 = vunpack.c.l.b16 %v738
    %v840 = vunpack.c.h.b16 %v738
    %v841 = vunpack.c.l.b16 %v739
    %v842 = vunpack.c.l.b16 %v740
    %v843 = vunpack.c.h.b16 %v740
    %v844 = vunpack.c.l.b16 %v741
    %v845 = vunpack.c.l.b16 %v742
    %v846 = vunpack.c.h.b16 %v742
    %v847 = vunpack.c.l.b16 %v743
    %v848 = vunpack.c.l.b16 %v744
    %v849 = vunpack.c.h.b16 %v744
    %v850 = vunpack.c.l.b16 %v745
    %v851 = vunpack.c.l.b16 %v746
    %v852 = vunpack.c.h.b16 %v746
    %v853 = vunpack.c.l.b16 %v747
    %v854 = vunpack.c.l.b16 %v748
    %v855 = vunpack.c.h.b16 %v748
    %v856 = vunpack.c.l.b16 %v749
    %v857 = vunpack.c.l.b16 %v750
    %v858 = vunpack.c.h.b16 %v750
    %v859 = vunpack.c.l.b16 %v751
    %v860 = vunpack.c.l.b16 %v752
    %v861 = vunpack.c.h.b16 %v752
    %v862 = vunpack.c.l.b16 %v753
    %v863 = vunpack.c.l.b16 %v754
    %v864 = vunpack.c.h.b16 %v754
    %v865 = vunpack.c.l.b16 %v755
    %v866 = vunpack.c.l.b16 %v756
    %v867 = vunpack.c.h.b16 %v756
    %v868 = vunpack.c.l.b16 %v757
    %v869 = vunpack.c.l.b16 %v758
    %v870 = vunpack.c.h.b16 %v758
    %v871 = vunpack.c.l.b16 %v759
    %v872 = vunpack.c.l.b16 %v760
    %v873 = vunpack.c.h.b16 %v760
    %v874 = vunpack.c.l.b16 %v761
    %v875 = vpack.c.b16 %v830, %v827
    %v876 = vpack.c.b16 %v831, %v828
    %v877 = vpack.c.b16 %v832, %v829
    %v878 = vpack.c.b16 %v836, %v833
    %v879 = vpack.c.b16 %v837, %v834
    %v880 = vpack.c.b16 %v838, %v835
    %v881 = vpack.c.b16 %v842, %v839
    %v882 = vpack.c.b16 %v843, %v840
    %v883 = vpack.c.b16 %v844, %v841
    %v884 = vpack.c.b16 %v848, %v845
    %v885 = vpack.c.b16 %v849, %v846
    %v886 = vpack.c.b16 %v850, %v847
    %v887 = vpack.c.b16 %v854, %v851
    %v888 = vpack.c.b16 %v855, %v852
    %v889 = vpack.c.b16 %v856, %v853
    %v890 = vpack.c.b16 %v860, %v857
    %v891 = vpack.c.b16 %v861, %v858
    %v892 = vpack.c.b16 %v862, %v859
    %v893 = vpack.c.b16 %v866, %v863
    %v894 = vpack.c.b16 %v867, %v864
    %v895 = vpack.c.b16 %v868, %v865
    %v896 = vpack.c.b16 %v872, %v869
    %v897 = vpack.c.b16 %v873, %v870
    %v898 = vpack.c.b16 %v874, %v871
    %923 = vmatpush.bf16.msra.mxu0 %v896
    %924 = vmatpush.bf16.msra.mxu0 %v893
    %925 = vmatpush.bf16.msra.mxu0 %v890
    %926 = vmatpush.bf16.msra.mxu0 %v887
    %927 = vmatpush.bf16.msra.mxu0 %v884
    %928 = vmatpush.bf16.msra.mxu0 %v881
    %929 = vmatpush.bf16.msra.mxu0 %v878
    %930 = vmatpush.bf16.msra.mxu0 %v875
    %931 = vmatmul.bf16.gmra.mxu0 %v787
    %v932 = vpop.f32.mrf.mxu0
    %v933 = vadd.f32 %v765, %v932
    %v934 = vpop.f32.mrf.mxu0
    %v935 = vadd.f32 %v765, %v934
    %936 = vmatmul.bf16.gmra.mxu0 %v788
    %v937 = vpop.f32.mrf.mxu0
    %v938 = vadd.f32 %v765, %v937
    %v939 = vpop.f32.mrf.mxu0
    %v940 = vadd.f32 %v765, %v939
    %941 = vmatmul.bf16.gmra.mxu0 %v789
    %v942 = vpop.f32.mrf.mxu0
    %v943 = vadd.f32 %v765, %v942
    %v944 = vpop.f32.mrf.mxu0
    %v945 = vadd.f32 %v765, %v944
    %946 = vmatmul.bf16.gmra.mxu0 %v790
    %v947 = vpop.f32.mrf.mxu0
    %v948 = vadd.f32 %v765, %v947
    %v949 = vpop.f32.mrf.mxu0
    %v950 = vadd.f32 %v765, %v949
    %951 = vdwg.mxu0
    %952 = vmatpush.bf16.msra.mxu0 %v897
    %953 = vmatpush.bf16.msra.mxu0 %v894
    %954 = vmatpush.bf16.msra.mxu0 %v891
    %955 = vmatpush.bf16.msra.mxu0 %v888
    %956 = vmatpush.bf16.msra.mxu0 %v885
    %957 = vmatpush.bf16.msra.mxu0 %v882
    %958 = vmatpush.bf16.msra.mxu0 %v879
    %959 = vmatpush.bf16.msra.mxu0 %v876
    %960 = vmatmul.bf16.gmra.mxu0 %v787
    %v961 = vpop.f32.mrf.mxu0
    %v962 = vadd.f32 %v766, %v961
    %v963 = vpop.f32.mrf.mxu0
    %v964 = vadd.f32 %v766, %v963
    %965 = vmatmul.bf16.gmra.mxu0 %v788
    %v966 = vpop.f32.mrf.mxu0
    %v967 = vadd.f32 %v766, %v966
    %v968 = vpop.f32.mrf.mxu0
    %v969 = vadd.f32 %v766, %v968
    %970 = vmatmul.bf16.gmra.mxu0 %v789
    %v971 = vpop.f32.mrf.mxu0
    %v972 = vadd.f32 %v766, %v971
    %v973 = vpop.f32.mrf.mxu0
    %v974 = vadd.f32 %v766, %v973
    %975 = vmatmul.bf16.gmra.mxu0 %v790
    %v976 = vpop.f32.mrf.mxu0
    %v977 = vadd.f32 %v766, %v976
    %v978 = vpop.f32.mrf.mxu0
    %v979 = vadd.f32 %v766, %v978
    %980 = vdwg.mxu0
    %981 = vmatpush.bf16.msra.mxu0 %v898
    %982 = vmatpush.bf16.msra.mxu0 %v895
    %983 = vmatpush.bf16.msra.mxu0 %v892
    %984 = vmatpush.bf16.msra.mxu0 %v889
    %985 = vmatpush.bf16.msra.mxu0 %v886
    %986 = vmatpush.bf16.msra.mxu0 %v883
    %987 = vmatpush.bf16.msra.mxu0 %v880
    %988 = vmatpush.bf16.msra.mxu0 %v877
    %989 = vmatmul.bf16.gmra.mxu0 %v787
    %v990 = vpop.f32.mrf.mxu0
    %v991 = vadd.f32 %v767, %v990
    %v992 = vpop.f32.mrf.mxu0
    %v993 = vadd.f32 %v767, %v992
    %994 = vmatmul.bf16.gmra.mxu0 %v788
    %v995 = vpop.f32.mrf.mxu0
    %v996 = vadd.f32 %v767, %v995
    %v997 = vpop.f32.mrf.mxu0
    %v998 = vadd.f32 %v767, %v997
    %999 = vmatmul.bf16.gmra.mxu0 %v789
    %v1000 = vpop.f32.mrf.mxu0
    %v1001 = vadd.f32 %v767, %v1000
    %v1002 = vpop.f32.mrf.mxu0
    %v1003 = vadd.f32 %v767, %v1002
    %1004 = vmatmul.bf16.gmra.mxu0 %v790
    %v1005 = vpop.f32.mrf.mxu0
    %v1006 = vadd.f32 %v767, %v1005
    %v1007 = vpop.f32.mrf.mxu0
    %v1008 = vadd.f32 %v767, %v1007
    %1009 = vdwg.mxu0
    %s1010 = scalar_lea.vmem [#allocation2], 384
    %1011 = vst [vmem:[%s1010] sm:$0xff] %v933
    %1012 = vst [vmem:[%s1010 + $0x8] sm:$0xff] %v962
    %1013 = vst [vmem:[%s1010 + $0x10] sm:$0xff] %v991
    %1014 = vst [vmem:[%s1010 + $0x18] sm:$0xff] %v935
    %1015 = vst [vmem:[%s1010 + $0x20] sm:$0xff] %v964
    %1016 = vst [vmem:[%s1010 + $0x28] sm:$0xff] %v993
    %1017 = vst [vmem:[%s1010 + $0x30] sm:$0xff] %v938
    %1018 = vst [vmem:[%s1010 + $0x38] sm:$0xff] %v967
    %1019 = vst [vmem:[%s1010 + $0x40] sm:$0xff] %v996
    %1020 = vst [vmem:[%s1010 + $0x48] sm:$0xff] %v940
    %1021 = vst [vmem:[%s1010 + $0x50] sm:$0xff] %v969
    %1022 = vst [vmem:[%s1010 + $0x58] sm:$0xff] %v998
    %1023 = vst [vmem:[%s1010 + $0x60] sm:$0xff] %v943
    %1024 = vst [vmem:[%s1010 + $0x68] sm:$0xff] %v972
    %1025 = vst [vmem:[%s1010 + $0x70] sm:$0xff] %v1001
    %1026 = vst [vmem:[%s1010 + $0x78] sm:$0xff] %v945
    %1027 = vst [vmem:[%s1010 + $0x80] sm:$0xff] %v974
    %1028 = vst [vmem:[%s1010 + $0x88] sm:$0xff] %v1003
    %1029 = vst [vmem:[%s1010 + $0x90] sm:$0xff] %v948
    %1030 = vst [vmem:[%s1010 + $0x98] sm:$0xff] %v977
    %1031 = vst [vmem:[%s1010 + $0xa0] sm:$0xff] %v1006
    %1032 = vst [vmem:[%s1010 + $0xa8] sm:$0xff] %v950
    %1033 = vst [vmem:[%s1010 + $0xb0] sm:$0xff] %v979
    %1034 = vst [vmem:[%s1010 + $0xb8] sm:$0xff] %v1008
    %s1035 = scalar_lea.vmem [#allocation3], 96
    %v1036 = vld [vmem:[%s1035] sm:$0xf]
    %v1037 = vld [vmem:[%s1035 + $0x4] sm:$0xf]
    %v1038 = vld [vmem:[%s1035 + $0x8] sm:$0xf]
    %v1039 = vld [vmem:[%s1035 + $0xc] sm:$0xf]
    %v1040 = vld [vmem:[%s1035 + $0x10] sm:$0xf]
    %v1041 = vld [vmem:[%s1035 + $0x14] sm:$0xf]
    %v1042 = vld [vmem:[%s1035 + $0x18] sm:$0xf]
    %v1043 = vld [vmem:[%s1035 + $0x1c] sm:$0xf]
    %s1044 = scalar_lea.vmem [#allocation6], 576
    %v1045 = vld [vmem:[%s1044] sm:$0xff]
    %v1046 = vld [vmem:[%s1044 + $0x8] sm:$0xf]
    %v1047 = vld [vmem:[%s1044 + $0xc] sm:$0xff]
    %v1048 = vld [vmem:[%s1044 + $0x14] sm:$0xf]
    %v1049 = vld [vmem:[%s1044 + $0x18] sm:$0xff]
    %v1050 = vld [vmem:[%s1044 + $0x20] sm:$0xf]
    %v1051 = vld [vmem:[%s1044 + $0x24] sm:$0xff]
    %v1052 = vld [vmem:[%s1044 + $0x2c] sm:$0xf]
    %v1053 = vld [vmem:[%s1044 + $0x30] sm:$0xff]
    %v1054 = vld [vmem:[%s1044 + $0x38] sm:$0xf]
    %v1055 = vld [vmem:[%s1044 + $0x3c] sm:$0xff]
    %v1056 = vld [vmem:[%s1044 + $0x44] sm:$0xf]
    %v1057 = vld [vmem:[%s1044 + $0x48] sm:$0xff]
    %v1058 = vld [vmem:[%s1044 + $0x50] sm:$0xf]
    %v1059 = vld [vmem:[%s1044 + $0x54] sm:$0xff]
    %v1060 = vld [vmem:[%s1044 + $0x5c] sm:$0xf]
    %v1061 = vld [vmem:[%s1044 + $0x60] sm:$0xff]
    %v1062 = vld [vmem:[%s1044 + $0x68] sm:$0xf]
    %v1063 = vld [vmem:[%s1044 + $0x6c] sm:$0xff]
    %v1064 = vld [vmem:[%s1044 + $0x74] sm:$0xf]
    %v1065 = vld [vmem:[%s1044 + $0x78] sm:$0xff]
    %v1066 = vld [vmem:[%s1044 + $0x80] sm:$0xf]
    %v1067 = vld [vmem:[%s1044 + $0x84] sm:$0xff]
    %v1068 = vld [vmem:[%s1044 + $0x8c] sm:$0xf]
    %v1069 = vld [vmem:[%s1044 + $0x90] sm:$0xff]
    %v1070 = vld [vmem:[%s1044 + $0x98] sm:$0xf]
    %v1071 = vld [vmem:[%s1044 + $0x9c] sm:$0xff]
    %v1072 = vld [vmem:[%s1044 + $0xa4] sm:$0xf]
    %v1073 = vld [vmem:[%s1044 + $0xa8] sm:$0xff]
    %v1074 = vld [vmem:[%s1044 + $0xb0] sm:$0xf]
    %v1075 = vld [vmem:[%s1044 + $0xb4] sm:$0xff]
    %v1076 = vld [vmem:[%s1044 + $0xbc] sm:$0xf]
    %s1077 = scalar_lea.vmem %s3, 9
    %v1078 = vld [vmem:[%s1077] sm:$0x7]
    %v1080 = vperm.slane %v1078, 0
    %v1081 = vperm.slane %v1078, 1
    %v1082 = vperm.slane %v1078, 2
    %v1094 = vunpack.c.l.b16 %v1036
    %v1095 = vunpack.c.l.b16 %v1037
    %v1096 = vunpack.c.l.b16 %v1038
    %v1097 = vunpack.c.l.b16 %v1039
    %v1098 = vunpack.c.l.b16 %v1040
    %v1099 = vunpack.c.l.b16 %v1041
    %v1100 = vunpack.c.l.b16 %v1042
    %v1101 = vunpack.c.l.b16 %v1043
    %v1102 = vpack.c.b16 %v1095, %v1094
    %v1103 = vpack.c.b16 %v1097, %v1096
    %v1104 = vpack.c.b16 %v1099, %v1098
    %v1105 = vpack.c.b16 %v1101, %v1100
    %v1142 = vunpack.c.l.b16 %v1045
    %v1143 = vunpack.c.h.b16 %v1045
    %v1144 = vunpack.c.l.b16 %v1046
    %v1145 = vunpack.c.l.b16 %v1047
    %v1146 = vunpack.c.h.b16 %v1047
    %v1147 = vunpack.c.l.b16 %v1048
    %v1148 = vunpack.c.l.b16 %v1049
    %v1149 = vunpack.c.h.b16 %v1049
    %v1150 = vunpack.c.l.b16 %v1050
    %v1151 = vunpack.c.l.b16 %v1051
    %v1152 = vunpack.c.h.b16 %v1051
    %v1153 = vunpack.c.l.b16 %v1052
    %v1154 = vunpack.c.l.b16 %v1053
    %v1155 = vunpack.c.h.b16 %v1053
    %v1156 = vunpack.c.l.b16 %v1054
    %v1157 = vunpack.c.l.b16 %v1055
    %v1158 = vunpack.c.h.b16 %v1055
    %v1159 = vunpack.c.l.b16 %v1056
    %v1160 = vunpack.c.l.b16 %v1057
    %v1161 = vunpack.c.h.b16 %v1057
    %v1162 = vunpack.c.l.b16 %v1058
    %v1163 = vunpack.c.l.b16 %v1059
    %v1164 = vunpack.c.h.b16 %v1059
    %v1165 = vunpack.c.l.b16 %v1060
    %v1166 = vunpack.c.l.b16 %v1061
    %v1167 = vunpack.c.h.b16 %v1061
    %v1168 = vunpack.c.l.b16 %v1062
    %v1169 = vunpack.c.l.b16 %v1063
    %v1170 = vunpack.c.h.b16 %v1063
    %v1171 = vunpack.c.l.b16 %v1064
    %v1172 = vunpack.c.l.b16 %v1065
    %v1173 = vunpack.c.h.b16 %v1065
    %v1174 = vunpack.c.l.b16 %v1066
    %v1175 = vunpack.c.l.b16 %v1067
    %v1176 = vunpack.c.h.b16 %v1067
    %v1177 = vunpack.c.l.b16 %v1068
    %v1178 = vunpack.c.l.b16 %v1069
    %v1179 = vunpack.c.h.b16 %v1069
    %v1180 = vunpack.c.l.b16 %v1070
    %v1181 = vunpack.c.l.b16 %v1071
    %v1182 = vunpack.c.h.b16 %v1071
    %v1183 = vunpack.c.l.b16 %v1072
    %v1184 = vunpack.c.l.b16 %v1073
    %v1185 = vunpack.c.h.b16 %v1073
    %v1186 = vunpack.c.l.b16 %v1074
    %v1187 = vunpack.c.l.b16 %v1075
    %v1188 = vunpack.c.h.b16 %v1075
    %v1189 = vunpack.c.l.b16 %v1076
    %v1190 = vpack.c.b16 %v1145, %v1142
    %v1191 = vpack.c.b16 %v1146, %v1143
    %v1192 = vpack.c.b16 %v1147, %v1144
    %v1193 = vpack.c.b16 %v1151, %v1148
    %v1194 = vpack.c.b16 %v1152, %v1149
    %v1195 = vpack.c.b16 %v1153, %v1150
    %v1196 = vpack.c.b16 %v1157, %v1154
    %v1197 = vpack.c.b16 %v1158, %v1155
    %v1198 = vpack.c.b16 %v1159, %v1156
    %v1199 = vpack.c.b16 %v1163, %v1160
    %v1200 = vpack.c.b16 %v1164, %v1161
    %v1201 = vpack.c.b16 %v1165, %v1162
    %v1202 = vpack.c.b16 %v1169, %v1166
    %v1203 = vpack.c.b16 %v1170, %v1167
    %v1204 = vpack.c.b16 %v1171, %v1168
    %v1205 = vpack.c.b16 %v1175, %v1172
    %v1206 = vpack.c.b16 %v1176, %v1173
    %v1207 = vpack.c.b16 %v1177, %v1174
    %v1208 = vpack.c.b16 %v1181, %v1178
    %v1209 = vpack.c.b16 %v1182, %v1179
    %v1210 = vpack.c.b16 %v1183, %v1180
    %v1211 = vpack.c.b16 %v1187, %v1184
    %v1212 = vpack.c.b16 %v1188, %v1185
    %v1213 = vpack.c.b16 %v1189, %v1186
    %1238 = vmatpush.bf16.msra.mxu0 %v1211
    %1239 = vmatpush.bf16.msra.mxu0 %v1208
    %1240 = vmatpush.bf16.msra.mxu0 %v1205
    %1241 = vmatpush.bf16.msra.mxu0 %v1202
    %1242 = vmatpush.bf16.msra.mxu0 %v1199
    %1243 = vmatpush.bf16.msra.mxu0 %v1196
    %1244 = vmatpush.bf16.msra.mxu0 %v1193
    %1245 = vmatpush.bf16.msra.mxu0 %v1190
    %1246 = vmatmul.bf16.gmra.mxu0 %v1102
    %v1247 = vpop.f32.mrf.mxu0
    %v1248 = vadd.f32 %v1080, %v1247
    %v1249 = vpop.f32.mrf.mxu0
    %v1250 = vadd.f32 %v1080, %v1249
    %1251 = vmatmul.bf16.gmra.mxu0 %v1103
    %v1252 = vpop.f32.mrf.mxu0
    %v1253 = vadd.f32 %v1080, %v1252
    %v1254 = vpop.f32.mrf.mxu0
    %v1255 = vadd.f32 %v1080, %v1254
    %1256 = vmatmul.bf16.gmra.mxu0 %v1104
    %v1257 = vpop.f32.mrf.mxu0
    %v1258 = vadd.f32 %v1080, %v1257
    %v1259 = vpop.f32.mrf.mxu0
    %v1260 = vadd.f32 %v1080, %v1259
    %1261 = vmatmul.bf16.gmra.mxu0 %v1105
    %v1262 = vpop.f32.mrf.mxu0
    %v1263 = vadd.f32 %v1080, %v1262
    %v1264 = vpop.f32.mrf.mxu0
    %v1265 = vadd.f32 %v1080, %v1264
    %1266 = vdwg.mxu0
    %1267 = vmatpush.bf16.msra.mxu0 %v1212
    %1268 = vmatpush.bf16.msra.mxu0 %v1209
    %1269 = vmatpush.bf16.msra.mxu0 %v1206
    %1270 = vmatpush.bf16.msra.mxu0 %v1203
    %1271 = vmatpush.bf16.msra.mxu0 %v1200
    %1272 = vmatpush.bf16.msra.mxu0 %v1197
    %1273 = vmatpush.bf16.msra.mxu0 %v1194
    %1274 = vmatpush.bf16.msra.mxu0 %v1191
    %1275 = vmatmul.bf16.gmra.mxu0 %v1102
    %v1276 = vpop.f32.mrf.mxu0
    %v1277 = vadd.f32 %v1081, %v1276
    %v1278 = vpop.f32.mrf.mxu0
    %v1279 = vadd.f32 %v1081, %v1278
    %1280 = vmatmul.bf16.gmra.mxu0 %v1103
    %v1281 = vpop.f32.mrf.mxu0
    %v1282 = vadd.f32 %v1081, %v1281
    %v1283 = vpop.f32.mrf.mxu0
    %v1284 = vadd.f32 %v1081, %v1283
    %1285 = vmatmul.bf16.gmra.mxu0 %v1104
    %v1286 = vpop.f32.mrf.mxu0
    %v1287 = vadd.f32 %v1081, %v1286
    %v1288 = vpop.f32.mrf.mxu0
    %v1289 = vadd.f32 %v1081, %v1288
    %1290 = vmatmul.bf16.gmra.mxu0 %v1105
    %v1291 = vpop.f32.mrf.mxu0
    %v1292 = vadd.f32 %v1081, %v1291
    %v1293 = vpop.f32.mrf.mxu0
    %v1294 = vadd.f32 %v1081, %v1293
    %1295 = vdwg.mxu0
    %1296 = vmatpush.bf16.msra.mxu0 %v1213
    %1297 = vmatpush.bf16.msra.mxu0 %v1210
    %1298 = vmatpush.bf16.msra.mxu0 %v1207
    %1299 = vmatpush.bf16.msra.mxu0 %v1204
    %1300 = vmatpush.bf16.msra.mxu0 %v1201
    %1301 = vmatpush.bf16.msra.mxu0 %v1198
    %1302 = vmatpush.bf16.msra.mxu0 %v1195
    %1303 = vmatpush.bf16.msra.mxu0 %v1192
    %1304 = vmatmul.bf16.gmra.mxu0 %v1102
    %v1305 = vpop.f32.mrf.mxu0
    %v1306 = vadd.f32 %v1082, %v1305
    %v1307 = vpop.f32.mrf.mxu0
    %v1308 = vadd.f32 %v1082, %v1307
    %1309 = vmatmul.bf16.gmra.mxu0 %v1103
    %v1310 = vpop.f32.mrf.mxu0
    %v1311 = vadd.f32 %v1082, %v1310
    %v1312 = vpop.f32.mrf.mxu0
    %v1313 = vadd.f32 %v1082, %v1312
    %1314 = vmatmul.bf16.gmra.mxu0 %v1104
    %v1315 = vpop.f32.mrf.mxu0
    %v1316 = vadd.f32 %v1082, %v1315
    %v1317 = vpop.f32.mrf.mxu0
    %v1318 = vadd.f32 %v1082, %v1317
    %1319 = vmatmul.bf16.gmra.mxu0 %v1105
    %v1320 = vpop.f32.mrf.mxu0
    %v1321 = vadd.f32 %v1082, %v1320
    %v1322 = vpop.f32.mrf.mxu0
    %v1323 = vadd.f32 %v1082, %v1322
    %1324 = vdwg.mxu0
    %s1325 = scalar_lea.vmem [#allocation2], 576
    %1326 = vst [vmem:[%s1325] sm:$0xff] %v1248
    %1327 = vst [vmem:[%s1325 + $0x8] sm:$0xff] %v1277
    %1328 = vst [vmem:[%s1325 + $0x10] sm:$0xff] %v1306
    %1329 = vst [vmem:[%s1325 + $0x18] sm:$0xff] %v1250
    %1330 = vst [vmem:[%s1325 + $0x20] sm:$0xff] %v1279
    %1331 = vst [vmem:[%s1325 + $0x28] sm:$0xff] %v1308
    %1332 = vst [vmem:[%s1325 + $0x30] sm:$0xff] %v1253
    %1333 = vst [vmem:[%s1325 + $0x38] sm:$0xff] %v1282
    %1334 = vst [vmem:[%s1325 + $0x40] sm:$0xff] %v1311
    %1335 = vst [vmem:[%s1325 + $0x48] sm:$0xff] %v1255
    %1336 = vst [vmem:[%s1325 + $0x50] sm:$0xff] %v1284
    %1337 = vst [vmem:[%s1325 + $0x58] sm:$0xff] %v1313
    %1338 = vst [vmem:[%s1325 + $0x60] sm:$0xff] %v1258
    %1339 = vst [vmem:[%s1325 + $0x68] sm:$0xff] %v1287
    %1340 = vst [vmem:[%s1325 + $0x70] sm:$0xff] %v1316
    %1341 = vst [vmem:[%s1325 + $0x78] sm:$0xff] %v1260
    %1342 = vst [vmem:[%s1325 + $0x80] sm:$0xff] %v1289
    %1343 = vst [vmem:[%s1325 + $0x88] sm:$0xff] %v1318
    %1344 = vst [vmem:[%s1325 + $0x90] sm:$0xff] %v1263
    %1345 = vst [vmem:[%s1325 + $0x98] sm:$0xff] %v1292
    %1346 = vst [vmem:[%s1325 + $0xa0] sm:$0xff] %v1321
    %1347 = vst [vmem:[%s1325 + $0xa8] sm:$0xff] %v1265
    %1348 = vst [vmem:[%s1325 + $0xb0] sm:$0xff] %v1294
    %1349 = vst [vmem:[%s1325 + $0xb8] sm:$0xff] %v1323
    %v1350 = vld [vmem:[#allocation8] sm:$0xff]
    %v1351 = vld [vmem:[#allocation8 + $0x8] sm:$0xf]
    %v1352 = vld [vmem:[#allocation8 + $0xc] sm:$0xff]
    %v1353 = vld [vmem:[#allocation8 + $0x14] sm:$0xf]
    %v1354 = vld [vmem:[#allocation8 + $0x18] sm:$0xff]
    %v1355 = vld [vmem:[#allocation8 + $0x20] sm:$0xf]
    %v1356 = vld [vmem:[#allocation8 + $0x24] sm:$0xff]
    %v1357 = vld [vmem:[#allocation8 + $0x2c] sm:$0xf]
    %v1358 = vld [vmem:[#allocation8 + $0x30] sm:$0xff]
    %v1359 = vld [vmem:[#allocation8 + $0x38] sm:$0xf]
    %v1360 = vld [vmem:[#allocation8 + $0x3c] sm:$0xff]
    %v1361 = vld [vmem:[#allocation8 + $0x44] sm:$0xf]
    %v1362 = vld [vmem:[#allocation8 + $0x48] sm:$0xff]
    %v1363 = vld [vmem:[#allocation8 + $0x50] sm:$0xf]
    %v1364 = vld [vmem:[#allocation8 + $0x54] sm:$0xff]
    %v1365 = vld [vmem:[#allocation8 + $0x5c] sm:$0xf]
    %v1366 = vld [vmem:[#allocation8 + $0x60] sm:$0xff]
    %v1367 = vld [vmem:[#allocation8 + $0x68] sm:$0xf]
    %v1368 = vld [vmem:[#allocation8 + $0x6c] sm:$0xff]
    %v1369 = vld [vmem:[#allocation8 + $0x74] sm:$0xf]
    %v1370 = vld [vmem:[#allocation8 + $0x78] sm:$0xff]
    %v1371 = vld [vmem:[#allocation8 + $0x80] sm:$0xf]
    %v1372 = vld [vmem:[#allocation8 + $0x84] sm:$0xff]
    %v1373 = vld [vmem:[#allocation8 + $0x8c] sm:$0xf]
    %v1374 = vld [vmem:[#allocation8 + $0x90] sm:$0xff]
    %v1375 = vld [vmem:[#allocation8 + $0x98] sm:$0xf]
    %v1376 = vld [vmem:[#allocation8 + $0x9c] sm:$0xff]
    %v1377 = vld [vmem:[#allocation8 + $0xa4] sm:$0xf]
    %v1378 = vld [vmem:[#allocation8 + $0xa8] sm:$0xff]
    %v1379 = vld [vmem:[#allocation8 + $0xb0] sm:$0xf]
    %v1380 = vld [vmem:[#allocation8 + $0xb4] sm:$0xff]
    %v1381 = vld [vmem:[#allocation8 + $0xbc] sm:$0xf]
    %v1382 = vld [vmem:[#allocation8 + $0xc0] sm:$0xff]
    %v1383 = vld [vmem:[#allocation8 + $0xc8] sm:$0xf]
    %v1384 = vld [vmem:[#allocation8 + $0xcc] sm:$0xff]
    %v1385 = vld [vmem:[#allocation8 + $0xd4] sm:$0xf]
    %v1386 = vld [vmem:[#allocation8 + $0xd8] sm:$0xff]
    %v1387 = vld [vmem:[#allocation8 + $0xe0] sm:$0xf]
    %v1388 = vld [vmem:[#allocation8 + $0xe4] sm:$0xff]
    %v1389 = vld [vmem:[#allocation8 + $0xec] sm:$0xf]
    %v1390 = vld [vmem:[#allocation8 + $0xf0] sm:$0xff]
    %v1391 = vld [vmem:[#allocation8 + $0xf8] sm:$0xf]
    %v1392 = vld [vmem:[#allocation8 + $0xfc] sm:$0xff]
    %v1393 = vld [vmem:[#allocation8 + $0x104] sm:$0xf]
    %v1394 = vld [vmem:[#allocation8 + $0x108] sm:$0xff]
    %v1395 = vld [vmem:[#allocation8 + $0x110] sm:$0xf]
    %v1396 = vld [vmem:[#allocation8 + $0x114] sm:$0xff]
    %v1397 = vld [vmem:[#allocation8 + $0x11c] sm:$0xf]
    %v1398 = vld [vmem:[#allocation8 + $0x120] sm:$0xff]
    %v1399 = vld [vmem:[#allocation8 + $0x128] sm:$0xf]
    %v1400 = vld [vmem:[#allocation8 + $0x12c] sm:$0xff]
    %v1401 = vld [vmem:[#allocation8 + $0x134] sm:$0xf]
    %v1402 = vld [vmem:[#allocation8 + $0x138] sm:$0xff]
    %v1403 = vld [vmem:[#allocation8 + $0x140] sm:$0xf]
    %v1404 = vld [vmem:[#allocation8 + $0x144] sm:$0xff]
    %v1405 = vld [vmem:[#allocation8 + $0x14c] sm:$0xf]
    %v1406 = vld [vmem:[#allocation8 + $0x150] sm:$0xff]
    %v1407 = vld [vmem:[#allocation8 + $0x158] sm:$0xf]
    %v1408 = vld [vmem:[#allocation8 + $0x15c] sm:$0xff]
    %v1409 = vld [vmem:[#allocation8 + $0x164] sm:$0xf]
    %v1410 = vld [vmem:[#allocation8 + $0x168] sm:$0xff]
    %v1411 = vld [vmem:[#allocation8 + $0x170] sm:$0xf]
    %v1412 = vld [vmem:[#allocation8 + $0x174] sm:$0xff]
    %v1413 = vld [vmem:[#allocation8 + $0x17c] sm:$0xf]
    %v1414 = vld [vmem:[#allocation8 + $0x180] sm:$0xff]
    %v1415 = vld [vmem:[#allocation8 + $0x188] sm:$0xf]
    %v1416 = vld [vmem:[#allocation8 + $0x18c] sm:$0xff]
    %v1417 = vld [vmem:[#allocation8 + $0x194] sm:$0xf]
    %v1418 = vld [vmem:[#allocation8 + $0x198] sm:$0xff]
    %v1419 = vld [vmem:[#allocation8 + $0x1a0] sm:$0xf]
    %v1420 = vld [vmem:[#allocation8 + $0x1a4] sm:$0xff]
    %v1421 = vld [vmem:[#allocation8 + $0x1ac] sm:$0xf]
    %v1422 = vld [vmem:[#allocation8 + $0x1b0] sm:$0xff]
    %v1423 = vld [vmem:[#allocation8 + $0x1b8] sm:$0xf]
    %v1424 = vld [vmem:[#allocation8 + $0x1bc] sm:$0xff]
    %v1425 = vld [vmem:[#allocation8 + $0x1c4] sm:$0xf]
    %v1426 = vld [vmem:[#allocation8 + $0x1c8] sm:$0xff]
    %v1427 = vld [vmem:[#allocation8 + $0x1d0] sm:$0xf]
    %v1428 = vld [vmem:[#allocation8 + $0x1d4] sm:$0xff]
    %v1429 = vld [vmem:[#allocation8 + $0x1dc] sm:$0xf]
    %v1430 = vld [vmem:[#allocation8 + $0x1e0] sm:$0xff]
    %v1431 = vld [vmem:[#allocation8 + $0x1e8] sm:$0xf]
    %v1432 = vld [vmem:[#allocation8 + $0x1ec] sm:$0xff]
    %v1433 = vld [vmem:[#allocation8 + $0x1f4] sm:$0xf]
    %v1434 = vld [vmem:[#allocation8 + $0x1f8] sm:$0xff]
    %v1435 = vld [vmem:[#allocation8 + $0x200] sm:$0xf]
    %v1436 = vld [vmem:[#allocation8 + $0x204] sm:$0xff]
    %v1437 = vld [vmem:[#allocation8 + $0x20c] sm:$0xf]
    %v1438 = vld [vmem:[#allocation8 + $0x210] sm:$0xff]
    %v1439 = vld [vmem:[#allocation8 + $0x218] sm:$0xf]
    %v1440 = vld [vmem:[#allocation8 + $0x21c] sm:$0xff]
    %v1441 = vld [vmem:[#allocation8 + $0x224] sm:$0xf]
    %v1442 = vld [vmem:[#allocation8 + $0x228] sm:$0xff]
    %v1443 = vld [vmem:[#allocation8 + $0x230] sm:$0xf]
    %v1444 = vld [vmem:[#allocation8 + $0x234] sm:$0xff]
    %v1445 = vld [vmem:[#allocation8 + $0x23c] sm:$0xf]
    %v1446 = vld [vmem:[#allocation8 + $0x240] sm:$0xff]
    %v1447 = vld [vmem:[#allocation8 + $0x248] sm:$0xf]
    %v1448 = vld [vmem:[#allocation8 + $0x24c] sm:$0xff]
    %v1449 = vld [vmem:[#allocation8 + $0x254] sm:$0xf]
    %v1450 = vld [vmem:[#allocation8 + $0x258] sm:$0xff]
    %v1451 = vld [vmem:[#allocation8 + $0x260] sm:$0xf]
    %v1452 = vld [vmem:[#allocation8 + $0x264] sm:$0xff]
    %v1453 = vld [vmem:[#allocation8 + $0x26c] sm:$0xf]
    %v1454 = vld [vmem:[#allocation8 + $0x270] sm:$0xff]
    %v1455 = vld [vmem:[#allocation8 + $0x278] sm:$0xf]
    %v1456 = vld [vmem:[#allocation8 + $0x27c] sm:$0xff]
    %v1457 = vld [vmem:[#allocation8 + $0x284] sm:$0xf]
    %v1458 = vld [vmem:[#allocation8 + $0x288] sm:$0xff]
    %v1459 = vld [vmem:[#allocation8 + $0x290] sm:$0xf]
    %v1460 = vld [vmem:[#allocation8 + $0x294] sm:$0xff]
    %v1461 = vld [vmem:[#allocation8 + $0x29c] sm:$0xf]
    %v1462 = vld [vmem:[#allocation8 + $0x2a0] sm:$0xff]
    %v1463 = vld [vmem:[#allocation8 + $0x2a8] sm:$0xf]
    %v1464 = vld [vmem:[#allocation8 + $0x2ac] sm:$0xff]
    %v1465 = vld [vmem:[#allocation8 + $0x2b4] sm:$0xf]
    %v1466 = vld [vmem:[#allocation8 + $0x2b8] sm:$0xff]
    %v1467 = vld [vmem:[#allocation8 + $0x2c0] sm:$0xf]
    %v1468 = vld [vmem:[#allocation8 + $0x2c4] sm:$0xff]
    %v1469 = vld [vmem:[#allocation8 + $0x2cc] sm:$0xf]
    %v1470 = vld [vmem:[#allocation8 + $0x2d0] sm:$0xff]
    %v1471 = vld [vmem:[#allocation8 + $0x2d8] sm:$0xf]
    %v1472 = vld [vmem:[#allocation8 + $0x2dc] sm:$0xff]
    %v1473 = vld [vmem:[#allocation8 + $0x2e4] sm:$0xf]
    %v1474 = vld [vmem:[#allocation8 + $0x2e8] sm:$0xff]
    %v1475 = vld [vmem:[#allocation8 + $0x2f0] sm:$0xf]
    %v1476 = vld [vmem:[#allocation8 + $0x2f4] sm:$0xff]
    %v1477 = vld [vmem:[#allocation8 + $0x2fc] sm:$0xf]
    %v1478 = vld [vmem:[%s0] sm:$0xff]
    %v1479 = vld [vmem:[%s0 + $0x8] sm:$0xff]
    %v1480 = vld [vmem:[%s0 + $0x10] sm:$0xff]
    %v1481 = vld [vmem:[%s0 + $0x18] sm:$0xff]
    %v1482 = vld [vmem:[%s5] sm:$0x1]
    %v1483 = vld [vmem:[%s5 + $0x1] sm:$0x1]
    %v1484 = vld [vmem:[%s5 + $0x2] sm:$0x1]
    %v1485 = vld [vmem:[%s5 + $0x3] sm:$0x1]
    %v1490 = vperm.slane %v1482, 0
    %v1491 = vperm.slane %v1483, 0
    %v1492 = vperm.slane %v1484, 0
    %v1493 = vperm.slane %v1485, 0
    %s1498 = smul.u32 0, 3
    %s1499 = smul.addr %s1498, 8
    %s1500 = scalar_lea.vmem [#allocation2], %s1499
    %v1501 = vld [vmem:[%s1500] sm:$0xff]
    %v1502 = vld [vmem:[%s1500 + $0x8] sm:$0xff]
    %v1503 = vld [vmem:[%s1500 + $0x10] sm:$0xff]
    %v1504 = vld [vmem:[%s1500 + $0xc0] sm:$0xff]
    %v1505 = vld [vmem:[%s1500 + $0xc8] sm:$0xff]
    %v1506 = vld [vmem:[%s1500 + $0xd0] sm:$0xff]
    %v1507 = vld [vmem:[%s1500 + $0x180] sm:$0xff]
    %v1508 = vld [vmem:[%s1500 + $0x188] sm:$0xff]
    %v1509 = vld [vmem:[%s1500 + $0x190] sm:$0xff]
    %v1510 = vld [vmem:[%s1500 + $0x240] sm:$0xff]
    %v1511 = vld [vmem:[%s1500 + $0x248] sm:$0xff]
    %v1512 = vld [vmem:[%s1500 + $0x250] sm:$0xff]
    %v1545 = vunpack.c.l.b16 %v1350
    %v1546 = vunpack.c.h.b16 %v1350
    %v1547 = vunpack.c.l.b16 %v1351
    %v1548 = vunpack.c.l.b16 %v1352
    %v1549 = vunpack.c.h.b16 %v1352
    %v1550 = vunpack.c.l.b16 %v1353
    %v1551 = vunpack.c.l.b16 %v1354
    %v1552 = vunpack.c.h.b16 %v1354
    %v1553 = vunpack.c.l.b16 %v1355
    %v1554 = vunpack.c.l.b16 %v1356
    %v1555 = vunpack.c.h.b16 %v1356
    %v1556 = vunpack.c.l.b16 %v1357
    %v1557 = vunpack.c.l.b16 %v1358
    %v1558 = vunpack.c.h.b16 %v1358
    %v1559 = vunpack.c.l.b16 %v1359
    %v1560 = vunpack.c.l.b16 %v1360
    %v1561 = vunpack.c.h.b16 %v1360
    %v1562 = vunpack.c.l.b16 %v1361
    %v1563 = vunpack.c.l.b16 %v1362
    %v1564 = vunpack.c.h.b16 %v1362
    %v1565 = vunpack.c.l.b16 %v1363
    %v1566 = vunpack.c.l.b16 %v1364
    %v1567 = vunpack.c.h.b16 %v1364
    %v1568 = vunpack.c.l.b16 %v1365
    %v1569 = vunpack.c.l.b16 %v1366
    %v1570 = vunpack.c.h.b16 %v1366
    %v1571 = vunpack.c.l.b16 %v1367
    %v1572 = vunpack.c.l.b16 %v1368
    %v1573 = vunpack.c.h.b16 %v1368
    %v1574 = vunpack.c.l.b16 %v1369
    %v1575 = vunpack.c.l.b16 %v1370
    %v1576 = vunpack.c.h.b16 %v1370
    %v1577 = vunpack.c.l.b16 %v1371
    %v1578 = vunpack.c.l.b16 %v1372
    %v1579 = vunpack.c.h.b16 %v1372
    %v1580 = vunpack.c.l.b16 %v1373
    %v1581 = vunpack.c.l.b16 %v1374
    %v1582 = vunpack.c.h.b16 %v1374
    %v1583 = vunpack.c.l.b16 %v1375
    %v1584 = vunpack.c.l.b16 %v1376
    %v1585 = vunpack.c.h.b16 %v1376
    %v1586 = vunpack.c.l.b16 %v1377
    %v1587 = vunpack.c.l.b16 %v1378
    %v1588 = vunpack.c.h.b16 %v1378
    %v1589 = vunpack.c.l.b16 %v1379
    %v1590 = vunpack.c.l.b16 %v1380
    %v1591 = vunpack.c.h.b16 %v1380
    %v1592 = vunpack.c.l.b16 %v1381
    %v1593 = vpack.c.b16 %v1548, %v1545
    %v1594 = vpack.c.b16 %v1549, %v1546
    %v1595 = vpack.c.b16 %v1550, %v1547
    %v1596 = vpack.c.b16 %v1554, %v1551
    %v1597 = vpack.c.b16 %v1555, %v1552
    %v1598 = vpack.c.b16 %v1556, %v1553
    %v1599 = vpack.c.b16 %v1560, %v1557
    %v1600 = vpack.c.b16 %v1561, %v1558
    %v1601 = vpack.c.b16 %v1562, %v1559
    %v1602 = vpack.c.b16 %v1566, %v1563
    %v1603 = vpack.c.b16 %v1567, %v1564
    %v1604 = vpack.c.b16 %v1568, %v1565
    %v1605 = vpack.c.b16 %v1572, %v1569
    %v1606 = vpack.c.b16 %v1573, %v1570
    %v1607 = vpack.c.b16 %v1574, %v1571
    %v1608 = vpack.c.b16 %v1578, %v1575
    %v1609 = vpack.c.b16 %v1579, %v1576
    %v1610 = vpack.c.b16 %v1580, %v1577
    %v1611 = vpack.c.b16 %v1584, %v1581
    %v1612 = vpack.c.b16 %v1585, %v1582
    %v1613 = vpack.c.b16 %v1586, %v1583
    %v1614 = vpack.c.b16 %v1590, %v1587
    %v1615 = vpack.c.b16 %v1591, %v1588
    %v1616 = vpack.c.b16 %v1592, %v1589
    %1641 = vmatpush.bf16.msra.mxu0 %v1614
    %1642 = vmatpush.bf16.msra.mxu0 %v1611
    %1643 = vmatpush.bf16.msra.mxu0 %v1608
    %1644 = vmatpush.bf16.msra.mxu0 %v1605
    %1645 = vmatpush.bf16.msra.mxu0 %v1602
    %1646 = vmatpush.bf16.msra.mxu0 %v1599
    %1647 = vmatpush.bf16.msra.mxu0 %v1596
    %1648 = vmatpush.bf16.msra.mxu0 %v1593
    %1649 = vmatmul.bf16.gmra.mxu0 0
    %v1650 = vpop.f32.mrf.mxu0
    %v1651 = vadd.f32 0.0, %v1650
    %v1652 = vpop.f32.mrf.mxu0
    %1653 = vdwg.mxu0
    %1654 = vmatpush.bf16.msra.mxu0 %v1615
    %1655 = vmatpush.bf16.msra.mxu0 %v1612
    %1656 = vmatpush.bf16.msra.mxu0 %v1609
    %1657 = vmatpush.bf16.msra.mxu0 %v1606
    %1658 = vmatpush.bf16.msra.mxu0 %v1603
    %1659 = vmatpush.bf16.msra.mxu0 %v1600
    %1660 = vmatpush.bf16.msra.mxu0 %v1597
    %1661 = vmatpush.bf16.msra.mxu0 %v1594
    %1662 = vmatmul.bf16.gmra.mxu0 0
    %v1663 = vpop.f32.mrf.mxu0
    %v1664 = vadd.f32 0.0, %v1663
    %v1665 = vpop.f32.mrf.mxu0
    %1666 = vdwg.mxu0
    %1667 = vmatpush.bf16.msra.mxu0 %v1616
    %1668 = vmatpush.bf16.msra.mxu0 %v1613
    %1669 = vmatpush.bf16.msra.mxu0 %v1610
    %1670 = vmatpush.bf16.msra.mxu0 %v1607
    %1671 = vmatpush.bf16.msra.mxu0 %v1604
    %1672 = vmatpush.bf16.msra.mxu0 %v1601
    %1673 = vmatpush.bf16.msra.mxu0 %v1598
    %1674 = vmatpush.bf16.msra.mxu0 %v1595
    %1675 = vmatmul.bf16.gmra.mxu0 0
    %v1676 = vpop.f32.mrf.mxu0
    %v1677 = vadd.f32 0.0, %v1676
    %v1678 = vpop.f32.mrf.mxu0
    %1679 = vdwg.mxu0
    %v1712 = vunpack.c.l.b16 %v1382
    %v1713 = vunpack.c.h.b16 %v1382
    %v1714 = vunpack.c.l.b16 %v1383
    %v1715 = vunpack.c.l.b16 %v1384
    %v1716 = vunpack.c.h.b16 %v1384
    %v1717 = vunpack.c.l.b16 %v1385
    %v1718 = vunpack.c.l.b16 %v1386
    %v1719 = vunpack.c.h.b16 %v1386
    %v1720 = vunpack.c.l.b16 %v1387
    %v1721 = vunpack.c.l.b16 %v1388
    %v1722 = vunpack.c.h.b16 %v1388
    %v1723 = vunpack.c.l.b16 %v1389
    %v1724 = vunpack.c.l.b16 %v1390
    %v1725 = vunpack.c.h.b16 %v1390
    %v1726 = vunpack.c.l.b16 %v1391
    %v1727 = vunpack.c.l.b16 %v1392
    %v1728 = vunpack.c.h.b16 %v1392
    %v1729 = vunpack.c.l.b16 %v1393
    %v1730 = vunpack.c.l.b16 %v1394
    %v1731 = vunpack.c.h.b16 %v1394
    %v1732 = vunpack.c.l.b16 %v1395
    %v1733 = vunpack.c.l.b16 %v1396
    %v1734 = vunpack.c.h.b16 %v1396
    %v1735 = vunpack.c.l.b16 %v1397
    %v1736 = vunpack.c.l.b16 %v1398
    %v1737 = vunpack.c.h.b16 %v1398
    %v1738 = vunpack.c.l.b16 %v1399
    %v1739 = vunpack.c.l.b16 %v1400
    %v1740 = vunpack.c.h.b16 %v1400
    %v1741 = vunpack.c.l.b16 %v1401
    %v1742 = vunpack.c.l.b16 %v1402
    %v1743 = vunpack.c.h.b16 %v1402
    %v1744 = vunpack.c.l.b16 %v1403
    %v1745 = vunpack.c.l.b16 %v1404
    %v1746 = vunpack.c.h.b16 %v1404
    %v1747 = vunpack.c.l.b16 %v1405
    %v1748 = vunpack.c.l.b16 %v1406
    %v1749 = vunpack.c.h.b16 %v1406
    %v1750 = vunpack.c.l.b16 %v1407
    %v1751 = vunpack.c.l.b16 %v1408
    %v1752 = vunpack.c.h.b16 %v1408
    %v1753 = vunpack.c.l.b16 %v1409
    %v1754 = vunpack.c.l.b16 %v1410
    %v1755 = vunpack.c.h.b16 %v1410
    %v1756 = vunpack.c.l.b16 %v1411
    %v1757 = vunpack.c.l.b16 %v1412
    %v1758 = vunpack.c.h.b16 %v1412
    %v1759 = vunpack.c.l.b16 %v1413
    %v1760 = vpack.c.b16 %v1715, %v1712
    %v1761 = vpack.c.b16 %v1716, %v1713
    %v1762 = vpack.c.b16 %v1717, %v1714
    %v1763 = vpack.c.b16 %v1721, %v1718
    %v1764 = vpack.c.b16 %v1722, %v1719
    %v1765 = vpack.c.b16 %v1723, %v1720
    %v1766 = vpack.c.b16 %v1727, %v1724
    %v1767 = vpack.c.b16 %v1728, %v1725
    %v1768 = vpack.c.b16 %v1729, %v1726
    %v1769 = vpack.c.b16 %v1733, %v1730
    %v1770 = vpack.c.b16 %v1734, %v1731
    %v1771 = vpack.c.b16 %v1735, %v1732
    %v1772 = vpack.c.b16 %v1739, %v1736
    %v1773 = vpack.c.b16 %v1740, %v1737
    %v1774 = vpack.c.b16 %v1741, %v1738
    %v1775 = vpack.c.b16 %v1745, %v1742
    %v1776 = vpack.c.b16 %v1746, %v1743
    %v1777 = vpack.c.b16 %v1747, %v1744
    %v1778 = vpack.c.b16 %v1751, %v1748
    %v1779 = vpack.c.b16 %v1752, %v1749
    %v1780 = vpack.c.b16 %v1753, %v1750
    %v1781 = vpack.c.b16 %v1757, %v1754
    %v1782 = vpack.c.b16 %v1758, %v1755
    %v1783 = vpack.c.b16 %v1759, %v1756
    %1808 = vmatpush.bf16.msra.mxu0 %v1781
    %1809 = vmatpush.bf16.msra.mxu0 %v1778
    %1810 = vmatpush.bf16.msra.mxu0 %v1775
    %1811 = vmatpush.bf16.msra.mxu0 %v1772
    %1812 = vmatpush.bf16.msra.mxu0 %v1769
    %1813 = vmatpush.bf16.msra.mxu0 %v1766
    %1814 = vmatpush.bf16.msra.mxu0 %v1763
    %1815 = vmatpush.bf16.msra.mxu0 %v1760
    %1816 = vmatmul.bf16.gmra.mxu0 0
    %v1817 = vpop.f32.mrf.mxu0
    %v1818 = vadd.f32 0.0, %v1817
    %v1819 = vpop.f32.mrf.mxu0
    %1820 = vdwg.mxu0
    %1821 = vmatpush.bf16.msra.mxu0 %v1782
    %1822 = vmatpush.bf16.msra.mxu0 %v1779
    %1823 = vmatpush.bf16.msra.mxu0 %v1776
    %1824 = vmatpush.bf16.msra.mxu0 %v1773
    %1825 = vmatpush.bf16.msra.mxu0 %v1770
    %1826 = vmatpush.bf16.msra.mxu0 %v1767
    %1827 = vmatpush.bf16.msra.mxu0 %v1764
    %1828 = vmatpush.bf16.msra.mxu0 %v1761
    %1829 = vmatmul.bf16.gmra.mxu0 0
    %v1830 = vpop.f32.mrf.mxu0
    %v1831 = vadd.f32 0.0, %v1830
    %v1832 = vpop.f32.mrf.mxu0
    %1833 = vdwg.mxu0
    %1834 = vmatpush.bf16.msra.mxu0 %v1783
    %1835 = vmatpush.bf16.msra.mxu0 %v1780
    %1836 = vmatpush.bf16.msra.mxu0 %v1777
    %1837 = vmatpush.bf16.msra.mxu0 %v1774
    %1838 = vmatpush.bf16.msra.mxu0 %v1771
    %1839 = vmatpush.bf16.msra.mxu0 %v1768
    %1840 = vmatpush.bf16.msra.mxu0 %v1765
    %1841 = vmatpush.bf16.msra.mxu0 %v1762
    %1842 = vmatmul.bf16.gmra.mxu0 0
    %v1843 = vpop.f32.mrf.mxu0
    %v1844 = vadd.f32 0.0, %v1843
    %v1845 = vpop.f32.mrf.mxu0
    %1846 = vdwg.mxu0
    %v1879 = vunpack.c.l.b16 %v1414
    %v1880 = vunpack.c.h.b16 %v1414
    %v1881 = vunpack.c.l.b16 %v1415
    %v1882 = vunpack.c.l.b16 %v1416
    %v1883 = vunpack.c.h.b16 %v1416
    %v1884 = vunpack.c.l.b16 %v1417
    %v1885 = vunpack.c.l.b16 %v1418
    %v1886 = vunpack.c.h.b16 %v1418
    %v1887 = vunpack.c.l.b16 %v1419
    %v1888 = vunpack.c.l.b16 %v1420
    %v1889 = vunpack.c.h.b16 %v1420
    %v1890 = vunpack.c.l.b16 %v1421
    %v1891 = vunpack.c.l.b16 %v1422
    %v1892 = vunpack.c.h.b16 %v1422
    %v1893 = vunpack.c.l.b16 %v1423
    %v1894 = vunpack.c.l.b16 %v1424
    %v1895 = vunpack.c.h.b16 %v1424
    %v1896 = vunpack.c.l.b16 %v1425
    %v1897 = vunpack.c.l.b16 %v1426
    %v1898 = vunpack.c.h.b16 %v1426
    %v1899 = vunpack.c.l.b16 %v1427
    %v1900 = vunpack.c.l.b16 %v1428
    %v1901 = vunpack.c.h.b16 %v1428
    %v1902 = vunpack.c.l.b16 %v1429
    %v1903 = vunpack.c.l.b16 %v1430
    %v1904 = vunpack.c.h.b16 %v1430
    %v1905 = vunpack.c.l.b16 %v1431
    %v1906 = vunpack.c.l.b16 %v1432
    %v1907 = vunpack.c.h.b16 %v1432
    %v1908 = vunpack.c.l.b16 %v1433
    %v1909 = vunpack.c.l.b16 %v1434
    %v1910 = vunpack.c.h.b16 %v1434
    %v1911 = vunpack.c.l.b16 %v1435
    %v1912 = vunpack.c.l.b16 %v1436
    %v1913 = vunpack.c.h.b16 %v1436
    %v1914 = vunpack.c.l.b16 %v1437
    %v1915 = vunpack.c.l.b16 %v1438
    %v1916 = vunpack.c.h.b16 %v1438
    %v1917 = vunpack.c.l.b16 %v1439
    %v1918 = vunpack.c.l.b16 %v1440
    %v1919 = vunpack.c.h.b16 %v1440
    %v1920 = vunpack.c.l.b16 %v1441
    %v1921 = vunpack.c.l.b16 %v1442
    %v1922 = vunpack.c.h.b16 %v1442
    %v1923 = vunpack.c.l.b16 %v1443
    %v1924 = vunpack.c.l.b16 %v1444
    %v1925 = vunpack.c.h.b16 %v1444
    %v1926 = vunpack.c.l.b16 %v1445
    %v1927 = vpack.c.b16 %v1882, %v1879
    %v1928 = vpack.c.b16 %v1883, %v1880
    %v1929 = vpack.c.b16 %v1884, %v1881
    %v1930 = vpack.c.b16 %v1888, %v1885
    %v1931 = vpack.c.b16 %v1889, %v1886
    %v1932 = vpack.c.b16 %v1890, %v1887
    %v1933 = vpack.c.b16 %v1894, %v1891
    %v1934 = vpack.c.b16 %v1895, %v1892
    %v1935 = vpack.c.b16 %v1896, %v1893
    %v1936 = vpack.c.b16 %v1900, %v1897
    %v1937 = vpack.c.b16 %v1901, %v1898
    %v1938 = vpack.c.b16 %v1902, %v1899
    %v1939 = vpack.c.b16 %v1906, %v1903
    %v1940 = vpack.c.b16 %v1907, %v1904
    %v1941 = vpack.c.b16 %v1908, %v1905
    %v1942 = vpack.c.b16 %v1912, %v1909
    %v1943 = vpack.c.b16 %v1913, %v1910
    %v1944 = vpack.c.b16 %v1914, %v1911
    %v1945 = vpack.c.b16 %v1918, %v1915
    %v1946 = vpack.c.b16 %v1919, %v1916
    %v1947 = vpack.c.b16 %v1920, %v1917
    %v1948 = vpack.c.b16 %v1924, %v1921
    %v1949 = vpack.c.b16 %v1925, %v1922
    %v1950 = vpack.c.b16 %v1926, %v1923
    %1975 = vmatpush.bf16.msra.mxu0 %v1948
    %1976 = vmatpush.bf16.msra.mxu0 %v1945
    %1977 = vmatpush.bf16.msra.mxu0 %v1942
    %1978 = vmatpush.bf16.msra.mxu0 %v1939
    %1979 = vmatpush.bf16.msra.mxu0 %v1936
    %1980 = vmatpush.bf16.msra.mxu0 %v1933
    %1981 = vmatpush.bf16.msra.mxu0 %v1930
    %1982 = vmatpush.bf16.msra.mxu0 %v1927
    %1983 = vmatmul.bf16.gmra.mxu0 0
    %v1984 = vpop.f32.mrf.mxu0
    %v1985 = vadd.f32 0.0, %v1984
    %v1986 = vpop.f32.mrf.mxu0
    %1987 = vdwg.mxu0
    %1988 = vmatpush.bf16.msra.mxu0 %v1949
    %1989 = vmatpush.bf16.msra.mxu0 %v1946
    %1990 = vmatpush.bf16.msra.mxu0 %v1943
    %1991 = vmatpush.bf16.msra.mxu0 %v1940
    %1992 = vmatpush.bf16.msra.mxu0 %v1937
    %1993 = vmatpush.bf16.msra.mxu0 %v1934
    %1994 = vmatpush.bf16.msra.mxu0 %v1931
    %1995 = vmatpush.bf16.msra.mxu0 %v1928
    %1996 = vmatmul.bf16.gmra.mxu0 0
    %v1997 = vpop.f32.mrf.mxu0
    %v1998 = vadd.f32 0.0, %v1997
    %v1999 = vpop.f32.mrf.mxu0
    %2000 = vdwg.mxu0
    %2001 = vmatpush.bf16.msra.mxu0 %v1950
    %2002 = vmatpush.bf16.msra.mxu0 %v1947
    %2003 = vmatpush.bf16.msra.mxu0 %v1944
    %2004 = vmatpush.bf16.msra.mxu0 %v1941
    %2005 = vmatpush.bf16.msra.mxu0 %v1938
    %2006 = vmatpush.bf16.msra.mxu0 %v1935
    %2007 = vmatpush.bf16.msra.mxu0 %v1932
    %2008 = vmatpush.bf16.msra.mxu0 %v1929
    %2009 = vmatmul.bf16.gmra.mxu0 0
    %v2010 = vpop.f32.mrf.mxu0
    %v2011 = vadd.f32 0.0, %v2010
    %v2012 = vpop.f32.mrf.mxu0
    %2013 = vdwg.mxu0
    %v2046 = vunpack.c.l.b16 %v1446
    %v2047 = vunpack.c.h.b16 %v1446
    %v2048 = vunpack.c.l.b16 %v1447
    %v2049 = vunpack.c.l.b16 %v1448
    %v2050 = vunpack.c.h.b16 %v1448
    %v2051 = vunpack.c.l.b16 %v1449
    %v2052 = vunpack.c.l.b16 %v1450
    %v2053 = vunpack.c.h.b16 %v1450
    %v2054 = vunpack.c.l.b16 %v1451
    %v2055 = vunpack.c.l.b16 %v1452
    %v2056 = vunpack.c.h.b16 %v1452
    %v2057 = vunpack.c.l.b16 %v1453
    %v2058 = vunpack.c.l.b16 %v1454
    %v2059 = vunpack.c.h.b16 %v1454
    %v2060 = vunpack.c.l.b16 %v1455
    %v2061 = vunpack.c.l.b16 %v1456
    %v2062 = vunpack.c.h.b16 %v1456
    %v2063 = vunpack.c.l.b16 %v1457
    %v2064 = vunpack.c.l.b16 %v1458
    %v2065 = vunpack.c.h.b16 %v1458
    %v2066 = vunpack.c.l.b16 %v1459
    %v2067 = vunpack.c.l.b16 %v1460
    %v2068 = vunpack.c.h.b16 %v1460
    %v2069 = vunpack.c.l.b16 %v1461
    %v2070 = vunpack.c.l.b16 %v1462
    %v2071 = vunpack.c.h.b16 %v1462
    %v2072 = vunpack.c.l.b16 %v1463
    %v2073 = vunpack.c.l.b16 %v1464
    %v2074 = vunpack.c.h.b16 %v1464
    %v2075 = vunpack.c.l.b16 %v1465
    %v2076 = vunpack.c.l.b16 %v1466
    %v2077 = vunpack.c.h.b16 %v1466
    %v2078 = vunpack.c.l.b16 %v1467
    %v2079 = vunpack.c.l.b16 %v1468
    %v2080 = vunpack.c.h.b16 %v1468
    %v2081 = vunpack.c.l.b16 %v1469
    %v2082 = vunpack.c.l.b16 %v1470
    %v2083 = vunpack.c.h.b16 %v1470
    %v2084 = vunpack.c.l.b16 %v1471
    %v2085 = vunpack.c.l.b16 %v1472
    %v2086 = vunpack.c.h.b16 %v1472
    %v2087 = vunpack.c.l.b16 %v1473
    %v2088 = vunpack.c.l.b16 %v1474
    %v2089 = vunpack.c.h.b16 %v1474
    %v2090 = vunpack.c.l.b16 %v1475
    %v2091 = vunpack.c.l.b16 %v1476
    %v2092 = vunpack.c.h.b16 %v1476
    %v2093 = vunpack.c.l.b16 %v1477
    %v2094 = vpack.c.b16 %v2049, %v2046
    %v2095 = vpack.c.b16 %v2050, %v2047
    %v2096 = vpack.c.b16 %v2051, %v2048
    %v2097 = vpack.c.b16 %v2055, %v2052
    %v2098 = vpack.c.b16 %v2056, %v2053
    %v2099 = vpack.c.b16 %v2057, %v2054
    %v2100 = vpack.c.b16 %v2061, %v2058
    %v2101 = vpack.c.b16 %v2062, %v2059
    %v2102 = vpack.c.b16 %v2063, %v2060
    %v2103 = vpack.c.b16 %v2067, %v2064
    %v2104 = vpack.c.b16 %v2068, %v2065
    %v2105 = vpack.c.b16 %v2069, %v2066
    %v2106 = vpack.c.b16 %v2073, %v2070
    %v2107 = vpack.c.b16 %v2074, %v2071
    %v2108 = vpack.c.b16 %v2075, %v2072
    %v2109 = vpack.c.b16 %v2079, %v2076
    %v2110 = vpack.c.b16 %v2080, %v2077
    %v2111 = vpack.c.b16 %v2081, %v2078
    %v2112 = vpack.c.b16 %v2085, %v2082
    %v2113 = vpack.c.b16 %v2086, %v2083
    %v2114 = vpack.c.b16 %v2087, %v2084
    %v2115 = vpack.c.b16 %v2091, %v2088
    %v2116 = vpack.c.b16 %v2092, %v2089
    %v2117 = vpack.c.b16 %v2093, %v2090
    %2142 = vmatpush.bf16.msra.mxu0 %v2115
    %2143 = vmatpush.bf16.msra.mxu0 %v2112
    %2144 = vmatpush.bf16.msra.mxu0 %v2109
    %2145 = vmatpush.bf16.msra.mxu0 %v2106
    %2146 = vmatpush.bf16.msra.mxu0 %v2103
    %2147 = vmatpush.bf16.msra.mxu0 %v2100
    %2148 = vmatpush.bf16.msra.mxu0 %v2097
    %2149 = vmatpush.bf16.msra.mxu0 %v2094
    %2150 = vmatmul.bf16.gmra.mxu0 0
    %v2151 = vpop.f32.mrf.mxu0
    %v2152 = vadd.f32 0.0, %v2151
    %v2153 = vpop.f32.mrf.mxu0
    %2154 = vdwg.mxu0
    %2155 = vmatpush.bf16.msra.mxu0 %v2116
    %2156 = vmatpush.bf16.msra.mxu0 %v2113
    %2157 = vmatpush.bf16.msra.mxu0 %v2110
    %2158 = vmatpush.bf16.msra.mxu0 %v2107
    %2159 = vmatpush.bf16.msra.mxu0 %v2104
    %2160 = vmatpush.bf16.msra.mxu0 %v2101
    %2161 = vmatpush.bf16.msra.mxu0 %v2098
    %2162 = vmatpush.bf16.msra.mxu0 %v2095
    %2163 = vmatmul.bf16.gmra.mxu0 0
    %v2164 = vpop.f32.mrf.mxu0
    %v2165 = vadd.f32 0.0, %v2164
    %v2166 = vpop.f32.mrf.mxu0
    %2167 = vdwg.mxu0
    %2168 = vmatpush.bf16.msra.mxu0 %v2117
    %2169 = vmatpush.bf16.msra.mxu0 %v2114
    %2170 = vmatpush.bf16.msra.mxu0 %v2111
    %2171 = vmatpush.bf16.msra.mxu0 %v2108
    %2172 = vmatpush.bf16.msra.mxu0 %v2105
    %2173 = vmatpush.bf16.msra.mxu0 %v2102
    %2174 = vmatpush.bf16.msra.mxu0 %v2099
    %2175 = vmatpush.bf16.msra.mxu0 %v2096
    %2176 = vmatmul.bf16.gmra.mxu0 0
    %v2177 = vpop.f32.mrf.mxu0
    %v2178 = vadd.f32 0.0, %v2177
    %v2179 = vpop.f32.mrf.mxu0
    %2180 = vdwg.mxu0
    %v2181 = vadd.f32 %v1501, %v1651
    %v2182 = vadd.f32 %v1504, %v1818
    %v2183 = vadd.f32 %v1507, %v1985
    %v2184 = vadd.f32 %v1510, %v2152
    %v2185 = vxor.u32 %v2181, 2147483648
    %v2186 = vxor.u32 %v2182, 2147483648
    %v2187 = vxor.u32 %v2183, 2147483648
    %v2188 = vxor.u32 %v2184, 2147483648
    %v2189 = vmul.f32 %v2185, 1.442695
    %v2190 = vpow.pop %v2189
    %v2191 = vmul.f32 %v2186, 1.442695
    %v2192 = vpow.pop %v2191
    %v2193 = vmul.f32 %v2187, 1.442695
    %v2194 = vpow.pop %v2193
    %v2195 = vmul.f32 %v2188, 1.442695
    %v2196 = vpow.pop %v2195
    %v2197 = vadd.f32 %v2190, 1.0
    %v2198 = vadd.f32 %v2192, 1.0
    %v2199 = vadd.f32 %v2194, 1.0
    %v2200 = vadd.f32 %v2196, 1.0
    %v2201 = vrcp.pop %v2197
    %v2202 = vmul.f32 %v2197, %v2201
    %v2203 = vsub.f32 1.0, %v2202
    %v2204 = vmul.f32 %v2201, %v2203
    %v2205 = vadd.f32 %v2201, %v2204
    %vm2206 = vweird.f32 %v2197
    %vm2207 = vweird.f32 %v2201
    %vm2208 = vmor %vm2206, %vm2207
    %v2209 = vsel %vm2208, %v2201, %v2205
    %v2210 = vand.u32 2147483647, %v2197
    %vm2211 = vcmp.eq.f32.partialorder %v2210, 8.507059e+37
    %v2212 = vand.u32 %v2197, 2147483648
    %v2213 = vor.u32 1.1754944e-38, %v2212
    %v2214 = vsel %vm2211, %v2213, %v2209
    %v2215 = vmul.f32 1.0, %v2214
    %v2216 = vrcp.pop %v2198
    %v2217 = vmul.f32 %v2198, %v2216
    %v2218 = vsub.f32 1.0, %v2217
    %v2219 = vmul.f32 %v2216, %v2218
    %v2220 = vadd.f32 %v2216, %v2219
    %vm2221 = vweird.f32 %v2198
    %vm2222 = vweird.f32 %v2216
    %vm2223 = vmor %vm2221, %vm2222
    %v2224 = vsel %vm2223, %v2216, %v2220
    %v2225 = vand.u32 2147483647, %v2198
    %vm2226 = vcmp.eq.f32.partialorder %v2225, 8.507059e+37
    %v2227 = vand.u32 %v2198, 2147483648
    %v2228 = vor.u32 1.1754944e-38, %v2227
    %v2229 = vsel %vm2226, %v2228, %v2224
    %v2230 = vmul.f32 1.0, %v2229
    %v2231 = vrcp.pop %v2199
    %v2232 = vmul.f32 %v2199, %v2231
    %v2233 = vsub.f32 1.0, %v2232
    %v2234 = vmul.f32 %v2231, %v2233
    %v2235 = vadd.f32 %v2231, %v2234
    %vm2236 = vweird.f32 %v2199
    %vm2237 = vweird.f32 %v2231
    %vm2238 = vmor %vm2236, %vm2237
    %v2239 = vsel %vm2238, %v2231, %v2235
    %v2240 = vand.u32 2147483647, %v2199
    %vm2241 = vcmp.eq.f32.partialorder %v2240, 8.507059e+37
    %v2242 = vand.u32 %v2199, 2147483648
    %v2243 = vor.u32 1.1754944e-38, %v2242
    %v2244 = vsel %vm2241, %v2243, %v2239
    %v2245 = vmul.f32 1.0, %v2244
    %v2246 = vrcp.pop %v2200
    %v2247 = vmul.f32 %v2200, %v2246
    %v2248 = vsub.f32 1.0, %v2247
    %v2249 = vmul.f32 %v2246, %v2248
    %v2250 = vadd.f32 %v2246, %v2249
    %vm2251 = vweird.f32 %v2200
    %vm2252 = vweird.f32 %v2246
    %vm2253 = vmor %vm2251, %vm2252
    %v2254 = vsel %vm2253, %v2246, %v2250
    %v2255 = vand.u32 2147483647, %v2200
    %vm2256 = vcmp.eq.f32.partialorder %v2255, 8.507059e+37
    %v2257 = vand.u32 %v2200, 2147483648
    %v2258 = vor.u32 1.1754944e-38, %v2257
    %v2259 = vsel %vm2256, %v2258, %v2254
    %v2260 = vmul.f32 1.0, %v2259
    %v2261 = vadd.f32 %v1502, %v1664
    %v2262 = vadd.f32 %v1505, %v1831
    %v2263 = vadd.f32 %v1508, %v1998
    %v2264 = vadd.f32 %v1511, %v2165
    %v2265 = vxor.u32 %v2261, 2147483648
    %v2266 = vxor.u32 %v2262, 2147483648
    %v2267 = vxor.u32 %v2263, 2147483648
    %v2268 = vxor.u32 %v2264, 2147483648
    %v2269 = vmul.f32 %v2265, 1.442695
    %v2270 = vpow.pop %v2269
    %v2271 = vmul.f32 %v2266, 1.442695
    %v2272 = vpow.pop %v2271
    %v2273 = vmul.f32 %v2267, 1.442695
    %v2274 = vpow.pop %v2273
    %v2275 = vmul.f32 %v2268, 1.442695
    %v2276 = vpow.pop %v2275
    %v2277 = vadd.f32 %v2270, 1.0
    %v2278 = vadd.f32 %v2272, 1.0
    %v2279 = vadd.f32 %v2274, 1.0
    %v2280 = vadd.f32 %v2276, 1.0
    %v2281 = vrcp.pop %v2277
    %v2282 = vmul.f32 %v2277, %v2281
    %v2283 = vsub.f32 1.0, %v2282
    %v2284 = vmul.f32 %v2281, %v2283
    %v2285 = vadd.f32 %v2281, %v2284
    %vm2286 = vweird.f32 %v2277
    %vm2287 = vweird.f32 %v2281
    %vm2288 = vmor %vm2286, %vm2287
    %v2289 = vsel %vm2288, %v2281, %v2285
    %v2290 = vand.u32 2147483647, %v2277
    %vm2291 = vcmp.eq.f32.partialorder %v2290, 8.507059e+37
    %v2292 = vand.u32 %v2277, 2147483648
    %v2293 = vor.u32 1.1754944e-38, %v2292
    %v2294 = vsel %vm2291, %v2293, %v2289
    %v2295 = vmul.f32 1.0, %v2294
    %v2296 = vrcp.pop %v2278
    %v2297 = vmul.f32 %v2278, %v2296
    %v2298 = vsub.f32 1.0, %v2297
    %v2299 = vmul.f32 %v2296, %v2298
    %v2300 = vadd.f32 %v2296, %v2299
    %vm2301 = vweird.f32 %v2278
    %vm2302 = vweird.f32 %v2296
    %vm2303 = vmor %vm2301, %vm2302
    %v2304 = vsel %vm2303, %v2296, %v2300
    %v2305 = vand.u32 2147483647, %v2278
    %vm2306 = vcmp.eq.f32.partialorder %v2305, 8.507059e+37
    %v2307 = vand.u32 %v2278, 2147483648
    %v2308 = vor.u32 1.1754944e-38, %v2307
    %v2309 = vsel %vm2306, %v2308, %v2304
    %v2310 = vmul.f32 1.0, %v2309
    %v2311 = vrcp.pop %v2279
    %v2312 = vmul.f32 %v2279, %v2311
    %v2313 = vsub.f32 1.0, %v2312
    %v2314 = vmul.f32 %v2311, %v2313
    %v2315 = vadd.f32 %v2311, %v2314
    %vm2316 = vweird.f32 %v2279
    %vm2317 = vweird.f32 %v2311
    %vm2318 = vmor %vm2316, %vm2317
    %v2319 = vsel %vm2318, %v2311, %v2315
    %v2320 = vand.u32 2147483647, %v2279
    %vm2321 = vcmp.eq.f32.partialorder %v2320, 8.507059e+37
    %v2322 = vand.u32 %v2279, 2147483648
    %v2323 = vor.u32 1.1754944e-38, %v2322
    %v2324 = vsel %vm2321, %v2323, %v2319
    %v2325 = vmul.f32 1.0, %v2324
    %v2326 = vrcp.pop %v2280
    %v2327 = vmul.f32 %v2280, %v2326
    %v2328 = vsub.f32 1.0, %v2327
    %v2329 = vmul.f32 %v2326, %v2328
    %v2330 = vadd.f32 %v2326, %v2329
    %vm2331 = vweird.f32 %v2280
    %vm2332 = vweird.f32 %v2326
    %vm2333 = vmor %vm2331, %vm2332
    %v2334 = vsel %vm2333, %v2326, %v2330
    %v2335 = vand.u32 2147483647, %v2280
    %vm2336 = vcmp.eq.f32.partialorder %v2335, 8.507059e+37
    %v2337 = vand.u32 %v2280, 2147483648
    %v2338 = vor.u32 1.1754944e-38, %v2337
    %v2339 = vsel %vm2336, %v2338, %v2334
    %v2340 = vmul.f32 1.0, %v2339
    %v2341 = vadd.f32 %v1677, %v1490
    %v2342 = vadd.f32 %v1844, %v1491
    %v2343 = vadd.f32 %v2011, %v1492
    %v2344 = vadd.f32 %v2178, %v1493
    %v2345 = vmul.f32 %v2215, %v2341
    %v2346 = vmul.f32 %v2230, %v2342
    %v2347 = vmul.f32 %v2245, %v2343
    %v2348 = vmul.f32 %v2260, %v2344
    %v2349 = vadd.f32 %v1503, %v2345
    %v2350 = vadd.f32 %v1506, %v2346
    %v2351 = vadd.f32 %v1509, %v2347
    %v2352 = vadd.f32 %v1512, %v2348
    %v2353 = vtanh.pop %v2349
    %v2354 = vtanh.pop %v2350
    %v2355 = vtanh.pop %v2351
    %v2356 = vtanh.pop %v2352
    %v2357 = vsub.f32 1.0, %v2295
    %v2358 = vsub.f32 1.0, %v2310
    %v2359 = vsub.f32 1.0, %v2325
    %v2360 = vsub.f32 1.0, %v2340
    %v2361 = vmul.f32 %v2357, %v2353
    %v2362 = vmul.f32 %v2358, %v2354
    %v2363 = vmul.f32 %v2359, %v2355
    %v2364 = vmul.f32 %v2360, %v2356
    %v2365 = vmul.f32 %v2295, 0.0
    %v2366 = vmul.f32 %v2310, 0.0
    %v2367 = vmul.f32 %v2325, 0.0
    %v2368 = vmul.f32 %v2340, 0.0
    %v2369 = vadd.f32 %v2361, %v2365
    %v2370 = vadd.f32 %v2362, %v2366
    %v2371 = vadd.f32 %v2363, %v2367
    %v2372 = vadd.f32 %v2364, %v2368
    %vm2373 = vcmp.gt.s32.totalorder %v1478, 0
    %vm2374 = vcmp.gt.s32.totalorder %v1479, 0
    %vm2375 = vcmp.gt.s32.totalorder %v1480, 0
    %vm2376 = vcmp.gt.s32.totalorder %v1481, 0
    %v2377 = vsel %vm2373, 1, 0
    %v2378 = vsel %vm2374, 1, 0
    %v2379 = vsel %vm2375, 1, 0
    %v2380 = vsel %vm2376, 1, 0
    %2381 = vset.pattern.permute.xlu0 0
    %2382 = vperm.xlu0 %2381, %v2377
    %v2383 = vpop.permute.xlu0 %2382
    %2384 = vset.pattern.permute.xlu0 0
    %2385 = vperm.xlu0 %2384, %v2378
    %v2386 = vpop.permute.xlu0 %2385
    %2387 = vset.pattern.permute.xlu0 0
    %2388 = vperm.xlu0 %2387, %v2379
    %v2389 = vpop.permute.xlu0 %2388
    %2390 = vset.pattern.permute.xlu0 0
    %2391 = vperm.xlu0 %2390, %v2380
    %v2392 = vpop.permute.xlu0 %2391
    %vm2393 = vcmp.eq.s32.totalorder %v2383, 1
    %vm2394 = vcmp.eq.s32.totalorder %v2386, 1
    %vm2395 = vcmp.eq.s32.totalorder %v2389, 1
    %vm2396 = vcmp.eq.s32.totalorder %v2392, 1
    %v2397 = vsel %vm2393, %v2369, 0.0
    %v2398 = vsel %vm2394, %v2370, 0.0
    %v2399 = vsel %vm2395, %v2371, 0.0
    %v2400 = vsel %vm2396, %v2372, 0.0
    %s2401 = smul.u32 1, 3
    %s2402 = smul.addr %s2401, 8
    %s2403 = scalar_lea.vmem [#allocation2], %s2402
    %v2404 = vld [vmem:[%s2403] sm:$0xff]
    %v2405 = vld [vmem:[%s2403 + $0x8] sm:$0xff]
    %v2406 = vld [vmem:[%s2403 + $0x10] sm:$0xff]
    %v2407 = vld [vmem:[%s2403 + $0xc0] sm:$0xff]
    %v2408 = vld [vmem:[%s2403 + $0xc8] sm:$0xff]
    %v2409 = vld [vmem:[%s2403 + $0xd0] sm:$0xff]
    %v2410 = vld [vmem:[%s2403 + $0x180] sm:$0xff]
    %v2411 = vld [vmem:[%s2403 + $0x188] sm:$0xff]
    %v2412 = vld [vmem:[%s2403 + $0x190] sm:$0xff]
    %v2413 = vld [vmem:[%s2403 + $0x240] sm:$0xff]
    %v2414 = vld [vmem:[%s2403 + $0x248] sm:$0xff]
    %v2415 = vld [vmem:[%s2403 + $0x250] sm:$0xff]
    %v2416 = vpack.c.bf16 %v2397, %v2397
    %v2417 = vpack.c.bf16 %v2398, %v2398
    %v2418 = vpack.c.bf16 %v2399, %v2399
    %v2419 = vpack.c.bf16 %v2400, %v2400
    %2420 = vmatpush.bf16.msra.mxu0 %v1614
    %2421 = vmatpush.bf16.msra.mxu0 %v1611
    %2422 = vmatpush.bf16.msra.mxu0 %v1608
    %2423 = vmatpush.bf16.msra.mxu0 %v1605
    %2424 = vmatpush.bf16.msra.mxu0 %v1602
    %2425 = vmatpush.bf16.msra.mxu0 %v1599
    %2426 = vmatpush.bf16.msra.mxu0 %v1596
    %2427 = vmatpush.bf16.msra.mxu0 %v1593
    %2428 = vmatmul.bf16.gmra.mxu0 %v2416
    %v2429 = vpop.f32.mrf.mxu0
    %v2430 = vadd.f32 0.0, %v2429
    %v2431 = vpop.f32.mrf.mxu0
    %2432 = vdwg.mxu0
    %2433 = vmatpush.bf16.msra.mxu0 %v1615
    %2434 = vmatpush.bf16.msra.mxu0 %v1612
    %2435 = vmatpush.bf16.msra.mxu0 %v1609
    %2436 = vmatpush.bf16.msra.mxu0 %v1606
    %2437 = vmatpush.bf16.msra.mxu0 %v1603
    %2438 = vmatpush.bf16.msra.mxu0 %v1600
    %2439 = vmatpush.bf16.msra.mxu0 %v1597
    %2440 = vmatpush.bf16.msra.mxu0 %v1594
    %2441 = vmatmul.bf16.gmra.mxu0 %v2416
    %v2442 = vpop.f32.mrf.mxu0
    %v2443 = vadd.f32 0.0, %v2442
    %v2444 = vpop.f32.mrf.mxu0
    %2445 = vdwg.mxu0
    %2446 = vmatpush.bf16.msra.mxu0 %v1616
    %2447 = vmatpush.bf16.msra.mxu0 %v1613
    %2448 = vmatpush.bf16.msra.mxu0 %v1610
    %2449 = vmatpush.bf16.msra.mxu0 %v1607
    %2450 = vmatpush.bf16.msra.mxu0 %v1604
    %2451 = vmatpush.bf16.msra.mxu0 %v1601
    %2452 = vmatpush.bf16.msra.mxu0 %v1598
    %2453 = vmatpush.bf16.msra.mxu0 %v1595
    %2454 = vmatmul.bf16.gmra.mxu0 %v2416
    %v2455 = vpop.f32.mrf.mxu0
    %v2456 = vadd.f32 0.0, %v2455
    %v2457 = vpop.f32.mrf.mxu0
    %2458 = vdwg.mxu0
    %2459 = vmatpush.bf16.msra.mxu0 %v1781
    %2460 = vmatpush.bf16.msra.mxu0 %v1778
    %2461 = vmatpush.bf16.msra.mxu0 %v1775
    %2462 = vmatpush.bf16.msra.mxu0 %v1772
    %2463 = vmatpush.bf16.msra.mxu0 %v1769
    %2464 = vmatpush.bf16.msra.mxu0 %v1766
    %2465 = vmatpush.bf16.msra.mxu0 %v1763
    %2466 = vmatpush.bf16.msra.mxu0 %v1760
    %2467 = vmatmul.bf16.gmra.mxu0 %v2417
    %v2468 = vpop.f32.mrf.mxu0
    %v2469 = vadd.f32 0.0, %v2468
    %v2470 = vpop.f32.mrf.mxu0
    %2471 = vdwg.mxu0
    %2472 = vmatpush.bf16.msra.mxu0 %v1782
    %2473 = vmatpush.bf16.msra.mxu0 %v1779
    %2474 = vmatpush.bf16.msra.mxu0 %v1776
    %2475 = vmatpush.bf16.msra.mxu0 %v1773
    %2476 = vmatpush.bf16.msra.mxu0 %v1770
    %2477 = vmatpush.bf16.msra.mxu0 %v1767
    %2478 = vmatpush.bf16.msra.mxu0 %v1764
    %2479 = vmatpush.bf16.msra.mxu0 %v1761
    %2480 = vmatmul.bf16.gmra.mxu0 %v2417
    %v2481 = vpop.f32.mrf.mxu0
    %v2482 = vadd.f32 0.0, %v2481
    %v2483 = vpop.f32.mrf.mxu0
    %2484 = vdwg.mxu0
    %2485 = vmatpush.bf16.msra.mxu0 %v1783
    %2486 = vmatpush.bf16.msra.mxu0 %v1780
    %2487 = vmatpush.bf16.msra.mxu0 %v1777
    %2488 = vmatpush.bf16.msra.mxu0 %v1774
    %2489 = vmatpush.bf16.msra.mxu0 %v1771
    %2490 = vmatpush.bf16.msra.mxu0 %v1768
    %2491 = vmatpush.bf16.msra.mxu0 %v1765
    %2492 = vmatpush.bf16.msra.mxu0 %v1762
    %2493 = vmatmul.bf16.gmra.mxu0 %v2417
    %v2494 = vpop.f32.mrf.mxu0
    %v2495 = vadd.f32 0.0, %v2494
    %v2496 = vpop.f32.mrf.mxu0
    %2497 = vdwg.mxu0
    %2498 = vmatpush.bf16.msra.mxu0 %v1948
    %2499 = vmatpush.bf16.msra.mxu0 %v1945
    %2500 = vmatpush.bf16.msra.mxu0 %v1942
    %2501 = vmatpush.bf16.msra.mxu0 %v1939
    %2502 = vmatpush.bf16.msra.mxu0 %v1936
    %2503 = vmatpush.bf16.msra.mxu0 %v1933
    %2504 = vmatpush.bf16.msra.mxu0 %v1930
    %2505 = vmatpush.bf16.msra.mxu0 %v1927
    %2506 = vmatmul.bf16.gmra.mxu0 %v2418
    %v2507 = vpop.f32.mrf.mxu0
    %v2508 = vadd.f32 0.0, %v2507
    %v2509 = vpop.f32.mrf.mxu0
    %2510 = vdwg.mxu0
    %2511 = vmatpush.bf16.msra.mxu0 %v1949
    %2512 = vmatpush.bf16.msra.mxu0 %v1946
    %2513 = vmatpush.bf16.msra.mxu0 %v1943
    %2514 = vmatpush.bf16.msra.mxu0 %v1940
    %2515 = vmatpush.bf16.msra.mxu0 %v1937
    %2516 = vmatpush.bf16.msra.mxu0 %v1934
    %2517 = vmatpush.bf16.msra.mxu0 %v1931
    %2518 = vmatpush.bf16.msra.mxu0 %v1928
    %2519 = vmatmul.bf16.gmra.mxu0 %v2418
    %v2520 = vpop.f32.mrf.mxu0
    %v2521 = vadd.f32 0.0, %v2520
    %v2522 = vpop.f32.mrf.mxu0
    %2523 = vdwg.mxu0
    %2524 = vmatpush.bf16.msra.mxu0 %v1950
    %2525 = vmatpush.bf16.msra.mxu0 %v1947
    %2526 = vmatpush.bf16.msra.mxu0 %v1944
    %2527 = vmatpush.bf16.msra.mxu0 %v1941
    %2528 = vmatpush.bf16.msra.mxu0 %v1938
    %2529 = vmatpush.bf16.msra.mxu0 %v1935
    %2530 = vmatpush.bf16.msra.mxu0 %v1932
    %2531 = vmatpush.bf16.msra.mxu0 %v1929
    %2532 = vmatmul.bf16.gmra.mxu0 %v2418
    %v2533 = vpop.f32.mrf.mxu0
    %v2534 = vadd.f32 0.0, %v2533
    %v2535 = vpop.f32.mrf.mxu0
    %2536 = vdwg.mxu0
    %2537 = vmatpush.bf16.msra.mxu0 %v2115
    %2538 = vmatpush.bf16.msra.mxu0 %v2112
    %2539 = vmatpush.bf16.msra.mxu0 %v2109
    %2540 = vmatpush.bf16.msra.mxu0 %v2106
    %2541 = vmatpush.bf16.msra.mxu0 %v2103
    %2542 = vmatpush.bf16.msra.mxu0 %v2100
    %2543 = vmatpush.bf16.msra.mxu0 %v2097
    %2544 = vmatpush.bf16.msra.mxu0 %v2094
    %2545 = vmatmul.bf16.gmra.mxu0 %v2419
    %v2546 = vpop.f32.mrf.mxu0
    %v2547 = vadd.f32 0.0, %v2546
    %v2548 = vpop.f32.mrf.mxu0
    %2549 = vdwg.mxu0
    %2550 = vmatpush.bf16.msra.mxu0 %v2116
    %2551 = vmatpush.bf16.msra.mxu0 %v2113
    %2552 = vmatpush.bf16.msra.mxu0 %v2110
    %2553 = vmatpush.bf16.msra.mxu0 %v2107
    %2554 = vmatpush.bf16.msra.mxu0 %v2104
    %2555 = vmatpush.bf16.msra.mxu0 %v2101
    %2556 = vmatpush.bf16.msra.mxu0 %v2098
    %2557 = vmatpush.bf16.msra.mxu0 %v2095
    %2558 = vmatmul.bf16.gmra.mxu0 %v2419
    %v2559 = vpop.f32.mrf.mxu0
    %v2560 = vadd.f32 0.0, %v2559
    %v2561 = vpop.f32.mrf.mxu0
    %2562 = vdwg.mxu0
    %2563 = vmatpush.bf16.msra.mxu0 %v2117
    %2564 = vmatpush.bf16.msra.mxu0 %v2114
    %2565 = vmatpush.bf16.msra.mxu0 %v2111
    %2566 = vmatpush.bf16.msra.mxu0 %v2108
    %2567 = vmatpush.bf16.msra.mxu0 %v2105
    %2568 = vmatpush.bf16.msra.mxu0 %v2102
    %2569 = vmatpush.bf16.msra.mxu0 %v2099
    %2570 = vmatpush.bf16.msra.mxu0 %v2096
    %2571 = vmatmul.bf16.gmra.mxu0 %v2419
    %v2572 = vpop.f32.mrf.mxu0
    %v2573 = vadd.f32 0.0, %v2572
    %v2574 = vpop.f32.mrf.mxu0
    %2575 = vdwg.mxu0
    %v2576 = vadd.f32 %v2404, %v2430
    %v2577 = vadd.f32 %v2407, %v2469
    %v2578 = vadd.f32 %v2410, %v2508
    %v2579 = vadd.f32 %v2413, %v2547
    %v2580 = vxor.u32 %v2576, 2147483648
    %v2581 = vxor.u32 %v2577, 2147483648
    %v2582 = vxor.u32 %v2578, 2147483648
    %v2583 = vxor.u32 %v2579, 2147483648
    %v2584 = vmul.f32 %v2580, 1.442695
    %v2585 = vpow.pop %v2584
    %v2586 = vmul.f32 %v2581, 1.442695
    %v2587 = vpow.pop %v2586
    %v2588 = vmul.f32 %v2582, 1.442695
    %v2589 = vpow.pop %v2588
    %v2590 = vmul.f32 %v2583, 1.442695
    %v2591 = vpow.pop %v2590
    %v2592 = vadd.f32 %v2585, 1.0
    %v2593 = vadd.f32 %v2587, 1.0
    %v2594 = vadd.f32 %v2589, 1.0
    %v2595 = vadd.f32 %v2591, 1.0
    %v2596 = vrcp.pop %v2592
    %v2597 = vmul.f32 %v2592, %v2596
    %v2598 = vsub.f32 1.0, %v2597
    %v2599 = vmul.f32 %v2596, %v2598
    %v2600 = vadd.f32 %v2596, %v2599
    %vm2601 = vweird.f32 %v2592
    %vm2602 = vweird.f32 %v2596
    %vm2603 = vmor %vm2601, %vm2602
    %v2604 = vsel %vm2603, %v2596, %v2600
    %v2605 = vand.u32 2147483647, %v2592
    %vm2606 = vcmp.eq.f32.partialorder %v2605, 8.507059e+37
    %v2607 = vand.u32 %v2592, 2147483648
    %v2608 = vor.u32 1.1754944e-38, %v2607
    %v2609 = vsel %vm2606, %v2608, %v2604
    %v2610 = vmul.f32 1.0, %v2609
    %v2611 = vrcp.pop %v2593
    %v2612 = vmul.f32 %v2593, %v2611
    %v2613 = vsub.f32 1.0, %v2612
    %v2614 = vmul.f32 %v2611, %v2613
    %v2615 = vadd.f32 %v2611, %v2614
    %vm2616 = vweird.f32 %v2593
    %vm2617 = vweird.f32 %v2611
    %vm2618 = vmor %vm2616, %vm2617
    %v2619 = vsel %vm2618, %v2611, %v2615
    %v2620 = vand.u32 2147483647, %v2593
    %vm2621 = vcmp.eq.f32.partialorder %v2620, 8.507059e+37
    %v2622 = vand.u32 %v2593, 2147483648
    %v2623 = vor.u32 1.1754944e-38, %v2622
    %v2624 = vsel %vm2621, %v2623, %v2619
    %v2625 = vmul.f32 1.0, %v2624
    %v2626 = vrcp.pop %v2594
    %v2627 = vmul.f32 %v2594, %v2626
    %v2628 = vsub.f32 1.0, %v2627
    %v2629 = vmul.f32 %v2626, %v2628
    %v2630 = vadd.f32 %v2626, %v2629
    %vm2631 = vweird.f32 %v2594
    %vm2632 = vweird.f32 %v2626
    %vm2633 = vmor %vm2631, %vm2632
    %v2634 = vsel %vm2633, %v2626, %v2630
    %v2635 = vand.u32 2147483647, %v2594
    %vm2636 = vcmp.eq.f32.partialorder %v2635, 8.507059e+37
    %v2637 = vand.u32 %v2594, 2147483648
    %v2638 = vor.u32 1.1754944e-38, %v2637
    %v2639 = vsel %vm2636, %v2638, %v2634
    %v2640 = vmul.f32 1.0, %v2639
    %v2641 = vrcp.pop %v2595
    %v2642 = vmul.f32 %v2595, %v2641
    %v2643 = vsub.f32 1.0, %v2642
    %v2644 = vmul.f32 %v2641, %v2643
    %v2645 = vadd.f32 %v2641, %v2644
    %vm2646 = vweird.f32 %v2595
    %vm2647 = vweird.f32 %v2641
    %vm2648 = vmor %vm2646, %vm2647
    %v2649 = vsel %vm2648, %v2641, %v2645
    %v2650 = vand.u32 2147483647, %v2595
    %vm2651 = vcmp.eq.f32.partialorder %v2650, 8.507059e+37
    %v2652 = vand.u32 %v2595, 2147483648
    %v2653 = vor.u32 1.1754944e-38, %v2652
    %v2654 = vsel %vm2651, %v2653, %v2649
    %v2655 = vmul.f32 1.0, %v2654
    %v2656 = vadd.f32 %v2405, %v2443
    %v2657 = vadd.f32 %v2408, %v2482
    %v2658 = vadd.f32 %v2411, %v2521
    %v2659 = vadd.f32 %v2414, %v2560
    %v2660 = vxor.u32 %v2656, 2147483648
    %v2661 = vxor.u32 %v2657, 2147483648
    %v2662 = vxor.u32 %v2658, 2147483648
    %v2663 = vxor.u32 %v2659, 2147483648
    %v2664 = vmul.f32 %v2660, 1.442695
    %v2665 = vpow.pop %v2664
    %v2666 = vmul.f32 %v2661, 1.442695
    %v2667 = vpow.pop %v2666
    %v2668 = vmul.f32 %v2662, 1.442695
    %v2669 = vpow.pop %v2668
    %v2670 = vmul.f32 %v2663, 1.442695
    %v2671 = vpow.pop %v2670
    %v2672 = vadd.f32 %v2665, 1.0
    %v2673 = vadd.f32 %v2667, 1.0
    %v2674 = vadd.f32 %v2669, 1.0
    %v2675 = vadd.f32 %v2671, 1.0
    %v2676 = vrcp.pop %v2672
    %v2677 = vmul.f32 %v2672, %v2676
    %v2678 = vsub.f32 1.0, %v2677
    %v2679 = vmul.f32 %v2676, %v2678
    %v2680 = vadd.f32 %v2676, %v2679
    %vm2681 = vweird.f32 %v2672
    %vm2682 = vweird.f32 %v2676
    %vm2683 = vmor %vm2681, %vm2682
    %v2684 = vsel %vm2683, %v2676, %v2680
    %v2685 = vand.u32 2147483647, %v2672
    %vm2686 = vcmp.eq.f32.partialorder %v2685, 8.507059e+37
    %v2687 = vand.u32 %v2672, 2147483648
    %v2688 = vor.u32 1.1754944e-38, %v2687
    %v2689 = vsel %vm2686, %v2688, %v2684
    %v2690 = vmul.f32 1.0, %v2689
    %v2691 = vrcp.pop %v2673
    %v2692 = vmul.f32 %v2673, %v2691
    %v2693 = vsub.f32 1.0, %v2692
    %v2694 = vmul.f32 %v2691, %v2693
    %v2695 = vadd.f32 %v2691, %v2694
    %vm2696 = vweird.f32 %v2673
    %vm2697 = vweird.f32 %v2691
    %vm2698 = vmor %vm2696, %vm2697
    %v2699 = vsel %vm2698, %v2691, %v2695
    %v2700 = vand.u32 2147483647, %v2673
    %vm2701 = vcmp.eq.f32.partialorder %v2700, 8.507059e+37
    %v2702 = vand.u32 %v2673, 2147483648
    %v2703 = vor.u32 1.1754944e-38, %v2702
    %v2704 = vsel %vm2701, %v2703, %v2699
    %v2705 = vmul.f32 1.0, %v2704
    %v2706 = vrcp.pop %v2674
    %v2707 = vmul.f32 %v2674, %v2706
    %v2708 = vsub.f32 1.0, %v2707
    %v2709 = vmul.f32 %v2706, %v2708
    %v2710 = vadd.f32 %v2706, %v2709
    %vm2711 = vweird.f32 %v2674
    %vm2712 = vweird.f32 %v2706
    %vm2713 = vmor %vm2711, %vm2712
    %v2714 = vsel %vm2713, %v2706, %v2710
    %v2715 = vand.u32 2147483647, %v2674
    %vm2716 = vcmp.eq.f32.partialorder %v2715, 8.507059e+37
    %v2717 = vand.u32 %v2674, 2147483648
    %v2718 = vor.u32 1.1754944e-38, %v2717
    %v2719 = vsel %vm2716, %v2718, %v2714
    %v2720 = vmul.f32 1.0, %v2719
    %v2721 = vrcp.pop %v2675
    %v2722 = vmul.f32 %v2675, %v2721
    %v2723 = vsub.f32 1.0, %v2722
    %v2724 = vmul.f32 %v2721, %v2723
    %v2725 = vadd.f32 %v2721, %v2724
    %vm2726 = vweird.f32 %v2675
    %vm2727 = vweird.f32 %v2721
    %vm2728 = vmor %vm2726, %vm2727
    %v2729 = vsel %vm2728, %v2721, %v2725
    %v2730 = vand.u32 2147483647, %v2675
    %vm2731 = vcmp.eq.f32.partialorder %v2730, 8.507059e+37
    %v2732 = vand.u32 %v2675, 2147483648
    %v2733 = vor.u32 1.1754944e-38, %v2732
    %v2734 = vsel %vm2731, %v2733, %v2729
    %v2735 = vmul.f32 1.0, %v2734
    %v2736 = vadd.f32 %v2456, %v1490
    %v2737 = vadd.f32 %v2495, %v1491
    %v2738 = vadd.f32 %v2534, %v1492
    %v2739 = vadd.f32 %v2573, %v1493
    %v2740 = vmul.f32 %v2610, %v2736
    %v2741 = vmul.f32 %v2625, %v2737
    %v2742 = vmul.f32 %v2640, %v2738
    %v2743 = vmul.f32 %v2655, %v2739
    %v2744 = vadd.f32 %v2406, %v2740
    %v2745 = vadd.f32 %v2409, %v2741
    %v2746 = vadd.f32 %v2412, %v2742
    %v2747 = vadd.f32 %v2415, %v2743
    %v2748 = vtanh.pop %v2744
    %v2749 = vtanh.pop %v2745
    %v2750 = vtanh.pop %v2746
    %v2751 = vtanh.pop %v2747
    %v2752 = vsub.f32 1.0, %v2690
    %v2753 = vsub.f32 1.0, %v2705
    %v2754 = vsub.f32 1.0, %v2720
    %v2755 = vsub.f32 1.0, %v2735
    %v2756 = vmul.f32 %v2752, %v2748
    %v2757 = vmul.f32 %v2753, %v2749
    %v2758 = vmul.f32 %v2754, %v2750
    %v2759 = vmul.f32 %v2755, %v2751
    %v2760 = vmul.f32 %v2690, %v2397
    %v2761 = vmul.f32 %v2705, %v2398
    %v2762 = vmul.f32 %v2720, %v2399
    %v2763 = vmul.f32 %v2735, %v2400
    %v2764 = vadd.f32 %v2756, %v2760
    %v2765 = vadd.f32 %v2757, %v2761
    %v2766 = vadd.f32 %v2758, %v2762
    %v2767 = vadd.f32 %v2759, %v2763
    %vm2768 = vcmp.gt.s32.totalorder %v1478, 1
    %vm2769 = vcmp.gt.s32.totalorder %v1479, 1
    %vm2770 = vcmp.gt.s32.totalorder %v1480, 1
    %vm2771 = vcmp.gt.s32.totalorder %v1481, 1
    %v2772 = vsel %vm2768, 1, 0
    %v2773 = vsel %vm2769, 1, 0
    %v2774 = vsel %vm2770, 1, 0
    %v2775 = vsel %vm2771, 1, 0
    %2776 = vset.pattern.permute.xlu0 0
    %2777 = vperm.xlu0 %2776, %v2772
    %v2778 = vpop.permute.xlu0 %2777
    %2779 = vset.pattern.permute.xlu0 0
    %2780 = vperm.xlu0 %2779, %v2773
    %v2781 = vpop.permute.xlu0 %2780
    %2782 = vset.pattern.permute.xlu0 0
    %2783 = vperm.xlu0 %2782, %v2774
    %v2784 = vpop.permute.xlu0 %2783
    %2785 = vset.pattern.permute.xlu0 0
    %2786 = vperm.xlu0 %2785, %v2775
    %v2787 = vpop.permute.xlu0 %2786
    %vm2788 = vcmp.eq.s32.totalorder %v2778, 1
    %vm2789 = vcmp.eq.s32.totalorder %v2781, 1
    %vm2790 = vcmp.eq.s32.totalorder %v2784, 1
    %vm2791 = vcmp.eq.s32.totalorder %v2787, 1
    %v2792 = vsel %vm2788, %v2764, %v2397
    %v2793 = vsel %vm2789, %v2765, %v2398
    %v2794 = vsel %vm2790, %v2766, %v2399
    %v2795 = vsel %vm2791, %v2767, %v2400
    %s2796 = smul.u32 2, 3
    %s2797 = smul.addr %s2796, 8
    %s2798 = scalar_lea.vmem [#allocation2], %s2797
    %v2799 = vld [vmem:[%s2798] sm:$0xff]
    %v2800 = vld [vmem:[%s2798 + $0x8] sm:$0xff]
    %v2801 = vld [vmem:[%s2798 + $0x10] sm:$0xff]
    %v2802 = vld [vmem:[%s2798 + $0xc0] sm:$0xff]
    %v2803 = vld [vmem:[%s2798 + $0xc8] sm:$0xff]
    %v2804 = vld [vmem:[%s2798 + $0xd0] sm:$0xff]
    %v2805 = vld [vmem:[%s2798 + $0x180] sm:$0xff]
    %v2806 = vld [vmem:[%s2798 + $0x188] sm:$0xff]
    %v2807 = vld [vmem:[%s2798 + $0x190] sm:$0xff]
    %v2808 = vld [vmem:[%s2798 + $0x240] sm:$0xff]
    %v2809 = vld [vmem:[%s2798 + $0x248] sm:$0xff]
    %v2810 = vld [vmem:[%s2798 + $0x250] sm:$0xff]
    %v2811 = vpack.c.bf16 %v2792, %v2792
    %v2812 = vpack.c.bf16 %v2793, %v2793
    %v2813 = vpack.c.bf16 %v2794, %v2794
    %v2814 = vpack.c.bf16 %v2795, %v2795
    %2815 = vmatpush.bf16.msra.mxu0 %v1614
    %2816 = vmatpush.bf16.msra.mxu0 %v1611
    %2817 = vmatpush.bf16.msra.mxu0 %v1608
    %2818 = vmatpush.bf16.msra.mxu0 %v1605
    %2819 = vmatpush.bf16.msra.mxu0 %v1602
    %2820 = vmatpush.bf16.msra.mxu0 %v1599
    %2821 = vmatpush.bf16.msra.mxu0 %v1596
    %2822 = vmatpush.bf16.msra.mxu0 %v1593
    %2823 = vmatmul.bf16.gmra.mxu0 %v2811
    %v2824 = vpop.f32.mrf.mxu0
    %v2825 = vadd.f32 0.0, %v2824
    %v2826 = vpop.f32.mrf.mxu0
    %2827 = vdwg.mxu0
    %2828 = vmatpush.bf16.msra.mxu0 %v1615
    %2829 = vmatpush.bf16.msra.mxu0 %v1612
    %2830 = vmatpush.bf16.msra.mxu0 %v1609
    %2831 = vmatpush.bf16.msra.mxu0 %v1606
    %2832 = vmatpush.bf16.msra.mxu0 %v1603
    %2833 = vmatpush.bf16.msra.mxu0 %v1600
    %2834 = vmatpush.bf16.msra.mxu0 %v1597
    %2835 = vmatpush.bf16.msra.mxu0 %v1594
    %2836 = vmatmul.bf16.gmra.mxu0 %v2811
    %v2837 = vpop.f32.mrf.mxu0
    %v2838 = vadd.f32 0.0, %v2837
    %v2839 = vpop.f32.mrf.mxu0
    %2840 = vdwg.mxu0
    %2841 = vmatpush.bf16.msra.mxu0 %v1616
    %2842 = vmatpush.bf16.msra.mxu0 %v1613
    %2843 = vmatpush.bf16.msra.mxu0 %v1610
    %2844 = vmatpush.bf16.msra.mxu0 %v1607
    %2845 = vmatpush.bf16.msra.mxu0 %v1604
    %2846 = vmatpush.bf16.msra.mxu0 %v1601
    %2847 = vmatpush.bf16.msra.mxu0 %v1598
    %2848 = vmatpush.bf16.msra.mxu0 %v1595
    %2849 = vmatmul.bf16.gmra.mxu0 %v2811
    %v2850 = vpop.f32.mrf.mxu0
    %v2851 = vadd.f32 0.0, %v2850
    %v2852 = vpop.f32.mrf.mxu0
    %2853 = vdwg.mxu0
    %2854 = vmatpush.bf16.msra.mxu0 %v1781
    %2855 = vmatpush.bf16.msra.mxu0 %v1778
    %2856 = vmatpush.bf16.msra.mxu0 %v1775
    %2857 = vmatpush.bf16.msra.mxu0 %v1772
    %2858 = vmatpush.bf16.msra.mxu0 %v1769
    %2859 = vmatpush.bf16.msra.mxu0 %v1766
    %2860 = vmatpush.bf16.msra.mxu0 %v1763
    %2861 = vmatpush.bf16.msra.mxu0 %v1760
    %2862 = vmatmul.bf16.gmra.mxu0 %v2812
    %v2863 = vpop.f32.mrf.mxu0
    %v2864 = vadd.f32 0.0, %v2863
    %v2865 = vpop.f32.mrf.mxu0
    %2866 = vdwg.mxu0
    %2867 = vmatpush.bf16.msra.mxu0 %v1782
    %2868 = vmatpush.bf16.msra.mxu0 %v1779
    %2869 = vmatpush.bf16.msra.mxu0 %v1776
    %2870 = vmatpush.bf16.msra.mxu0 %v1773
    %2871 = vmatpush.bf16.msra.mxu0 %v1770
    %2872 = vmatpush.bf16.msra.mxu0 %v1767
    %2873 = vmatpush.bf16.msra.mxu0 %v1764
    %2874 = vmatpush.bf16.msra.mxu0 %v1761
    %2875 = vmatmul.bf16.gmra.mxu0 %v2812
    %v2876 = vpop.f32.mrf.mxu0
    %v2877 = vadd.f32 0.0, %v2876
    %v2878 = vpop.f32.mrf.mxu0
    %2879 = vdwg.mxu0
    %2880 = vmatpush.bf16.msra.mxu0 %v1783
    %2881 = vmatpush.bf16.msra.mxu0 %v1780
    %2882 = vmatpush.bf16.msra.mxu0 %v1777
    %2883 = vmatpush.bf16.msra.mxu0 %v1774
    %2884 = vmatpush.bf16.msra.mxu0 %v1771
    %2885 = vmatpush.bf16.msra.mxu0 %v1768
    %2886 = vmatpush.bf16.msra.mxu0 %v1765
    %2887 = vmatpush.bf16.msra.mxu0 %v1762
    %2888 = vmatmul.bf16.gmra.mxu0 %v2812
    %v2889 = vpop.f32.mrf.mxu0
    %v2890 = vadd.f32 0.0, %v2889
    %v2891 = vpop.f32.mrf.mxu0
    %2892 = vdwg.mxu0
    %2893 = vmatpush.bf16.msra.mxu0 %v1948
    %2894 = vmatpush.bf16.msra.mxu0 %v1945
    %2895 = vmatpush.bf16.msra.mxu0 %v1942
    %2896 = vmatpush.bf16.msra.mxu0 %v1939
    %2897 = vmatpush.bf16.msra.mxu0 %v1936
    %2898 = vmatpush.bf16.msra.mxu0 %v1933
    %2899 = vmatpush.bf16.msra.mxu0 %v1930
    %2900 = vmatpush.bf16.msra.mxu0 %v1927
    %2901 = vmatmul.bf16.gmra.mxu0 %v2813
    %v2902 = vpop.f32.mrf.mxu0
    %v2903 = vadd.f32 0.0, %v2902
    %v2904 = vpop.f32.mrf.mxu0
    %2905 = vdwg.mxu0
    %2906 = vmatpush.bf16.msra.mxu0 %v1949
    %2907 = vmatpush.bf16.msra.mxu0 %v1946
    %2908 = vmatpush.bf16.msra.mxu0 %v1943
    %2909 = vmatpush.bf16.msra.mxu0 %v1940
    %2910 = vmatpush.bf16.msra.mxu0 %v1937
    %2911 = vmatpush.bf16.msra.mxu0 %v1934
    %2912 = vmatpush.bf16.msra.mxu0 %v1931
    %2913 = vmatpush.bf16.msra.mxu0 %v1928
    %2914 = vmatmul.bf16.gmra.mxu0 %v2813
    %v2915 = vpop.f32.mrf.mxu0
    %v2916 = vadd.f32 0.0, %v2915
    %v2917 = vpop.f32.mrf.mxu0
    %2918 = vdwg.mxu0
    %2919 = vmatpush.bf16.msra.mxu0 %v1950
    %2920 = vmatpush.bf16.msra.mxu0 %v1947
    %2921 = vmatpush.bf16.msra.mxu0 %v1944
    %2922 = vmatpush.bf16.msra.mxu0 %v1941
    %2923 = vmatpush.bf16.msra.mxu0 %v1938
    %2924 = vmatpush.bf16.msra.mxu0 %v1935
    %2925 = vmatpush.bf16.msra.mxu0 %v1932
    %2926 = vmatpush.bf16.msra.mxu0 %v1929
    %2927 = vmatmul.bf16.gmra.mxu0 %v2813
    %v2928 = vpop.f32.mrf.mxu0
    %v2929 = vadd.f32 0.0, %v2928
    %v2930 = vpop.f32.mrf.mxu0
    %2931 = vdwg.mxu0
    %2932 = vmatpush.bf16.msra.mxu0 %v2115
    %2933 = vmatpush.bf16.msra.mxu0 %v2112
    %2934 = vmatpush.bf16.msra.mxu0 %v2109
    %2935 = vmatpush.bf16.msra.mxu0 %v2106
    %2936 = vmatpush.bf16.msra.mxu0 %v2103
    %2937 = vmatpush.bf16.msra.mxu0 %v2100
    %2938 = vmatpush.bf16.msra.mxu0 %v2097
    %2939 = vmatpush.bf16.msra.mxu0 %v2094
    %2940 = vmatmul.bf16.gmra.mxu0 %v2814
    %v2941 = vpop.f32.mrf.mxu0
    %v2942 = vadd.f32 0.0, %v2941
    %v2943 = vpop.f32.mrf.mxu0
    %2944 = vdwg.mxu0
    %2945 = vmatpush.bf16.msra.mxu0 %v2116
    %2946 = vmatpush.bf16.msra.mxu0 %v2113
    %2947 = vmatpush.bf16.msra.mxu0 %v2110
    %2948 = vmatpush.bf16.msra.mxu0 %v2107
    %2949 = vmatpush.bf16.msra.mxu0 %v2104
    %2950 = vmatpush.bf16.msra.mxu0 %v2101
    %2951 = vmatpush.bf16.msra.mxu0 %v2098
    %2952 = vmatpush.bf16.msra.mxu0 %v2095
    %2953 = vmatmul.bf16.gmra.mxu0 %v2814
    %v2954 = vpop.f32.mrf.mxu0
    %v2955 = vadd.f32 0.0, %v2954
    %v2956 = vpop.f32.mrf.mxu0
    %2957 = vdwg.mxu0
    %2958 = vmatpush.bf16.msra.mxu0 %v2117
    %2959 = vmatpush.bf16.msra.mxu0 %v2114
    %2960 = vmatpush.bf16.msra.mxu0 %v2111
    %2961 = vmatpush.bf16.msra.mxu0 %v2108
    %2962 = vmatpush.bf16.msra.mxu0 %v2105
    %2963 = vmatpush.bf16.msra.mxu0 %v2102
    %2964 = vmatpush.bf16.msra.mxu0 %v2099
    %2965 = vmatpush.bf16.msra.mxu0 %v2096
    %2966 = vmatmul.bf16.gmra.mxu0 %v2814
    %v2967 = vpop.f32.mrf.mxu0
    %v2968 = vadd.f32 0.0, %v2967
    %v2969 = vpop.f32.mrf.mxu0
    %2970 = vdwg.mxu0
    %v2971 = vadd.f32 %v2799, %v2825
    %v2972 = vadd.f32 %v2802, %v2864
    %v2973 = vadd.f32 %v2805, %v2903
    %v2974 = vadd.f32 %v2808, %v2942
    %v2975 = vxor.u32 %v2971, 2147483648
    %v2976 = vxor.u32 %v2972, 2147483648
    %v2977 = vxor.u32 %v2973, 2147483648
    %v2978 = vxor.u32 %v2974, 2147483648
    %v2979 = vmul.f32 %v2975, 1.442695
    %v2980 = vpow.pop %v2979
    %v2981 = vmul.f32 %v2976, 1.442695
    %v2982 = vpow.pop %v2981
    %v2983 = vmul.f32 %v2977, 1.442695
    %v2984 = vpow.pop %v2983
    %v2985 = vmul.f32 %v2978, 1.442695
    %v2986 = vpow.pop %v2985
    %v2987 = vadd.f32 %v2980, 1.0
    %v2988 = vadd.f32 %v2982, 1.0
    %v2989 = vadd.f32 %v2984, 1.0
    %v2990 = vadd.f32 %v2986, 1.0
    %v2991 = vrcp.pop %v2987
    %v2992 = vmul.f32 %v2987, %v2991
    %v2993 = vsub.f32 1.0, %v2992
    %v2994 = vmul.f32 %v2991, %v2993
    %v2995 = vadd.f32 %v2991, %v2994
    %vm2996 = vweird.f32 %v2987
    %vm2997 = vweird.f32 %v2991
    %vm2998 = vmor %vm2996, %vm2997
    %v2999 = vsel %vm2998, %v2991, %v2995
    %v3000 = vand.u32 2147483647, %v2987
    %vm3001 = vcmp.eq.f32.partialorder %v3000, 8.507059e+37
    %v3002 = vand.u32 %v2987, 2147483648
    %v3003 = vor.u32 1.1754944e-38, %v3002
    %v3004 = vsel %vm3001, %v3003, %v2999
    %v3005 = vmul.f32 1.0, %v3004
    %v3006 = vrcp.pop %v2988
    %v3007 = vmul.f32 %v2988, %v3006
    %v3008 = vsub.f32 1.0, %v3007
    %v3009 = vmul.f32 %v3006, %v3008
    %v3010 = vadd.f32 %v3006, %v3009
    %vm3011 = vweird.f32 %v2988
    %vm3012 = vweird.f32 %v3006
    %vm3013 = vmor %vm3011, %vm3012
    %v3014 = vsel %vm3013, %v3006, %v3010
    %v3015 = vand.u32 2147483647, %v2988
    %vm3016 = vcmp.eq.f32.partialorder %v3015, 8.507059e+37
    %v3017 = vand.u32 %v2988, 2147483648
    %v3018 = vor.u32 1.1754944e-38, %v3017
    %v3019 = vsel %vm3016, %v3018, %v3014
    %v3020 = vmul.f32 1.0, %v3019
    %v3021 = vrcp.pop %v2989
    %v3022 = vmul.f32 %v2989, %v3021
    %v3023 = vsub.f32 1.0, %v3022
    %v3024 = vmul.f32 %v3021, %v3023
    %v3025 = vadd.f32 %v3021, %v3024
    %vm3026 = vweird.f32 %v2989
    %vm3027 = vweird.f32 %v3021
    %vm3028 = vmor %vm3026, %vm3027
    %v3029 = vsel %vm3028, %v3021, %v3025
    %v3030 = vand.u32 2147483647, %v2989
    %vm3031 = vcmp.eq.f32.partialorder %v3030, 8.507059e+37
    %v3032 = vand.u32 %v2989, 2147483648
    %v3033 = vor.u32 1.1754944e-38, %v3032
    %v3034 = vsel %vm3031, %v3033, %v3029
    %v3035 = vmul.f32 1.0, %v3034
    %v3036 = vrcp.pop %v2990
    %v3037 = vmul.f32 %v2990, %v3036
    %v3038 = vsub.f32 1.0, %v3037
    %v3039 = vmul.f32 %v3036, %v3038
    %v3040 = vadd.f32 %v3036, %v3039
    %vm3041 = vweird.f32 %v2990
    %vm3042 = vweird.f32 %v3036
    %vm3043 = vmor %vm3041, %vm3042
    %v3044 = vsel %vm3043, %v3036, %v3040
    %v3045 = vand.u32 2147483647, %v2990
    %vm3046 = vcmp.eq.f32.partialorder %v3045, 8.507059e+37
    %v3047 = vand.u32 %v2990, 2147483648
    %v3048 = vor.u32 1.1754944e-38, %v3047
    %v3049 = vsel %vm3046, %v3048, %v3044
    %v3050 = vmul.f32 1.0, %v3049
    %v3051 = vadd.f32 %v2800, %v2838
    %v3052 = vadd.f32 %v2803, %v2877
    %v3053 = vadd.f32 %v2806, %v2916
    %v3054 = vadd.f32 %v2809, %v2955
    %v3055 = vxor.u32 %v3051, 2147483648
    %v3056 = vxor.u32 %v3052, 2147483648
    %v3057 = vxor.u32 %v3053, 2147483648
    %v3058 = vxor.u32 %v3054, 2147483648
    %v3059 = vmul.f32 %v3055, 1.442695
    %v3060 = vpow.pop %v3059
    %v3061 = vmul.f32 %v3056, 1.442695
    %v3062 = vpow.pop %v3061
    %v3063 = vmul.f32 %v3057, 1.442695
    %v3064 = vpow.pop %v3063
    %v3065 = vmul.f32 %v3058, 1.442695
    %v3066 = vpow.pop %v3065
    %v3067 = vadd.f32 %v3060, 1.0
    %v3068 = vadd.f32 %v3062, 1.0
    %v3069 = vadd.f32 %v3064, 1.0
    %v3070 = vadd.f32 %v3066, 1.0
    %v3071 = vrcp.pop %v3067
    %v3072 = vmul.f32 %v3067, %v3071
    %v3073 = vsub.f32 1.0, %v3072
    %v3074 = vmul.f32 %v3071, %v3073
    %v3075 = vadd.f32 %v3071, %v3074
    %vm3076 = vweird.f32 %v3067
    %vm3077 = vweird.f32 %v3071
    %vm3078 = vmor %vm3076, %vm3077
    %v3079 = vsel %vm3078, %v3071, %v3075
    %v3080 = vand.u32 2147483647, %v3067
    %vm3081 = vcmp.eq.f32.partialorder %v3080, 8.507059e+37
    %v3082 = vand.u32 %v3067, 2147483648
    %v3083 = vor.u32 1.1754944e-38, %v3082
    %v3084 = vsel %vm3081, %v3083, %v3079
    %v3085 = vmul.f32 1.0, %v3084
    %v3086 = vrcp.pop %v3068
    %v3087 = vmul.f32 %v3068, %v3086
    %v3088 = vsub.f32 1.0, %v3087
    %v3089 = vmul.f32 %v3086, %v3088
    %v3090 = vadd.f32 %v3086, %v3089
    %vm3091 = vweird.f32 %v3068
    %vm3092 = vweird.f32 %v3086
    %vm3093 = vmor %vm3091, %vm3092
    %v3094 = vsel %vm3093, %v3086, %v3090
    %v3095 = vand.u32 2147483647, %v3068
    %vm3096 = vcmp.eq.f32.partialorder %v3095, 8.507059e+37
    %v3097 = vand.u32 %v3068, 2147483648
    %v3098 = vor.u32 1.1754944e-38, %v3097
    %v3099 = vsel %vm3096, %v3098, %v3094
    %v3100 = vmul.f32 1.0, %v3099
    %v3101 = vrcp.pop %v3069
    %v3102 = vmul.f32 %v3069, %v3101
    %v3103 = vsub.f32 1.0, %v3102
    %v3104 = vmul.f32 %v3101, %v3103
    %v3105 = vadd.f32 %v3101, %v3104
    %vm3106 = vweird.f32 %v3069
    %vm3107 = vweird.f32 %v3101
    %vm3108 = vmor %vm3106, %vm3107
    %v3109 = vsel %vm3108, %v3101, %v3105
    %v3110 = vand.u32 2147483647, %v3069
    %vm3111 = vcmp.eq.f32.partialorder %v3110, 8.507059e+37
    %v3112 = vand.u32 %v3069, 2147483648
    %v3113 = vor.u32 1.1754944e-38, %v3112
    %v3114 = vsel %vm3111, %v3113, %v3109
    %v3115 = vmul.f32 1.0, %v3114
    %v3116 = vrcp.pop %v3070
    %v3117 = vmul.f32 %v3070, %v3116
    %v3118 = vsub.f32 1.0, %v3117
    %v3119 = vmul.f32 %v3116, %v3118
    %v3120 = vadd.f32 %v3116, %v3119
    %vm3121 = vweird.f32 %v3070
    %vm3122 = vweird.f32 %v3116
    %vm3123 = vmor %vm3121, %vm3122
    %v3124 = vsel %vm3123, %v3116, %v3120
    %v3125 = vand.u32 2147483647, %v3070
    %vm3126 = vcmp.eq.f32.partialorder %v3125, 8.507059e+37
    %v3127 = vand.u32 %v3070, 2147483648
    %v3128 = vor.u32 1.1754944e-38, %v3127
    %v3129 = vsel %vm3126, %v3128, %v3124
    %v3130 = vmul.f32 1.0, %v3129
    %v3131 = vadd.f32 %v2851, %v1490
    %v3132 = vadd.f32 %v2890, %v1491
    %v3133 = vadd.f32 %v2929, %v1492
    %v3134 = vadd.f32 %v2968, %v1493
    %v3135 = vmul.f32 %v3005, %v3131
    %v3136 = vmul.f32 %v3020, %v3132
    %v3137 = vmul.f32 %v3035, %v3133
    %v3138 = vmul.f32 %v3050, %v3134
    %v3139 = vadd.f32 %v2801, %v3135
    %v3140 = vadd.f32 %v2804, %v3136
    %v3141 = vadd.f32 %v2807, %v3137
    %v3142 = vadd.f32 %v2810, %v3138
    %v3143 = vtanh.pop %v3139
    %v3144 = vtanh.pop %v3140
    %v3145 = vtanh.pop %v3141
    %v3146 = vtanh.pop %v3142
    %v3147 = vsub.f32 1.0, %v3085
    %v3148 = vsub.f32 1.0, %v3100
    %v3149 = vsub.f32 1.0, %v3115
    %v3150 = vsub.f32 1.0, %v3130
    %v3151 = vmul.f32 %v3147, %v3143
    %v3152 = vmul.f32 %v3148, %v3144
    %v3153 = vmul.f32 %v3149, %v3145
    %v3154 = vmul.f32 %v3150, %v3146
    %v3155 = vmul.f32 %v3085, %v2792
    %v3156 = vmul.f32 %v3100, %v2793
    %v3157 = vmul.f32 %v3115, %v2794
    %v3158 = vmul.f32 %v3130, %v2795
    %v3159 = vadd.f32 %v3151, %v3155
    %v3160 = vadd.f32 %v3152, %v3156
    %v3161 = vadd.f32 %v3153, %v3157
    %v3162 = vadd.f32 %v3154, %v3158
    %vm3163 = vcmp.gt.s32.totalorder %v1478, 2
    %vm3164 = vcmp.gt.s32.totalorder %v1479, 2
    %vm3165 = vcmp.gt.s32.totalorder %v1480, 2
    %vm3166 = vcmp.gt.s32.totalorder %v1481, 2
    %v3167 = vsel %vm3163, 1, 0
    %v3168 = vsel %vm3164, 1, 0
    %v3169 = vsel %vm3165, 1, 0
    %v3170 = vsel %vm3166, 1, 0
    %3171 = vset.pattern.permute.xlu0 0
    %3172 = vperm.xlu0 %3171, %v3167
    %v3173 = vpop.permute.xlu0 %3172
    %3174 = vset.pattern.permute.xlu0 0
    %3175 = vperm.xlu0 %3174, %v3168
    %v3176 = vpop.permute.xlu0 %3175
    %3177 = vset.pattern.permute.xlu0 0
    %3178 = vperm.xlu0 %3177, %v3169
    %v3179 = vpop.permute.xlu0 %3178
    %3180 = vset.pattern.permute.xlu0 0
    %3181 = vperm.xlu0 %3180, %v3170
    %v3182 = vpop.permute.xlu0 %3181
    %vm3183 = vcmp.eq.s32.totalorder %v3173, 1
    %vm3184 = vcmp.eq.s32.totalorder %v3176, 1
    %vm3185 = vcmp.eq.s32.totalorder %v3179, 1
    %vm3186 = vcmp.eq.s32.totalorder %v3182, 1
    %v3187 = vsel %vm3183, %v3159, %v2792
    %v3188 = vsel %vm3184, %v3160, %v2793
    %v3189 = vsel %vm3185, %v3161, %v2794
    %v3190 = vsel %vm3186, %v3162, %v2795
    %s3191 = smul.u32 3, 3
    %s3192 = smul.addr %s3191, 8
    %s3193 = scalar_lea.vmem [#allocation2], %s3192
    %v3194 = vld [vmem:[%s3193] sm:$0xff]
    %v3195 = vld [vmem:[%s3193 + $0x8] sm:$0xff]
    %v3196 = vld [vmem:[%s3193 + $0x10] sm:$0xff]
    %v3197 = vld [vmem:[%s3193 + $0xc0] sm:$0xff]
    %v3198 = vld [vmem:[%s3193 + $0xc8] sm:$0xff]
    %v3199 = vld [vmem:[%s3193 + $0xd0] sm:$0xff]
    %v3200 = vld [vmem:[%s3193 + $0x180] sm:$0xff]
    %v3201 = vld [vmem:[%s3193 + $0x188] sm:$0xff]
    %v3202 = vld [vmem:[%s3193 + $0x190] sm:$0xff]
    %v3203 = vld [vmem:[%s3193 + $0x240] sm:$0xff]
    %v3204 = vld [vmem:[%s3193 + $0x248] sm:$0xff]
    %v3205 = vld [vmem:[%s3193 + $0x250] sm:$0xff]
    %v3206 = vpack.c.bf16 %v3187, %v3187
    %v3207 = vpack.c.bf16 %v3188, %v3188
    %v3208 = vpack.c.bf16 %v3189, %v3189
    %v3209 = vpack.c.bf16 %v3190, %v3190
    %3210 = vmatpush.bf16.msra.mxu0 %v1614
    %3211 = vmatpush.bf16.msra.mxu0 %v1611
    %3212 = vmatpush.bf16.msra.mxu0 %v1608
    %3213 = vmatpush.bf16.msra.mxu0 %v1605
    %3214 = vmatpush.bf16.msra.mxu0 %v1602
    %3215 = vmatpush.bf16.msra.mxu0 %v1599
    %3216 = vmatpush.bf16.msra.mxu0 %v1596
    %3217 = vmatpush.bf16.msra.mxu0 %v1593
    %3218 = vmatmul.bf16.gmra.mxu0 %v3206
    %v3219 = vpop.f32.mrf.mxu0
    %v3220 = vadd.f32 0.0, %v3219
    %v3221 = vpop.f32.mrf.mxu0
    %3222 = vdwg.mxu0
    %3223 = vmatpush.bf16.msra.mxu0 %v1615
    %3224 = vmatpush.bf16.msra.mxu0 %v1612
    %3225 = vmatpush.bf16.msra.mxu0 %v1609
    %3226 = vmatpush.bf16.msra.mxu0 %v1606
    %3227 = vmatpush.bf16.msra.mxu0 %v1603
    %3228 = vmatpush.bf16.msra.mxu0 %v1600
    %3229 = vmatpush.bf16.msra.mxu0 %v1597
    %3230 = vmatpush.bf16.msra.mxu0 %v1594
    %3231 = vmatmul.bf16.gmra.mxu0 %v3206
    %v3232 = vpop.f32.mrf.mxu0
    %v3233 = vadd.f32 0.0, %v3232
    %v3234 = vpop.f32.mrf.mxu0
    %3235 = vdwg.mxu0
    %3236 = vmatpush.bf16.msra.mxu0 %v1616
    %3237 = vmatpush.bf16.msra.mxu0 %v1613
    %3238 = vmatpush.bf16.msra.mxu0 %v1610
    %3239 = vmatpush.bf16.msra.mxu0 %v1607
    %3240 = vmatpush.bf16.msra.mxu0 %v1604
    %3241 = vmatpush.bf16.msra.mxu0 %v1601
    %3242 = vmatpush.bf16.msra.mxu0 %v1598
    %3243 = vmatpush.bf16.msra.mxu0 %v1595
    %3244 = vmatmul.bf16.gmra.mxu0 %v3206
    %v3245 = vpop.f32.mrf.mxu0
    %v3246 = vadd.f32 0.0, %v3245
    %v3247 = vpop.f32.mrf.mxu0
    %3248 = vdwg.mxu0
    %3249 = vmatpush.bf16.msra.mxu0 %v1781
    %3250 = vmatpush.bf16.msra.mxu0 %v1778
    %3251 = vmatpush.bf16.msra.mxu0 %v1775
    %3252 = vmatpush.bf16.msra.mxu0 %v1772
    %3253 = vmatpush.bf16.msra.mxu0 %v1769
    %3254 = vmatpush.bf16.msra.mxu0 %v1766
    %3255 = vmatpush.bf16.msra.mxu0 %v1763
    %3256 = vmatpush.bf16.msra.mxu0 %v1760
    %3257 = vmatmul.bf16.gmra.mxu0 %v3207
    %v3258 = vpop.f32.mrf.mxu0
    %v3259 = vadd.f32 0.0, %v3258
    %v3260 = vpop.f32.mrf.mxu0
    %3261 = vdwg.mxu0
    %3262 = vmatpush.bf16.msra.mxu0 %v1782
    %3263 = vmatpush.bf16.msra.mxu0 %v1779
    %3264 = vmatpush.bf16.msra.mxu0 %v1776
    %3265 = vmatpush.bf16.msra.mxu0 %v1773
    %3266 = vmatpush.bf16.msra.mxu0 %v1770
    %3267 = vmatpush.bf16.msra.mxu0 %v1767
    %3268 = vmatpush.bf16.msra.mxu0 %v1764
    %3269 = vmatpush.bf16.msra.mxu0 %v1761
    %3270 = vmatmul.bf16.gmra.mxu0 %v3207
    %v3271 = vpop.f32.mrf.mxu0
    %v3272 = vadd.f32 0.0, %v3271
    %v3273 = vpop.f32.mrf.mxu0
    %3274 = vdwg.mxu0
    %3275 = vmatpush.bf16.msra.mxu0 %v1783
    %3276 = vmatpush.bf16.msra.mxu0 %v1780
    %3277 = vmatpush.bf16.msra.mxu0 %v1777
    %3278 = vmatpush.bf16.msra.mxu0 %v1774
    %3279 = vmatpush.bf16.msra.mxu0 %v1771
    %3280 = vmatpush.bf16.msra.mxu0 %v1768
    %3281 = vmatpush.bf16.msra.mxu0 %v1765
    %3282 = vmatpush.bf16.msra.mxu0 %v1762
    %3283 = vmatmul.bf16.gmra.mxu0 %v3207
    %v3284 = vpop.f32.mrf.mxu0
    %v3285 = vadd.f32 0.0, %v3284
    %v3286 = vpop.f32.mrf.mxu0
    %3287 = vdwg.mxu0
    %3288 = vmatpush.bf16.msra.mxu0 %v1948
    %3289 = vmatpush.bf16.msra.mxu0 %v1945
    %3290 = vmatpush.bf16.msra.mxu0 %v1942
    %3291 = vmatpush.bf16.msra.mxu0 %v1939
    %3292 = vmatpush.bf16.msra.mxu0 %v1936
    %3293 = vmatpush.bf16.msra.mxu0 %v1933
    %3294 = vmatpush.bf16.msra.mxu0 %v1930
    %3295 = vmatpush.bf16.msra.mxu0 %v1927
    %3296 = vmatmul.bf16.gmra.mxu0 %v3208
    %v3297 = vpop.f32.mrf.mxu0
    %v3298 = vadd.f32 0.0, %v3297
    %v3299 = vpop.f32.mrf.mxu0
    %3300 = vdwg.mxu0
    %3301 = vmatpush.bf16.msra.mxu0 %v1949
    %3302 = vmatpush.bf16.msra.mxu0 %v1946
    %3303 = vmatpush.bf16.msra.mxu0 %v1943
    %3304 = vmatpush.bf16.msra.mxu0 %v1940
    %3305 = vmatpush.bf16.msra.mxu0 %v1937
    %3306 = vmatpush.bf16.msra.mxu0 %v1934
    %3307 = vmatpush.bf16.msra.mxu0 %v1931
    %3308 = vmatpush.bf16.msra.mxu0 %v1928
    %3309 = vmatmul.bf16.gmra.mxu0 %v3208
    %v3310 = vpop.f32.mrf.mxu0
    %v3311 = vadd.f32 0.0, %v3310
    %v3312 = vpop.f32.mrf.mxu0
    %3313 = vdwg.mxu0
    %3314 = vmatpush.bf16.msra.mxu0 %v1950
    %3315 = vmatpush.bf16.msra.mxu0 %v1947
    %3316 = vmatpush.bf16.msra.mxu0 %v1944
    %3317 = vmatpush.bf16.msra.mxu0 %v1941
    %3318 = vmatpush.bf16.msra.mxu0 %v1938
    %3319 = vmatpush.bf16.msra.mxu0 %v1935
    %3320 = vmatpush.bf16.msra.mxu0 %v1932
    %3321 = vmatpush.bf16.msra.mxu0 %v1929
    %3322 = vmatmul.bf16.gmra.mxu0 %v3208
    %v3323 = vpop.f32.mrf.mxu0
    %v3324 = vadd.f32 0.0, %v3323
    %v3325 = vpop.f32.mrf.mxu0
    %3326 = vdwg.mxu0
    %3327 = vmatpush.bf16.msra.mxu0 %v2115
    %3328 = vmatpush.bf16.msra.mxu0 %v2112
    %3329 = vmatpush.bf16.msra.mxu0 %v2109
    %3330 = vmatpush.bf16.msra.mxu0 %v2106
    %3331 = vmatpush.bf16.msra.mxu0 %v2103
    %3332 = vmatpush.bf16.msra.mxu0 %v2100
    %3333 = vmatpush.bf16.msra.mxu0 %v2097
    %3334 = vmatpush.bf16.msra.mxu0 %v2094
    %3335 = vmatmul.bf16.gmra.mxu0 %v3209
    %v3336 = vpop.f32.mrf.mxu0
    %v3337 = vadd.f32 0.0, %v3336
    %v3338 = vpop.f32.mrf.mxu0
    %3339 = vdwg.mxu0
    %3340 = vmatpush.bf16.msra.mxu0 %v2116
    %3341 = vmatpush.bf16.msra.mxu0 %v2113
    %3342 = vmatpush.bf16.msra.mxu0 %v2110
    %3343 = vmatpush.bf16.msra.mxu0 %v2107
    %3344 = vmatpush.bf16.msra.mxu0 %v2104
    %3345 = vmatpush.bf16.msra.mxu0 %v2101
    %3346 = vmatpush.bf16.msra.mxu0 %v2098
    %3347 = vmatpush.bf16.msra.mxu0 %v2095
    %3348 = vmatmul.bf16.gmra.mxu0 %v3209
    %v3349 = vpop.f32.mrf.mxu0
    %v3350 = vadd.f32 0.0, %v3349
    %v3351 = vpop.f32.mrf.mxu0
    %3352 = vdwg.mxu0
    %3353 = vmatpush.bf16.msra.mxu0 %v2117
    %3354 = vmatpush.bf16.msra.mxu0 %v2114
    %3355 = vmatpush.bf16.msra.mxu0 %v2111
    %3356 = vmatpush.bf16.msra.mxu0 %v2108
    %3357 = vmatpush.bf16.msra.mxu0 %v2105
    %3358 = vmatpush.bf16.msra.mxu0 %v2102
    %3359 = vmatpush.bf16.msra.mxu0 %v2099
    %3360 = vmatpush.bf16.msra.mxu0 %v2096
    %3361 = vmatmul.bf16.gmra.mxu0 %v3209
    %v3362 = vpop.f32.mrf.mxu0
    %v3363 = vadd.f32 0.0, %v3362
    %v3364 = vpop.f32.mrf.mxu0
    %3365 = vdwg.mxu0
    %v3366 = vadd.f32 %v3194, %v3220
    %v3367 = vadd.f32 %v3197, %v3259
    %v3368 = vadd.f32 %v3200, %v3298
    %v3369 = vadd.f32 %v3203, %v3337
    %v3370 = vxor.u32 %v3366, 2147483648
    %v3371 = vxor.u32 %v3367, 2147483648
    %v3372 = vxor.u32 %v3368, 2147483648
    %v3373 = vxor.u32 %v3369, 2147483648
    %v3374 = vmul.f32 %v3370, 1.442695
    %v3375 = vpow.pop %v3374
    %v3376 = vmul.f32 %v3371, 1.442695
    %v3377 = vpow.pop %v3376
    %v3378 = vmul.f32 %v3372, 1.442695
    %v3379 = vpow.pop %v3378
    %v3380 = vmul.f32 %v3373, 1.442695
    %v3381 = vpow.pop %v3380
    %v3382 = vadd.f32 %v3375, 1.0
    %v3383 = vadd.f32 %v3377, 1.0
    %v3384 = vadd.f32 %v3379, 1.0
    %v3385 = vadd.f32 %v3381, 1.0
    %v3386 = vrcp.pop %v3382
    %v3387 = vmul.f32 %v3382, %v3386
    %v3388 = vsub.f32 1.0, %v3387
    %v3389 = vmul.f32 %v3386, %v3388
    %v3390 = vadd.f32 %v3386, %v3389
    %vm3391 = vweird.f32 %v3382
    %vm3392 = vweird.f32 %v3386
    %vm3393 = vmor %vm3391, %vm3392
    %v3394 = vsel %vm3393, %v3386, %v3390
    %v3395 = vand.u32 2147483647, %v3382
    %vm3396 = vcmp.eq.f32.partialorder %v3395, 8.507059e+37
    %v3397 = vand.u32 %v3382, 2147483648
    %v3398 = vor.u32 1.1754944e-38, %v3397
    %v3399 = vsel %vm3396, %v3398, %v3394
    %v3400 = vmul.f32 1.0, %v3399
    %v3401 = vrcp.pop %v3383
    %v3402 = vmul.f32 %v3383, %v3401
    %v3403 = vsub.f32 1.0, %v3402
    %v3404 = vmul.f32 %v3401, %v3403
    %v3405 = vadd.f32 %v3401, %v3404
    %vm3406 = vweird.f32 %v3383
    %vm3407 = vweird.f32 %v3401
    %vm3408 = vmor %vm3406, %vm3407
    %v3409 = vsel %vm3408, %v3401, %v3405
    %v3410 = vand.u32 2147483647, %v3383
    %vm3411 = vcmp.eq.f32.partialorder %v3410, 8.507059e+37
    %v3412 = vand.u32 %v3383, 2147483648
    %v3413 = vor.u32 1.1754944e-38, %v3412
    %v3414 = vsel %vm3411, %v3413, %v3409
    %v3415 = vmul.f32 1.0, %v3414
    %v3416 = vrcp.pop %v3384
    %v3417 = vmul.f32 %v3384, %v3416
    %v3418 = vsub.f32 1.0, %v3417
    %v3419 = vmul.f32 %v3416, %v3418
    %v3420 = vadd.f32 %v3416, %v3419
    %vm3421 = vweird.f32 %v3384
    %vm3422 = vweird.f32 %v3416
    %vm3423 = vmor %vm3421, %vm3422
    %v3424 = vsel %vm3423, %v3416, %v3420
    %v3425 = vand.u32 2147483647, %v3384
    %vm3426 = vcmp.eq.f32.partialorder %v3425, 8.507059e+37
    %v3427 = vand.u32 %v3384, 2147483648
    %v3428 = vor.u32 1.1754944e-38, %v3427
    %v3429 = vsel %vm3426, %v3428, %v3424
    %v3430 = vmul.f32 1.0, %v3429
    %v3431 = vrcp.pop %v3385
    %v3432 = vmul.f32 %v3385, %v3431
    %v3433 = vsub.f32 1.0, %v3432
    %v3434 = vmul.f32 %v3431, %v3433
    %v3435 = vadd.f32 %v3431, %v3434
    %vm3436 = vweird.f32 %v3385
    %vm3437 = vweird.f32 %v3431
    %vm3438 = vmor %vm3436, %vm3437
    %v3439 = vsel %vm3438, %v3431, %v3435
    %v3440 = vand.u32 2147483647, %v3385
    %vm3441 = vcmp.eq.f32.partialorder %v3440, 8.507059e+37
    %v3442 = vand.u32 %v3385, 2147483648
    %v3443 = vor.u32 1.1754944e-38, %v3442
    %v3444 = vsel %vm3441, %v3443, %v3439
    %v3445 = vmul.f32 1.0, %v3444
    %v3446 = vadd.f32 %v3195, %v3233
    %v3447 = vadd.f32 %v3198, %v3272
    %v3448 = vadd.f32 %v3201, %v3311
    %v3449 = vadd.f32 %v3204, %v3350
    %v3450 = vxor.u32 %v3446, 2147483648
    %v3451 = vxor.u32 %v3447, 2147483648
    %v3452 = vxor.u32 %v3448, 2147483648
    %v3453 = vxor.u32 %v3449, 2147483648
    %v3454 = vmul.f32 %v3450, 1.442695
    %v3455 = vpow.pop %v3454
    %v3456 = vmul.f32 %v3451, 1.442695
    %v3457 = vpow.pop %v3456
    %v3458 = vmul.f32 %v3452, 1.442695
    %v3459 = vpow.pop %v3458
    %v3460 = vmul.f32 %v3453, 1.442695
    %v3461 = vpow.pop %v3460
    %v3462 = vadd.f32 %v3455, 1.0
    %v3463 = vadd.f32 %v3457, 1.0
    %v3464 = vadd.f32 %v3459, 1.0
    %v3465 = vadd.f32 %v3461, 1.0
    %v3466 = vrcp.pop %v3462
    %v3467 = vmul.f32 %v3462, %v3466
    %v3468 = vsub.f32 1.0, %v3467
    %v3469 = vmul.f32 %v3466, %v3468
    %v3470 = vadd.f32 %v3466, %v3469
    %vm3471 = vweird.f32 %v3462
    %vm3472 = vweird.f32 %v3466
    %vm3473 = vmor %vm3471, %vm3472
    %v3474 = vsel %vm3473, %v3466, %v3470
    %v3475 = vand.u32 2147483647, %v3462
    %vm3476 = vcmp.eq.f32.partialorder %v3475, 8.507059e+37
    %v3477 = vand.u32 %v3462, 2147483648
    %v3478 = vor.u32 1.1754944e-38, %v3477
    %v3479 = vsel %vm3476, %v3478, %v3474
    %v3480 = vmul.f32 1.0, %v3479
    %v3481 = vrcp.pop %v3463
    %v3482 = vmul.f32 %v3463, %v3481
    %v3483 = vsub.f32 1.0, %v3482
    %v3484 = vmul.f32 %v3481, %v3483
    %v3485 = vadd.f32 %v3481, %v3484
    %vm3486 = vweird.f32 %v3463
    %vm3487 = vweird.f32 %v3481
    %vm3488 = vmor %vm3486, %vm3487
    %v3489 = vsel %vm3488, %v3481, %v3485
    %v3490 = vand.u32 2147483647, %v3463
    %vm3491 = vcmp.eq.f32.partialorder %v3490, 8.507059e+37
    %v3492 = vand.u32 %v3463, 2147483648
    %v3493 = vor.u32 1.1754944e-38, %v3492
    %v3494 = vsel %vm3491, %v3493, %v3489
    %v3495 = vmul.f32 1.0, %v3494
    %v3496 = vrcp.pop %v3464
    %v3497 = vmul.f32 %v3464, %v3496
    %v3498 = vsub.f32 1.0, %v3497
    %v3499 = vmul.f32 %v3496, %v3498
    %v3500 = vadd.f32 %v3496, %v3499
    %vm3501 = vweird.f32 %v3464
    %vm3502 = vweird.f32 %v3496
    %vm3503 = vmor %vm3501, %vm3502
    %v3504 = vsel %vm3503, %v3496, %v3500
    %v3505 = vand.u32 2147483647, %v3464
    %vm3506 = vcmp.eq.f32.partialorder %v3505, 8.507059e+37
    %v3507 = vand.u32 %v3464, 2147483648
    %v3508 = vor.u32 1.1754944e-38, %v3507
    %v3509 = vsel %vm3506, %v3508, %v3504
    %v3510 = vmul.f32 1.0, %v3509
    %v3511 = vrcp.pop %v3465
    %v3512 = vmul.f32 %v3465, %v3511
    %v3513 = vsub.f32 1.0, %v3512
    %v3514 = vmul.f32 %v3511, %v3513
    %v3515 = vadd.f32 %v3511, %v3514
    %vm3516 = vweird.f32 %v3465
    %vm3517 = vweird.f32 %v3511
    %vm3518 = vmor %vm3516, %vm3517
    %v3519 = vsel %vm3518, %v3511, %v3515
    %v3520 = vand.u32 2147483647, %v3465
    %vm3521 = vcmp.eq.f32.partialorder %v3520, 8.507059e+37
    %v3522 = vand.u32 %v3465, 2147483648
    %v3523 = vor.u32 1.1754944e-38, %v3522
    %v3524 = vsel %vm3521, %v3523, %v3519
    %v3525 = vmul.f32 1.0, %v3524
    %v3526 = vadd.f32 %v3246, %v1490
    %v3527 = vadd.f32 %v3285, %v1491
    %v3528 = vadd.f32 %v3324, %v1492
    %v3529 = vadd.f32 %v3363, %v1493
    %v3530 = vmul.f32 %v3400, %v3526
    %v3531 = vmul.f32 %v3415, %v3527
    %v3532 = vmul.f32 %v3430, %v3528
    %v3533 = vmul.f32 %v3445, %v3529
    %v3534 = vadd.f32 %v3196, %v3530
    %v3535 = vadd.f32 %v3199, %v3531
    %v3536 = vadd.f32 %v3202, %v3532
    %v3537 = vadd.f32 %v3205, %v3533
    %v3538 = vtanh.pop %v3534
    %v3539 = vtanh.pop %v3535
    %v3540 = vtanh.pop %v3536
    %v3541 = vtanh.pop %v3537
    %v3542 = vsub.f32 1.0, %v3480
    %v3543 = vsub.f32 1.0, %v3495
    %v3544 = vsub.f32 1.0, %v3510
    %v3545 = vsub.f32 1.0, %v3525
    %v3546 = vmul.f32 %v3542, %v3538
    %v3547 = vmul.f32 %v3543, %v3539
    %v3548 = vmul.f32 %v3544, %v3540
    %v3549 = vmul.f32 %v3545, %v3541
    %v3550 = vmul.f32 %v3480, %v3187
    %v3551 = vmul.f32 %v3495, %v3188
    %v3552 = vmul.f32 %v3510, %v3189
    %v3553 = vmul.f32 %v3525, %v3190
    %v3554 = vadd.f32 %v3546, %v3550
    %v3555 = vadd.f32 %v3547, %v3551
    %v3556 = vadd.f32 %v3548, %v3552
    %v3557 = vadd.f32 %v3549, %v3553
    %vm3558 = vcmp.gt.s32.totalorder %v1478, 3
    %vm3559 = vcmp.gt.s32.totalorder %v1479, 3
    %vm3560 = vcmp.gt.s32.totalorder %v1480, 3
    %vm3561 = vcmp.gt.s32.totalorder %v1481, 3
    %v3562 = vsel %vm3558, 1, 0
    %v3563 = vsel %vm3559, 1, 0
    %v3564 = vsel %vm3560, 1, 0
    %v3565 = vsel %vm3561, 1, 0
    %3566 = vset.pattern.permute.xlu0 0
    %3567 = vperm.xlu0 %3566, %v3562
    %v3568 = vpop.permute.xlu0 %3567
    %3569 = vset.pattern.permute.xlu0 0
    %3570 = vperm.xlu0 %3569, %v3563
    %v3571 = vpop.permute.xlu0 %3570
    %3572 = vset.pattern.permute.xlu0 0
    %3573 = vperm.xlu0 %3572, %v3564
    %v3574 = vpop.permute.xlu0 %3573
    %3575 = vset.pattern.permute.xlu0 0
    %3576 = vperm.xlu0 %3575, %v3565
    %v3577 = vpop.permute.xlu0 %3576
    %vm3578 = vcmp.eq.s32.totalorder %v3568, 1
    %vm3579 = vcmp.eq.s32.totalorder %v3571, 1
    %vm3580 = vcmp.eq.s32.totalorder %v3574, 1
    %vm3581 = vcmp.eq.s32.totalorder %v3577, 1
    %v3582 = vsel %vm3578, %v3554, %v3187
    %v3583 = vsel %vm3579, %v3555, %v3188
    %v3584 = vsel %vm3580, %v3556, %v3189
    %v3585 = vsel %vm3581, %v3557, %v3190
    %s3586 = smul.u32 4, 3
    %s3587 = smul.addr %s3586, 8
    %s3588 = scalar_lea.vmem [#allocation2], %s3587
    %v3589 = vld [vmem:[%s3588] sm:$0xff]
    %v3590 = vld [vmem:[%s3588 + $0x8] sm:$0xff]
    %v3591 = vld [vmem:[%s3588 + $0x10] sm:$0xff]
    %v3592 = vld [vmem:[%s3588 + $0xc0] sm:$0xff]
    %v3593 = vld [vmem:[%s3588 + $0xc8] sm:$0xff]
    %v3594 = vld [vmem:[%s3588 + $0xd0] sm:$0xff]
    %v3595 = vld [vmem:[%s3588 + $0x180] sm:$0xff]
    %v3596 = vld [vmem:[%s3588 + $0x188] sm:$0xff]
    %v3597 = vld [vmem:[%s3588 + $0x190] sm:$0xff]
    %v3598 = vld [vmem:[%s3588 + $0x240] sm:$0xff]
    %v3599 = vld [vmem:[%s3588 + $0x248] sm:$0xff]
    %v3600 = vld [vmem:[%s3588 + $0x250] sm:$0xff]
    %v3601 = vpack.c.bf16 %v3582, %v3582
    %v3602 = vpack.c.bf16 %v3583, %v3583
    %v3603 = vpack.c.bf16 %v3584, %v3584
    %v3604 = vpack.c.bf16 %v3585, %v3585
    %3605 = vmatpush.bf16.msra.mxu0 %v1614
    %3606 = vmatpush.bf16.msra.mxu0 %v1611
    %3607 = vmatpush.bf16.msra.mxu0 %v1608
    %3608 = vmatpush.bf16.msra.mxu0 %v1605
    %3609 = vmatpush.bf16.msra.mxu0 %v1602
    %3610 = vmatpush.bf16.msra.mxu0 %v1599
    %3611 = vmatpush.bf16.msra.mxu0 %v1596
    %3612 = vmatpush.bf16.msra.mxu0 %v1593
    %3613 = vmatmul.bf16.gmra.mxu0 %v3601
    %v3614 = vpop.f32.mrf.mxu0
    %v3615 = vadd.f32 0.0, %v3614
    %v3616 = vpop.f32.mrf.mxu0
    %3617 = vdwg.mxu0
    %3618 = vmatpush.bf16.msra.mxu0 %v1615
    %3619 = vmatpush.bf16.msra.mxu0 %v1612
    %3620 = vmatpush.bf16.msra.mxu0 %v1609
    %3621 = vmatpush.bf16.msra.mxu0 %v1606
    %3622 = vmatpush.bf16.msra.mxu0 %v1603
    %3623 = vmatpush.bf16.msra.mxu0 %v1600
    %3624 = vmatpush.bf16.msra.mxu0 %v1597
    %3625 = vmatpush.bf16.msra.mxu0 %v1594
    %3626 = vmatmul.bf16.gmra.mxu0 %v3601
    %v3627 = vpop.f32.mrf.mxu0
    %v3628 = vadd.f32 0.0, %v3627
    %v3629 = vpop.f32.mrf.mxu0
    %3630 = vdwg.mxu0
    %3631 = vmatpush.bf16.msra.mxu0 %v1616
    %3632 = vmatpush.bf16.msra.mxu0 %v1613
    %3633 = vmatpush.bf16.msra.mxu0 %v1610
    %3634 = vmatpush.bf16.msra.mxu0 %v1607
    %3635 = vmatpush.bf16.msra.mxu0 %v1604
    %3636 = vmatpush.bf16.msra.mxu0 %v1601
    %3637 = vmatpush.bf16.msra.mxu0 %v1598
    %3638 = vmatpush.bf16.msra.mxu0 %v1595
    %3639 = vmatmul.bf16.gmra.mxu0 %v3601
    %v3640 = vpop.f32.mrf.mxu0
    %v3641 = vadd.f32 0.0, %v3640
    %v3642 = vpop.f32.mrf.mxu0
    %3643 = vdwg.mxu0
    %3644 = vmatpush.bf16.msra.mxu0 %v1781
    %3645 = vmatpush.bf16.msra.mxu0 %v1778
    %3646 = vmatpush.bf16.msra.mxu0 %v1775
    %3647 = vmatpush.bf16.msra.mxu0 %v1772
    %3648 = vmatpush.bf16.msra.mxu0 %v1769
    %3649 = vmatpush.bf16.msra.mxu0 %v1766
    %3650 = vmatpush.bf16.msra.mxu0 %v1763
    %3651 = vmatpush.bf16.msra.mxu0 %v1760
    %3652 = vmatmul.bf16.gmra.mxu0 %v3602
    %v3653 = vpop.f32.mrf.mxu0
    %v3654 = vadd.f32 0.0, %v3653
    %v3655 = vpop.f32.mrf.mxu0
    %3656 = vdwg.mxu0
    %3657 = vmatpush.bf16.msra.mxu0 %v1782
    %3658 = vmatpush.bf16.msra.mxu0 %v1779
    %3659 = vmatpush.bf16.msra.mxu0 %v1776
    %3660 = vmatpush.bf16.msra.mxu0 %v1773
    %3661 = vmatpush.bf16.msra.mxu0 %v1770
    %3662 = vmatpush.bf16.msra.mxu0 %v1767
    %3663 = vmatpush.bf16.msra.mxu0 %v1764
    %3664 = vmatpush.bf16.msra.mxu0 %v1761
    %3665 = vmatmul.bf16.gmra.mxu0 %v3602
    %v3666 = vpop.f32.mrf.mxu0
    %v3667 = vadd.f32 0.0, %v3666
    %v3668 = vpop.f32.mrf.mxu0
    %3669 = vdwg.mxu0
    %3670 = vmatpush.bf16.msra.mxu0 %v1783
    %3671 = vmatpush.bf16.msra.mxu0 %v1780
    %3672 = vmatpush.bf16.msra.mxu0 %v1777
    %3673 = vmatpush.bf16.msra.mxu0 %v1774
    %3674 = vmatpush.bf16.msra.mxu0 %v1771
    %3675 = vmatpush.bf16.msra.mxu0 %v1768
    %3676 = vmatpush.bf16.msra.mxu0 %v1765
    %3677 = vmatpush.bf16.msra.mxu0 %v1762
    %3678 = vmatmul.bf16.gmra.mxu0 %v3602
    %v3679 = vpop.f32.mrf.mxu0
    %v3680 = vadd.f32 0.0, %v3679
    %v3681 = vpop.f32.mrf.mxu0
    %3682 = vdwg.mxu0
    %3683 = vmatpush.bf16.msra.mxu0 %v1948
    %3684 = vmatpush.bf16.msra.mxu0 %v1945
    %3685 = vmatpush.bf16.msra.mxu0 %v1942
    %3686 = vmatpush.bf16.msra.mxu0 %v1939
    %3687 = vmatpush.bf16.msra.mxu0 %v1936
    %3688 = vmatpush.bf16.msra.mxu0 %v1933
    %3689 = vmatpush.bf16.msra.mxu0 %v1930
    %3690 = vmatpush.bf16.msra.mxu0 %v1927
    %3691 = vmatmul.bf16.gmra.mxu0 %v3603
    %v3692 = vpop.f32.mrf.mxu0
    %v3693 = vadd.f32 0.0, %v3692
    %v3694 = vpop.f32.mrf.mxu0
    %3695 = vdwg.mxu0
    %3696 = vmatpush.bf16.msra.mxu0 %v1949
    %3697 = vmatpush.bf16.msra.mxu0 %v1946
    %3698 = vmatpush.bf16.msra.mxu0 %v1943
    %3699 = vmatpush.bf16.msra.mxu0 %v1940
    %3700 = vmatpush.bf16.msra.mxu0 %v1937
    %3701 = vmatpush.bf16.msra.mxu0 %v1934
    %3702 = vmatpush.bf16.msra.mxu0 %v1931
    %3703 = vmatpush.bf16.msra.mxu0 %v1928
    %3704 = vmatmul.bf16.gmra.mxu0 %v3603
    %v3705 = vpop.f32.mrf.mxu0
    %v3706 = vadd.f32 0.0, %v3705
    %v3707 = vpop.f32.mrf.mxu0
    %3708 = vdwg.mxu0
    %3709 = vmatpush.bf16.msra.mxu0 %v1950
    %3710 = vmatpush.bf16.msra.mxu0 %v1947
    %3711 = vmatpush.bf16.msra.mxu0 %v1944
    %3712 = vmatpush.bf16.msra.mxu0 %v1941
    %3713 = vmatpush.bf16.msra.mxu0 %v1938
    %3714 = vmatpush.bf16.msra.mxu0 %v1935
    %3715 = vmatpush.bf16.msra.mxu0 %v1932
    %3716 = vmatpush.bf16.msra.mxu0 %v1929
    %3717 = vmatmul.bf16.gmra.mxu0 %v3603
    %v3718 = vpop.f32.mrf.mxu0
    %v3719 = vadd.f32 0.0, %v3718
    %v3720 = vpop.f32.mrf.mxu0
    %3721 = vdwg.mxu0
    %3722 = vmatpush.bf16.msra.mxu0 %v2115
    %3723 = vmatpush.bf16.msra.mxu0 %v2112
    %3724 = vmatpush.bf16.msra.mxu0 %v2109
    %3725 = vmatpush.bf16.msra.mxu0 %v2106
    %3726 = vmatpush.bf16.msra.mxu0 %v2103
    %3727 = vmatpush.bf16.msra.mxu0 %v2100
    %3728 = vmatpush.bf16.msra.mxu0 %v2097
    %3729 = vmatpush.bf16.msra.mxu0 %v2094
    %3730 = vmatmul.bf16.gmra.mxu0 %v3604
    %v3731 = vpop.f32.mrf.mxu0
    %v3732 = vadd.f32 0.0, %v3731
    %v3733 = vpop.f32.mrf.mxu0
    %3734 = vdwg.mxu0
    %3735 = vmatpush.bf16.msra.mxu0 %v2116
    %3736 = vmatpush.bf16.msra.mxu0 %v2113
    %3737 = vmatpush.bf16.msra.mxu0 %v2110
    %3738 = vmatpush.bf16.msra.mxu0 %v2107
    %3739 = vmatpush.bf16.msra.mxu0 %v2104
    %3740 = vmatpush.bf16.msra.mxu0 %v2101
    %3741 = vmatpush.bf16.msra.mxu0 %v2098
    %3742 = vmatpush.bf16.msra.mxu0 %v2095
    %3743 = vmatmul.bf16.gmra.mxu0 %v3604
    %v3744 = vpop.f32.mrf.mxu0
    %v3745 = vadd.f32 0.0, %v3744
    %v3746 = vpop.f32.mrf.mxu0
    %3747 = vdwg.mxu0
    %3748 = vmatpush.bf16.msra.mxu0 %v2117
    %3749 = vmatpush.bf16.msra.mxu0 %v2114
    %3750 = vmatpush.bf16.msra.mxu0 %v2111
    %3751 = vmatpush.bf16.msra.mxu0 %v2108
    %3752 = vmatpush.bf16.msra.mxu0 %v2105
    %3753 = vmatpush.bf16.msra.mxu0 %v2102
    %3754 = vmatpush.bf16.msra.mxu0 %v2099
    %3755 = vmatpush.bf16.msra.mxu0 %v2096
    %3756 = vmatmul.bf16.gmra.mxu0 %v3604
    %v3757 = vpop.f32.mrf.mxu0
    %v3758 = vadd.f32 0.0, %v3757
    %v3759 = vpop.f32.mrf.mxu0
    %3760 = vdwg.mxu0
    %v3761 = vadd.f32 %v3589, %v3615
    %v3762 = vadd.f32 %v3592, %v3654
    %v3763 = vadd.f32 %v3595, %v3693
    %v3764 = vadd.f32 %v3598, %v3732
    %v3765 = vxor.u32 %v3761, 2147483648
    %v3766 = vxor.u32 %v3762, 2147483648
    %v3767 = vxor.u32 %v3763, 2147483648
    %v3768 = vxor.u32 %v3764, 2147483648
    %v3769 = vmul.f32 %v3765, 1.442695
    %v3770 = vpow.pop %v3769
    %v3771 = vmul.f32 %v3766, 1.442695
    %v3772 = vpow.pop %v3771
    %v3773 = vmul.f32 %v3767, 1.442695
    %v3774 = vpow.pop %v3773
    %v3775 = vmul.f32 %v3768, 1.442695
    %v3776 = vpow.pop %v3775
    %v3777 = vadd.f32 %v3770, 1.0
    %v3778 = vadd.f32 %v3772, 1.0
    %v3779 = vadd.f32 %v3774, 1.0
    %v3780 = vadd.f32 %v3776, 1.0
    %v3781 = vrcp.pop %v3777
    %v3782 = vmul.f32 %v3777, %v3781
    %v3783 = vsub.f32 1.0, %v3782
    %v3784 = vmul.f32 %v3781, %v3783
    %v3785 = vadd.f32 %v3781, %v3784
    %vm3786 = vweird.f32 %v3777
    %vm3787 = vweird.f32 %v3781
    %vm3788 = vmor %vm3786, %vm3787
    %v3789 = vsel %vm3788, %v3781, %v3785
    %v3790 = vand.u32 2147483647, %v3777
    %vm3791 = vcmp.eq.f32.partialorder %v3790, 8.507059e+37
    %v3792 = vand.u32 %v3777, 2147483648
    %v3793 = vor.u32 1.1754944e-38, %v3792
    %v3794 = vsel %vm3791, %v3793, %v3789
    %v3795 = vmul.f32 1.0, %v3794
    %v3796 = vrcp.pop %v3778
    %v3797 = vmul.f32 %v3778, %v3796
    %v3798 = vsub.f32 1.0, %v3797
    %v3799 = vmul.f32 %v3796, %v3798
    %v3800 = vadd.f32 %v3796, %v3799
    %vm3801 = vweird.f32 %v3778
    %vm3802 = vweird.f32 %v3796
    %vm3803 = vmor %vm3801, %vm3802
    %v3804 = vsel %vm3803, %v3796, %v3800
    %v3805 = vand.u32 2147483647, %v3778
    %vm3806 = vcmp.eq.f32.partialorder %v3805, 8.507059e+37
    %v3807 = vand.u32 %v3778, 2147483648
    %v3808 = vor.u32 1.1754944e-38, %v3807
    %v3809 = vsel %vm3806, %v3808, %v3804
    %v3810 = vmul.f32 1.0, %v3809
    %v3811 = vrcp.pop %v3779
    %v3812 = vmul.f32 %v3779, %v3811
    %v3813 = vsub.f32 1.0, %v3812
    %v3814 = vmul.f32 %v3811, %v3813
    %v3815 = vadd.f32 %v3811, %v3814
    %vm3816 = vweird.f32 %v3779
    %vm3817 = vweird.f32 %v3811
    %vm3818 = vmor %vm3816, %vm3817
    %v3819 = vsel %vm3818, %v3811, %v3815
    %v3820 = vand.u32 2147483647, %v3779
    %vm3821 = vcmp.eq.f32.partialorder %v3820, 8.507059e+37
    %v3822 = vand.u32 %v3779, 2147483648
    %v3823 = vor.u32 1.1754944e-38, %v3822
    %v3824 = vsel %vm3821, %v3823, %v3819
    %v3825 = vmul.f32 1.0, %v3824
    %v3826 = vrcp.pop %v3780
    %v3827 = vmul.f32 %v3780, %v3826
    %v3828 = vsub.f32 1.0, %v3827
    %v3829 = vmul.f32 %v3826, %v3828
    %v3830 = vadd.f32 %v3826, %v3829
    %vm3831 = vweird.f32 %v3780
    %vm3832 = vweird.f32 %v3826
    %vm3833 = vmor %vm3831, %vm3832
    %v3834 = vsel %vm3833, %v3826, %v3830
    %v3835 = vand.u32 2147483647, %v3780
    %vm3836 = vcmp.eq.f32.partialorder %v3835, 8.507059e+37
    %v3837 = vand.u32 %v3780, 2147483648
    %v3838 = vor.u32 1.1754944e-38, %v3837
    %v3839 = vsel %vm3836, %v3838, %v3834
    %v3840 = vmul.f32 1.0, %v3839
    %v3841 = vadd.f32 %v3590, %v3628
    %v3842 = vadd.f32 %v3593, %v3667
    %v3843 = vadd.f32 %v3596, %v3706
    %v3844 = vadd.f32 %v3599, %v3745
    %v3845 = vxor.u32 %v3841, 2147483648
    %v3846 = vxor.u32 %v3842, 2147483648
    %v3847 = vxor.u32 %v3843, 2147483648
    %v3848 = vxor.u32 %v3844, 2147483648
    %v3849 = vmul.f32 %v3845, 1.442695
    %v3850 = vpow.pop %v3849
    %v3851 = vmul.f32 %v3846, 1.442695
    %v3852 = vpow.pop %v3851
    %v3853 = vmul.f32 %v3847, 1.442695
    %v3854 = vpow.pop %v3853
    %v3855 = vmul.f32 %v3848, 1.442695
    %v3856 = vpow.pop %v3855
    %v3857 = vadd.f32 %v3850, 1.0
    %v3858 = vadd.f32 %v3852, 1.0
    %v3859 = vadd.f32 %v3854, 1.0
    %v3860 = vadd.f32 %v3856, 1.0
    %v3861 = vrcp.pop %v3857
    %v3862 = vmul.f32 %v3857, %v3861
    %v3863 = vsub.f32 1.0, %v3862
    %v3864 = vmul.f32 %v3861, %v3863
    %v3865 = vadd.f32 %v3861, %v3864
    %vm3866 = vweird.f32 %v3857
    %vm3867 = vweird.f32 %v3861
    %vm3868 = vmor %vm3866, %vm3867
    %v3869 = vsel %vm3868, %v3861, %v3865
    %v3870 = vand.u32 2147483647, %v3857
    %vm3871 = vcmp.eq.f32.partialorder %v3870, 8.507059e+37
    %v3872 = vand.u32 %v3857, 2147483648
    %v3873 = vor.u32 1.1754944e-38, %v3872
    %v3874 = vsel %vm3871, %v3873, %v3869
    %v3875 = vmul.f32 1.0, %v3874
    %v3876 = vrcp.pop %v3858
    %v3877 = vmul.f32 %v3858, %v3876
    %v3878 = vsub.f32 1.0, %v3877
    %v3879 = vmul.f32 %v3876, %v3878
    %v3880 = vadd.f32 %v3876, %v3879
    %vm3881 = vweird.f32 %v3858
    %vm3882 = vweird.f32 %v3876
    %vm3883 = vmor %vm3881, %vm3882
    %v3884 = vsel %vm3883, %v3876, %v3880
    %v3885 = vand.u32 2147483647, %v3858
    %vm3886 = vcmp.eq.f32.partialorder %v3885, 8.507059e+37
    %v3887 = vand.u32 %v3858, 2147483648
    %v3888 = vor.u32 1.1754944e-38, %v3887
    %v3889 = vsel %vm3886, %v3888, %v3884
    %v3890 = vmul.f32 1.0, %v3889
    %v3891 = vrcp.pop %v3859
    %v3892 = vmul.f32 %v3859, %v3891
    %v3893 = vsub.f32 1.0, %v3892
    %v3894 = vmul.f32 %v3891, %v3893
    %v3895 = vadd.f32 %v3891, %v3894
    %vm3896 = vweird.f32 %v3859
    %vm3897 = vweird.f32 %v3891
    %vm3898 = vmor %vm3896, %vm3897
    %v3899 = vsel %vm3898, %v3891, %v3895
    %v3900 = vand.u32 2147483647, %v3859
    %vm3901 = vcmp.eq.f32.partialorder %v3900, 8.507059e+37
    %v3902 = vand.u32 %v3859, 2147483648
    %v3903 = vor.u32 1.1754944e-38, %v3902
    %v3904 = vsel %vm3901, %v3903, %v3899
    %v3905 = vmul.f32 1.0, %v3904
    %v3906 = vrcp.pop %v3860
    %v3907 = vmul.f32 %v3860, %v3906
    %v3908 = vsub.f32 1.0, %v3907
    %v3909 = vmul.f32 %v3906, %v3908
    %v3910 = vadd.f32 %v3906, %v3909
    %vm3911 = vweird.f32 %v3860
    %vm3912 = vweird.f32 %v3906
    %vm3913 = vmor %vm3911, %vm3912
    %v3914 = vsel %vm3913, %v3906, %v3910
    %v3915 = vand.u32 2147483647, %v3860
    %vm3916 = vcmp.eq.f32.partialorder %v3915, 8.507059e+37
    %v3917 = vand.u32 %v3860, 2147483648
    %v3918 = vor.u32 1.1754944e-38, %v3917
    %v3919 = vsel %vm3916, %v3918, %v3914
    %v3920 = vmul.f32 1.0, %v3919
    %v3921 = vadd.f32 %v3641, %v1490
    %v3922 = vadd.f32 %v3680, %v1491
    %v3923 = vadd.f32 %v3719, %v1492
    %v3924 = vadd.f32 %v3758, %v1493
    %v3925 = vmul.f32 %v3795, %v3921
    %v3926 = vmul.f32 %v3810, %v3922
    %v3927 = vmul.f32 %v3825, %v3923
    %v3928 = vmul.f32 %v3840, %v3924
    %v3929 = vadd.f32 %v3591, %v3925
    %v3930 = vadd.f32 %v3594, %v3926
    %v3931 = vadd.f32 %v3597, %v3927
    %v3932 = vadd.f32 %v3600, %v3928
    %v3933 = vtanh.pop %v3929
    %v3934 = vtanh.pop %v3930
    %v3935 = vtanh.pop %v3931
    %v3936 = vtanh.pop %v3932
    %v3937 = vsub.f32 1.0, %v3875
    %v3938 = vsub.f32 1.0, %v3890
    %v3939 = vsub.f32 1.0, %v3905
    %v3940 = vsub.f32 1.0, %v3920
    %v3941 = vmul.f32 %v3937, %v3933
    %v3942 = vmul.f32 %v3938, %v3934
    %v3943 = vmul.f32 %v3939, %v3935
    %v3944 = vmul.f32 %v3940, %v3936
    %v3945 = vmul.f32 %v3875, %v3582
    %v3946 = vmul.f32 %v3890, %v3583
    %v3947 = vmul.f32 %v3905, %v3584
    %v3948 = vmul.f32 %v3920, %v3585
    %v3949 = vadd.f32 %v3941, %v3945
    %v3950 = vadd.f32 %v3942, %v3946
    %v3951 = vadd.f32 %v3943, %v3947
    %v3952 = vadd.f32 %v3944, %v3948
    %vm3953 = vcmp.gt.s32.totalorder %v1478, 4
    %vm3954 = vcmp.gt.s32.totalorder %v1479, 4
    %vm3955 = vcmp.gt.s32.totalorder %v1480, 4
    %vm3956 = vcmp.gt.s32.totalorder %v1481, 4
    %v3957 = vsel %vm3953, 1, 0
    %v3958 = vsel %vm3954, 1, 0
    %v3959 = vsel %vm3955, 1, 0
    %v3960 = vsel %vm3956, 1, 0
    %3961 = vset.pattern.permute.xlu0 0
    %3962 = vperm.xlu0 %3961, %v3957
    %v3963 = vpop.permute.xlu0 %3962
    %3964 = vset.pattern.permute.xlu0 0
    %3965 = vperm.xlu0 %3964, %v3958
    %v3966 = vpop.permute.xlu0 %3965
    %3967 = vset.pattern.permute.xlu0 0
    %3968 = vperm.xlu0 %3967, %v3959
    %v3969 = vpop.permute.xlu0 %3968
    %3970 = vset.pattern.permute.xlu0 0
    %3971 = vperm.xlu0 %3970, %v3960
    %v3972 = vpop.permute.xlu0 %3971
    %vm3973 = vcmp.eq.s32.totalorder %v3963, 1
    %vm3974 = vcmp.eq.s32.totalorder %v3966, 1
    %vm3975 = vcmp.eq.s32.totalorder %v3969, 1
    %vm3976 = vcmp.eq.s32.totalorder %v3972, 1
    %v3977 = vsel %vm3973, %v3949, %v3582
    %v3978 = vsel %vm3974, %v3950, %v3583
    %v3979 = vsel %vm3975, %v3951, %v3584
    %v3980 = vsel %vm3976, %v3952, %v3585
    %s3981 = smul.u32 5, 3
    %s3982 = smul.addr %s3981, 8
    %s3983 = scalar_lea.vmem [#allocation2], %s3982
    %v3984 = vld [vmem:[%s3983] sm:$0xff]
    %v3985 = vld [vmem:[%s3983 + $0x8] sm:$0xff]
    %v3986 = vld [vmem:[%s3983 + $0x10] sm:$0xff]
    %v3987 = vld [vmem:[%s3983 + $0xc0] sm:$0xff]
    %v3988 = vld [vmem:[%s3983 + $0xc8] sm:$0xff]
    %v3989 = vld [vmem:[%s3983 + $0xd0] sm:$0xff]
    %v3990 = vld [vmem:[%s3983 + $0x180] sm:$0xff]
    %v3991 = vld [vmem:[%s3983 + $0x188] sm:$0xff]
    %v3992 = vld [vmem:[%s3983 + $0x190] sm:$0xff]
    %v3993 = vld [vmem:[%s3983 + $0x240] sm:$0xff]
    %v3994 = vld [vmem:[%s3983 + $0x248] sm:$0xff]
    %v3995 = vld [vmem:[%s3983 + $0x250] sm:$0xff]
    %v3996 = vpack.c.bf16 %v3977, %v3977
    %v3997 = vpack.c.bf16 %v3978, %v3978
    %v3998 = vpack.c.bf16 %v3979, %v3979
    %v3999 = vpack.c.bf16 %v3980, %v3980
    %4000 = vmatpush.bf16.msra.mxu0 %v1614
    %4001 = vmatpush.bf16.msra.mxu0 %v1611
    %4002 = vmatpush.bf16.msra.mxu0 %v1608
    %4003 = vmatpush.bf16.msra.mxu0 %v1605
    %4004 = vmatpush.bf16.msra.mxu0 %v1602
    %4005 = vmatpush.bf16.msra.mxu0 %v1599
    %4006 = vmatpush.bf16.msra.mxu0 %v1596
    %4007 = vmatpush.bf16.msra.mxu0 %v1593
    %4008 = vmatmul.bf16.gmra.mxu0 %v3996
    %v4009 = vpop.f32.mrf.mxu0
    %v4010 = vadd.f32 0.0, %v4009
    %v4011 = vpop.f32.mrf.mxu0
    %4012 = vdwg.mxu0
    %4013 = vmatpush.bf16.msra.mxu0 %v1615
    %4014 = vmatpush.bf16.msra.mxu0 %v1612
    %4015 = vmatpush.bf16.msra.mxu0 %v1609
    %4016 = vmatpush.bf16.msra.mxu0 %v1606
    %4017 = vmatpush.bf16.msra.mxu0 %v1603
    %4018 = vmatpush.bf16.msra.mxu0 %v1600
    %4019 = vmatpush.bf16.msra.mxu0 %v1597
    %4020 = vmatpush.bf16.msra.mxu0 %v1594
    %4021 = vmatmul.bf16.gmra.mxu0 %v3996
    %v4022 = vpop.f32.mrf.mxu0
    %v4023 = vadd.f32 0.0, %v4022
    %v4024 = vpop.f32.mrf.mxu0
    %4025 = vdwg.mxu0
    %4026 = vmatpush.bf16.msra.mxu0 %v1616
    %4027 = vmatpush.bf16.msra.mxu0 %v1613
    %4028 = vmatpush.bf16.msra.mxu0 %v1610
    %4029 = vmatpush.bf16.msra.mxu0 %v1607
    %4030 = vmatpush.bf16.msra.mxu0 %v1604
    %4031 = vmatpush.bf16.msra.mxu0 %v1601
    %4032 = vmatpush.bf16.msra.mxu0 %v1598
    %4033 = vmatpush.bf16.msra.mxu0 %v1595
    %4034 = vmatmul.bf16.gmra.mxu0 %v3996
    %v4035 = vpop.f32.mrf.mxu0
    %v4036 = vadd.f32 0.0, %v4035
    %v4037 = vpop.f32.mrf.mxu0
    %4038 = vdwg.mxu0
    %4039 = vmatpush.bf16.msra.mxu0 %v1781
    %4040 = vmatpush.bf16.msra.mxu0 %v1778
    %4041 = vmatpush.bf16.msra.mxu0 %v1775
    %4042 = vmatpush.bf16.msra.mxu0 %v1772
    %4043 = vmatpush.bf16.msra.mxu0 %v1769
    %4044 = vmatpush.bf16.msra.mxu0 %v1766
    %4045 = vmatpush.bf16.msra.mxu0 %v1763
    %4046 = vmatpush.bf16.msra.mxu0 %v1760
    %4047 = vmatmul.bf16.gmra.mxu0 %v3997
    %v4048 = vpop.f32.mrf.mxu0
    %v4049 = vadd.f32 0.0, %v4048
    %v4050 = vpop.f32.mrf.mxu0
    %4051 = vdwg.mxu0
    %4052 = vmatpush.bf16.msra.mxu0 %v1782
    %4053 = vmatpush.bf16.msra.mxu0 %v1779
    %4054 = vmatpush.bf16.msra.mxu0 %v1776
    %4055 = vmatpush.bf16.msra.mxu0 %v1773
    %4056 = vmatpush.bf16.msra.mxu0 %v1770
    %4057 = vmatpush.bf16.msra.mxu0 %v1767
    %4058 = vmatpush.bf16.msra.mxu0 %v1764
    %4059 = vmatpush.bf16.msra.mxu0 %v1761
    %4060 = vmatmul.bf16.gmra.mxu0 %v3997
    %v4061 = vpop.f32.mrf.mxu0
    %v4062 = vadd.f32 0.0, %v4061
    %v4063 = vpop.f32.mrf.mxu0
    %4064 = vdwg.mxu0
    %4065 = vmatpush.bf16.msra.mxu0 %v1783
    %4066 = vmatpush.bf16.msra.mxu0 %v1780
    %4067 = vmatpush.bf16.msra.mxu0 %v1777
    %4068 = vmatpush.bf16.msra.mxu0 %v1774
    %4069 = vmatpush.bf16.msra.mxu0 %v1771
    %4070 = vmatpush.bf16.msra.mxu0 %v1768
    %4071 = vmatpush.bf16.msra.mxu0 %v1765
    %4072 = vmatpush.bf16.msra.mxu0 %v1762
    %4073 = vmatmul.bf16.gmra.mxu0 %v3997
    %v4074 = vpop.f32.mrf.mxu0
    %v4075 = vadd.f32 0.0, %v4074
    %v4076 = vpop.f32.mrf.mxu0
    %4077 = vdwg.mxu0
    %4078 = vmatpush.bf16.msra.mxu0 %v1948
    %4079 = vmatpush.bf16.msra.mxu0 %v1945
    %4080 = vmatpush.bf16.msra.mxu0 %v1942
    %4081 = vmatpush.bf16.msra.mxu0 %v1939
    %4082 = vmatpush.bf16.msra.mxu0 %v1936
    %4083 = vmatpush.bf16.msra.mxu0 %v1933
    %4084 = vmatpush.bf16.msra.mxu0 %v1930
    %4085 = vmatpush.bf16.msra.mxu0 %v1927
    %4086 = vmatmul.bf16.gmra.mxu0 %v3998
    %v4087 = vpop.f32.mrf.mxu0
    %v4088 = vadd.f32 0.0, %v4087
    %v4089 = vpop.f32.mrf.mxu0
    %4090 = vdwg.mxu0
    %4091 = vmatpush.bf16.msra.mxu0 %v1949
    %4092 = vmatpush.bf16.msra.mxu0 %v1946
    %4093 = vmatpush.bf16.msra.mxu0 %v1943
    %4094 = vmatpush.bf16.msra.mxu0 %v1940
    %4095 = vmatpush.bf16.msra.mxu0 %v1937
    %4096 = vmatpush.bf16.msra.mxu0 %v1934
    %4097 = vmatpush.bf16.msra.mxu0 %v1931
    %4098 = vmatpush.bf16.msra.mxu0 %v1928
    %4099 = vmatmul.bf16.gmra.mxu0 %v3998
    %v4100 = vpop.f32.mrf.mxu0
    %v4101 = vadd.f32 0.0, %v4100
    %v4102 = vpop.f32.mrf.mxu0
    %4103 = vdwg.mxu0
    %4104 = vmatpush.bf16.msra.mxu0 %v1950
    %4105 = vmatpush.bf16.msra.mxu0 %v1947
    %4106 = vmatpush.bf16.msra.mxu0 %v1944
    %4107 = vmatpush.bf16.msra.mxu0 %v1941
    %4108 = vmatpush.bf16.msra.mxu0 %v1938
    %4109 = vmatpush.bf16.msra.mxu0 %v1935
    %4110 = vmatpush.bf16.msra.mxu0 %v1932
    %4111 = vmatpush.bf16.msra.mxu0 %v1929
    %4112 = vmatmul.bf16.gmra.mxu0 %v3998
    %v4113 = vpop.f32.mrf.mxu0
    %v4114 = vadd.f32 0.0, %v4113
    %v4115 = vpop.f32.mrf.mxu0
    %4116 = vdwg.mxu0
    %4117 = vmatpush.bf16.msra.mxu0 %v2115
    %4118 = vmatpush.bf16.msra.mxu0 %v2112
    %4119 = vmatpush.bf16.msra.mxu0 %v2109
    %4120 = vmatpush.bf16.msra.mxu0 %v2106
    %4121 = vmatpush.bf16.msra.mxu0 %v2103
    %4122 = vmatpush.bf16.msra.mxu0 %v2100
    %4123 = vmatpush.bf16.msra.mxu0 %v2097
    %4124 = vmatpush.bf16.msra.mxu0 %v2094
    %4125 = vmatmul.bf16.gmra.mxu0 %v3999
    %v4126 = vpop.f32.mrf.mxu0
    %v4127 = vadd.f32 0.0, %v4126
    %v4128 = vpop.f32.mrf.mxu0
    %4129 = vdwg.mxu0
    %4130 = vmatpush.bf16.msra.mxu0 %v2116
    %4131 = vmatpush.bf16.msra.mxu0 %v2113
    %4132 = vmatpush.bf16.msra.mxu0 %v2110
    %4133 = vmatpush.bf16.msra.mxu0 %v2107
    %4134 = vmatpush.bf16.msra.mxu0 %v2104
    %4135 = vmatpush.bf16.msra.mxu0 %v2101
    %4136 = vmatpush.bf16.msra.mxu0 %v2098
    %4137 = vmatpush.bf16.msra.mxu0 %v2095
    %4138 = vmatmul.bf16.gmra.mxu0 %v3999
    %v4139 = vpop.f32.mrf.mxu0
    %v4140 = vadd.f32 0.0, %v4139
    %v4141 = vpop.f32.mrf.mxu0
    %4142 = vdwg.mxu0
    %4143 = vmatpush.bf16.msra.mxu0 %v2117
    %4144 = vmatpush.bf16.msra.mxu0 %v2114
    %4145 = vmatpush.bf16.msra.mxu0 %v2111
    %4146 = vmatpush.bf16.msra.mxu0 %v2108
    %4147 = vmatpush.bf16.msra.mxu0 %v2105
    %4148 = vmatpush.bf16.msra.mxu0 %v2102
    %4149 = vmatpush.bf16.msra.mxu0 %v2099
    %4150 = vmatpush.bf16.msra.mxu0 %v2096
    %4151 = vmatmul.bf16.gmra.mxu0 %v3999
    %v4152 = vpop.f32.mrf.mxu0
    %v4153 = vadd.f32 0.0, %v4152
    %v4154 = vpop.f32.mrf.mxu0
    %4155 = vdwg.mxu0
    %v4156 = vadd.f32 %v3984, %v4010
    %v4157 = vadd.f32 %v3987, %v4049
    %v4158 = vadd.f32 %v3990, %v4088
    %v4159 = vadd.f32 %v3993, %v4127
    %v4160 = vxor.u32 %v4156, 2147483648
    %v4161 = vxor.u32 %v4157, 2147483648
    %v4162 = vxor.u32 %v4158, 2147483648
    %v4163 = vxor.u32 %v4159, 2147483648
    %v4164 = vmul.f32 %v4160, 1.442695
    %v4165 = vpow.pop %v4164
    %v4166 = vmul.f32 %v4161, 1.442695
    %v4167 = vpow.pop %v4166
    %v4168 = vmul.f32 %v4162, 1.442695
    %v4169 = vpow.pop %v4168
    %v4170 = vmul.f32 %v4163, 1.442695
    %v4171 = vpow.pop %v4170
    %v4172 = vadd.f32 %v4165, 1.0
    %v4173 = vadd.f32 %v4167, 1.0
    %v4174 = vadd.f32 %v4169, 1.0
    %v4175 = vadd.f32 %v4171, 1.0
    %v4176 = vrcp.pop %v4172
    %v4177 = vmul.f32 %v4172, %v4176
    %v4178 = vsub.f32 1.0, %v4177
    %v4179 = vmul.f32 %v4176, %v4178
    %v4180 = vadd.f32 %v4176, %v4179
    %vm4181 = vweird.f32 %v4172
    %vm4182 = vweird.f32 %v4176
    %vm4183 = vmor %vm4181, %vm4182
    %v4184 = vsel %vm4183, %v4176, %v4180
    %v4185 = vand.u32 2147483647, %v4172
    %vm4186 = vcmp.eq.f32.partialorder %v4185, 8.507059e+37
    %v4187 = vand.u32 %v4172, 2147483648
    %v4188 = vor.u32 1.1754944e-38, %v4187
    %v4189 = vsel %vm4186, %v4188, %v4184
    %v4190 = vmul.f32 1.0, %v4189
    %v4191 = vrcp.pop %v4173
    %v4192 = vmul.f32 %v4173, %v4191
    %v4193 = vsub.f32 1.0, %v4192
    %v4194 = vmul.f32 %v4191, %v4193
    %v4195 = vadd.f32 %v4191, %v4194
    %vm4196 = vweird.f32 %v4173
    %vm4197 = vweird.f32 %v4191
    %vm4198 = vmor %vm4196, %vm4197
    %v4199 = vsel %vm4198, %v4191, %v4195
    %v4200 = vand.u32 2147483647, %v4173
    %vm4201 = vcmp.eq.f32.partialorder %v4200, 8.507059e+37
    %v4202 = vand.u32 %v4173, 2147483648
    %v4203 = vor.u32 1.1754944e-38, %v4202
    %v4204 = vsel %vm4201, %v4203, %v4199
    %v4205 = vmul.f32 1.0, %v4204
    %v4206 = vrcp.pop %v4174
    %v4207 = vmul.f32 %v4174, %v4206
    %v4208 = vsub.f32 1.0, %v4207
    %v4209 = vmul.f32 %v4206, %v4208
    %v4210 = vadd.f32 %v4206, %v4209
    %vm4211 = vweird.f32 %v4174
    %vm4212 = vweird.f32 %v4206
    %vm4213 = vmor %vm4211, %vm4212
    %v4214 = vsel %vm4213, %v4206, %v4210
    %v4215 = vand.u32 2147483647, %v4174
    %vm4216 = vcmp.eq.f32.partialorder %v4215, 8.507059e+37
    %v4217 = vand.u32 %v4174, 2147483648
    %v4218 = vor.u32 1.1754944e-38, %v4217
    %v4219 = vsel %vm4216, %v4218, %v4214
    %v4220 = vmul.f32 1.0, %v4219
    %v4221 = vrcp.pop %v4175
    %v4222 = vmul.f32 %v4175, %v4221
    %v4223 = vsub.f32 1.0, %v4222
    %v4224 = vmul.f32 %v4221, %v4223
    %v4225 = vadd.f32 %v4221, %v4224
    %vm4226 = vweird.f32 %v4175
    %vm4227 = vweird.f32 %v4221
    %vm4228 = vmor %vm4226, %vm4227
    %v4229 = vsel %vm4228, %v4221, %v4225
    %v4230 = vand.u32 2147483647, %v4175
    %vm4231 = vcmp.eq.f32.partialorder %v4230, 8.507059e+37
    %v4232 = vand.u32 %v4175, 2147483648
    %v4233 = vor.u32 1.1754944e-38, %v4232
    %v4234 = vsel %vm4231, %v4233, %v4229
    %v4235 = vmul.f32 1.0, %v4234
    %v4236 = vadd.f32 %v3985, %v4023
    %v4237 = vadd.f32 %v3988, %v4062
    %v4238 = vadd.f32 %v3991, %v4101
    %v4239 = vadd.f32 %v3994, %v4140
    %v4240 = vxor.u32 %v4236, 2147483648
    %v4241 = vxor.u32 %v4237, 2147483648
    %v4242 = vxor.u32 %v4238, 2147483648
    %v4243 = vxor.u32 %v4239, 2147483648
    %v4244 = vmul.f32 %v4240, 1.442695
    %v4245 = vpow.pop %v4244
    %v4246 = vmul.f32 %v4241, 1.442695
    %v4247 = vpow.pop %v4246
    %v4248 = vmul.f32 %v4242, 1.442695
    %v4249 = vpow.pop %v4248
    %v4250 = vmul.f32 %v4243, 1.442695
    %v4251 = vpow.pop %v4250
    %v4252 = vadd.f32 %v4245, 1.0
    %v4253 = vadd.f32 %v4247, 1.0
    %v4254 = vadd.f32 %v4249, 1.0
    %v4255 = vadd.f32 %v4251, 1.0
    %v4256 = vrcp.pop %v4252
    %v4257 = vmul.f32 %v4252, %v4256
    %v4258 = vsub.f32 1.0, %v4257
    %v4259 = vmul.f32 %v4256, %v4258
    %v4260 = vadd.f32 %v4256, %v4259
    %vm4261 = vweird.f32 %v4252
    %vm4262 = vweird.f32 %v4256
    %vm4263 = vmor %vm4261, %vm4262
    %v4264 = vsel %vm4263, %v4256, %v4260
    %v4265 = vand.u32 2147483647, %v4252
    %vm4266 = vcmp.eq.f32.partialorder %v4265, 8.507059e+37
    %v4267 = vand.u32 %v4252, 2147483648
    %v4268 = vor.u32 1.1754944e-38, %v4267
    %v4269 = vsel %vm4266, %v4268, %v4264
    %v4270 = vmul.f32 1.0, %v4269
    %v4271 = vrcp.pop %v4253
    %v4272 = vmul.f32 %v4253, %v4271
    %v4273 = vsub.f32 1.0, %v4272
    %v4274 = vmul.f32 %v4271, %v4273
    %v4275 = vadd.f32 %v4271, %v4274
    %vm4276 = vweird.f32 %v4253
    %vm4277 = vweird.f32 %v4271
    %vm4278 = vmor %vm4276, %vm4277
    %v4279 = vsel %vm4278, %v4271, %v4275
    %v4280 = vand.u32 2147483647, %v4253
    %vm4281 = vcmp.eq.f32.partialorder %v4280, 8.507059e+37
    %v4282 = vand.u32 %v4253, 2147483648
    %v4283 = vor.u32 1.1754944e-38, %v4282
    %v4284 = vsel %vm4281, %v4283, %v4279
    %v4285 = vmul.f32 1.0, %v4284
    %v4286 = vrcp.pop %v4254
    %v4287 = vmul.f32 %v4254, %v4286
    %v4288 = vsub.f32 1.0, %v4287
    %v4289 = vmul.f32 %v4286, %v4288
    %v4290 = vadd.f32 %v4286, %v4289
    %vm4291 = vweird.f32 %v4254
    %vm4292 = vweird.f32 %v4286
    %vm4293 = vmor %vm4291, %vm4292
    %v4294 = vsel %vm4293, %v4286, %v4290
    %v4295 = vand.u32 2147483647, %v4254
    %vm4296 = vcmp.eq.f32.partialorder %v4295, 8.507059e+37
    %v4297 = vand.u32 %v4254, 2147483648
    %v4298 = vor.u32 1.1754944e-38, %v4297
    %v4299 = vsel %vm4296, %v4298, %v4294
    %v4300 = vmul.f32 1.0, %v4299
    %v4301 = vrcp.pop %v4255
    %v4302 = vmul.f32 %v4255, %v4301
    %v4303 = vsub.f32 1.0, %v4302
    %v4304 = vmul.f32 %v4301, %v4303
    %v4305 = vadd.f32 %v4301, %v4304
    %vm4306 = vweird.f32 %v4255
    %vm4307 = vweird.f32 %v4301
    %vm4308 = vmor %vm4306, %vm4307
    %v4309 = vsel %vm4308, %v4301, %v4305
    %v4310 = vand.u32 2147483647, %v4255
    %vm4311 = vcmp.eq.f32.partialorder %v4310, 8.507059e+37
    %v4312 = vand.u32 %v4255, 2147483648
    %v4313 = vor.u32 1.1754944e-38, %v4312
    %v4314 = vsel %vm4311, %v4313, %v4309
    %v4315 = vmul.f32 1.0, %v4314
    %v4316 = vadd.f32 %v4036, %v1490
    %v4317 = vadd.f32 %v4075, %v1491
    %v4318 = vadd.f32 %v4114, %v1492
    %v4319 = vadd.f32 %v4153, %v1493
    %v4320 = vmul.f32 %v4190, %v4316
    %v4321 = vmul.f32 %v4205, %v4317
    %v4322 = vmul.f32 %v4220, %v4318
    %v4323 = vmul.f32 %v4235, %v4319
    %v4324 = vadd.f32 %v3986, %v4320
    %v4325 = vadd.f32 %v3989, %v4321
    %v4326 = vadd.f32 %v3992, %v4322
    %v4327 = vadd.f32 %v3995, %v4323
    %v4328 = vtanh.pop %v4324
    %v4329 = vtanh.pop %v4325
    %v4330 = vtanh.pop %v4326
    %v4331 = vtanh.pop %v4327
    %v4332 = vsub.f32 1.0, %v4270
    %v4333 = vsub.f32 1.0, %v4285
    %v4334 = vsub.f32 1.0, %v4300
    %v4335 = vsub.f32 1.0, %v4315
    %v4336 = vmul.f32 %v4332, %v4328
    %v4337 = vmul.f32 %v4333, %v4329
    %v4338 = vmul.f32 %v4334, %v4330
    %v4339 = vmul.f32 %v4335, %v4331
    %v4340 = vmul.f32 %v4270, %v3977
    %v4341 = vmul.f32 %v4285, %v3978
    %v4342 = vmul.f32 %v4300, %v3979
    %v4343 = vmul.f32 %v4315, %v3980
    %v4344 = vadd.f32 %v4336, %v4340
    %v4345 = vadd.f32 %v4337, %v4341
    %v4346 = vadd.f32 %v4338, %v4342
    %v4347 = vadd.f32 %v4339, %v4343
    %vm4348 = vcmp.gt.s32.totalorder %v1478, 5
    %vm4349 = vcmp.gt.s32.totalorder %v1479, 5
    %vm4350 = vcmp.gt.s32.totalorder %v1480, 5
    %vm4351 = vcmp.gt.s32.totalorder %v1481, 5
    %v4352 = vsel %vm4348, 1, 0
    %v4353 = vsel %vm4349, 1, 0
    %v4354 = vsel %vm4350, 1, 0
    %v4355 = vsel %vm4351, 1, 0
    %4356 = vset.pattern.permute.xlu0 0
    %4357 = vperm.xlu0 %4356, %v4352
    %v4358 = vpop.permute.xlu0 %4357
    %4359 = vset.pattern.permute.xlu0 0
    %4360 = vperm.xlu0 %4359, %v4353
    %v4361 = vpop.permute.xlu0 %4360
    %4362 = vset.pattern.permute.xlu0 0
    %4363 = vperm.xlu0 %4362, %v4354
    %v4364 = vpop.permute.xlu0 %4363
    %4365 = vset.pattern.permute.xlu0 0
    %4366 = vperm.xlu0 %4365, %v4355
    %v4367 = vpop.permute.xlu0 %4366
    %vm4368 = vcmp.eq.s32.totalorder %v4358, 1
    %vm4369 = vcmp.eq.s32.totalorder %v4361, 1
    %vm4370 = vcmp.eq.s32.totalorder %v4364, 1
    %vm4371 = vcmp.eq.s32.totalorder %v4367, 1
    %v4372 = vsel %vm4368, %v4344, %v3977
    %v4373 = vsel %vm4369, %v4345, %v3978
    %v4374 = vsel %vm4370, %v4346, %v3979
    %v4375 = vsel %vm4371, %v4347, %v3980
    %s4376 = smul.u32 6, 3
    %s4377 = smul.addr %s4376, 8
    %s4378 = scalar_lea.vmem [#allocation2], %s4377
    %v4379 = vld [vmem:[%s4378] sm:$0xff]
    %v4380 = vld [vmem:[%s4378 + $0x8] sm:$0xff]
    %v4381 = vld [vmem:[%s4378 + $0x10] sm:$0xff]
    %v4382 = vld [vmem:[%s4378 + $0xc0] sm:$0xff]
    %v4383 = vld [vmem:[%s4378 + $0xc8] sm:$0xff]
    %v4384 = vld [vmem:[%s4378 + $0xd0] sm:$0xff]
    %v4385 = vld [vmem:[%s4378 + $0x180] sm:$0xff]
    %v4386 = vld [vmem:[%s4378 + $0x188] sm:$0xff]
    %v4387 = vld [vmem:[%s4378 + $0x190] sm:$0xff]
    %v4388 = vld [vmem:[%s4378 + $0x240] sm:$0xff]
    %v4389 = vld [vmem:[%s4378 + $0x248] sm:$0xff]
    %v4390 = vld [vmem:[%s4378 + $0x250] sm:$0xff]
    %v4391 = vpack.c.bf16 %v4372, %v4372
    %v4392 = vpack.c.bf16 %v4373, %v4373
    %v4393 = vpack.c.bf16 %v4374, %v4374
    %v4394 = vpack.c.bf16 %v4375, %v4375
    %4395 = vmatpush.bf16.msra.mxu0 %v1614
    %4396 = vmatpush.bf16.msra.mxu0 %v1611
    %4397 = vmatpush.bf16.msra.mxu0 %v1608
    %4398 = vmatpush.bf16.msra.mxu0 %v1605
    %4399 = vmatpush.bf16.msra.mxu0 %v1602
    %4400 = vmatpush.bf16.msra.mxu0 %v1599
    %4401 = vmatpush.bf16.msra.mxu0 %v1596
    %4402 = vmatpush.bf16.msra.mxu0 %v1593
    %4403 = vmatmul.bf16.gmra.mxu0 %v4391
    %v4404 = vpop.f32.mrf.mxu0
    %v4405 = vadd.f32 0.0, %v4404
    %v4406 = vpop.f32.mrf.mxu0
    %4407 = vdwg.mxu0
    %4408 = vmatpush.bf16.msra.mxu0 %v1615
    %4409 = vmatpush.bf16.msra.mxu0 %v1612
    %4410 = vmatpush.bf16.msra.mxu0 %v1609
    %4411 = vmatpush.bf16.msra.mxu0 %v1606
    %4412 = vmatpush.bf16.msra.mxu0 %v1603
    %4413 = vmatpush.bf16.msra.mxu0 %v1600
    %4414 = vmatpush.bf16.msra.mxu0 %v1597
    %4415 = vmatpush.bf16.msra.mxu0 %v1594
    %4416 = vmatmul.bf16.gmra.mxu0 %v4391
    %v4417 = vpop.f32.mrf.mxu0
    %v4418 = vadd.f32 0.0, %v4417
    %v4419 = vpop.f32.mrf.mxu0
    %4420 = vdwg.mxu0
    %4421 = vmatpush.bf16.msra.mxu0 %v1616
    %4422 = vmatpush.bf16.msra.mxu0 %v1613
    %4423 = vmatpush.bf16.msra.mxu0 %v1610
    %4424 = vmatpush.bf16.msra.mxu0 %v1607
    %4425 = vmatpush.bf16.msra.mxu0 %v1604
    %4426 = vmatpush.bf16.msra.mxu0 %v1601
    %4427 = vmatpush.bf16.msra.mxu0 %v1598
    %4428 = vmatpush.bf16.msra.mxu0 %v1595
    %4429 = vmatmul.bf16.gmra.mxu0 %v4391
    %v4430 = vpop.f32.mrf.mxu0
    %v4431 = vadd.f32 0.0, %v4430
    %v4432 = vpop.f32.mrf.mxu0
    %4433 = vdwg.mxu0
    %4434 = vmatpush.bf16.msra.mxu0 %v1781
    %4435 = vmatpush.bf16.msra.mxu0 %v1778
    %4436 = vmatpush.bf16.msra.mxu0 %v1775
    %4437 = vmatpush.bf16.msra.mxu0 %v1772
    %4438 = vmatpush.bf16.msra.mxu0 %v1769
    %4439 = vmatpush.bf16.msra.mxu0 %v1766
    %4440 = vmatpush.bf16.msra.mxu0 %v1763
    %4441 = vmatpush.bf16.msra.mxu0 %v1760
    %4442 = vmatmul.bf16.gmra.mxu0 %v4392
    %v4443 = vpop.f32.mrf.mxu0
    %v4444 = vadd.f32 0.0, %v4443
    %v4445 = vpop.f32.mrf.mxu0
    %4446 = vdwg.mxu0
    %4447 = vmatpush.bf16.msra.mxu0 %v1782
    %4448 = vmatpush.bf16.msra.mxu0 %v1779
    %4449 = vmatpush.bf16.msra.mxu0 %v1776
    %4450 = vmatpush.bf16.msra.mxu0 %v1773
    %4451 = vmatpush.bf16.msra.mxu0 %v1770
    %4452 = vmatpush.bf16.msra.mxu0 %v1767
    %4453 = vmatpush.bf16.msra.mxu0 %v1764
    %4454 = vmatpush.bf16.msra.mxu0 %v1761
    %4455 = vmatmul.bf16.gmra.mxu0 %v4392
    %v4456 = vpop.f32.mrf.mxu0
    %v4457 = vadd.f32 0.0, %v4456
    %v4458 = vpop.f32.mrf.mxu0
    %4459 = vdwg.mxu0
    %4460 = vmatpush.bf16.msra.mxu0 %v1783
    %4461 = vmatpush.bf16.msra.mxu0 %v1780
    %4462 = vmatpush.bf16.msra.mxu0 %v1777
    %4463 = vmatpush.bf16.msra.mxu0 %v1774
    %4464 = vmatpush.bf16.msra.mxu0 %v1771
    %4465 = vmatpush.bf16.msra.mxu0 %v1768
    %4466 = vmatpush.bf16.msra.mxu0 %v1765
    %4467 = vmatpush.bf16.msra.mxu0 %v1762
    %4468 = vmatmul.bf16.gmra.mxu0 %v4392
    %v4469 = vpop.f32.mrf.mxu0
    %v4470 = vadd.f32 0.0, %v4469
    %v4471 = vpop.f32.mrf.mxu0
    %4472 = vdwg.mxu0
    %4473 = vmatpush.bf16.msra.mxu0 %v1948
    %4474 = vmatpush.bf16.msra.mxu0 %v1945
    %4475 = vmatpush.bf16.msra.mxu0 %v1942
    %4476 = vmatpush.bf16.msra.mxu0 %v1939
    %4477 = vmatpush.bf16.msra.mxu0 %v1936
    %4478 = vmatpush.bf16.msra.mxu0 %v1933
    %4479 = vmatpush.bf16.msra.mxu0 %v1930
    %4480 = vmatpush.bf16.msra.mxu0 %v1927
    %4481 = vmatmul.bf16.gmra.mxu0 %v4393
    %v4482 = vpop.f32.mrf.mxu0
    %v4483 = vadd.f32 0.0, %v4482
    %v4484 = vpop.f32.mrf.mxu0
    %4485 = vdwg.mxu0
    %4486 = vmatpush.bf16.msra.mxu0 %v1949
    %4487 = vmatpush.bf16.msra.mxu0 %v1946
    %4488 = vmatpush.bf16.msra.mxu0 %v1943
    %4489 = vmatpush.bf16.msra.mxu0 %v1940
    %4490 = vmatpush.bf16.msra.mxu0 %v1937
    %4491 = vmatpush.bf16.msra.mxu0 %v1934
    %4492 = vmatpush.bf16.msra.mxu0 %v1931
    %4493 = vmatpush.bf16.msra.mxu0 %v1928
    %4494 = vmatmul.bf16.gmra.mxu0 %v4393
    %v4495 = vpop.f32.mrf.mxu0
    %v4496 = vadd.f32 0.0, %v4495
    %v4497 = vpop.f32.mrf.mxu0
    %4498 = vdwg.mxu0
    %4499 = vmatpush.bf16.msra.mxu0 %v1950
    %4500 = vmatpush.bf16.msra.mxu0 %v1947
    %4501 = vmatpush.bf16.msra.mxu0 %v1944
    %4502 = vmatpush.bf16.msra.mxu0 %v1941
    %4503 = vmatpush.bf16.msra.mxu0 %v1938
    %4504 = vmatpush.bf16.msra.mxu0 %v1935
    %4505 = vmatpush.bf16.msra.mxu0 %v1932
    %4506 = vmatpush.bf16.msra.mxu0 %v1929
    %4507 = vmatmul.bf16.gmra.mxu0 %v4393
    %v4508 = vpop.f32.mrf.mxu0
    %v4509 = vadd.f32 0.0, %v4508
    %v4510 = vpop.f32.mrf.mxu0
    %4511 = vdwg.mxu0
    %4512 = vmatpush.bf16.msra.mxu0 %v2115
    %4513 = vmatpush.bf16.msra.mxu0 %v2112
    %4514 = vmatpush.bf16.msra.mxu0 %v2109
    %4515 = vmatpush.bf16.msra.mxu0 %v2106
    %4516 = vmatpush.bf16.msra.mxu0 %v2103
    %4517 = vmatpush.bf16.msra.mxu0 %v2100
    %4518 = vmatpush.bf16.msra.mxu0 %v2097
    %4519 = vmatpush.bf16.msra.mxu0 %v2094
    %4520 = vmatmul.bf16.gmra.mxu0 %v4394
    %v4521 = vpop.f32.mrf.mxu0
    %v4522 = vadd.f32 0.0, %v4521
    %v4523 = vpop.f32.mrf.mxu0
    %4524 = vdwg.mxu0
    %4525 = vmatpush.bf16.msra.mxu0 %v2116
    %4526 = vmatpush.bf16.msra.mxu0 %v2113
    %4527 = vmatpush.bf16.msra.mxu0 %v2110
    %4528 = vmatpush.bf16.msra.mxu0 %v2107
    %4529 = vmatpush.bf16.msra.mxu0 %v2104
    %4530 = vmatpush.bf16.msra.mxu0 %v2101
    %4531 = vmatpush.bf16.msra.mxu0 %v2098
    %4532 = vmatpush.bf16.msra.mxu0 %v2095
    %4533 = vmatmul.bf16.gmra.mxu0 %v4394
    %v4534 = vpop.f32.mrf.mxu0
    %v4535 = vadd.f32 0.0, %v4534
    %v4536 = vpop.f32.mrf.mxu0
    %4537 = vdwg.mxu0
    %4538 = vmatpush.bf16.msra.mxu0 %v2117
    %4539 = vmatpush.bf16.msra.mxu0 %v2114
    %4540 = vmatpush.bf16.msra.mxu0 %v2111
    %4541 = vmatpush.bf16.msra.mxu0 %v2108
    %4542 = vmatpush.bf16.msra.mxu0 %v2105
    %4543 = vmatpush.bf16.msra.mxu0 %v2102
    %4544 = vmatpush.bf16.msra.mxu0 %v2099
    %4545 = vmatpush.bf16.msra.mxu0 %v2096
    %4546 = vmatmul.bf16.gmra.mxu0 %v4394
    %v4547 = vpop.f32.mrf.mxu0
    %v4548 = vadd.f32 0.0, %v4547
    %v4549 = vpop.f32.mrf.mxu0
    %4550 = vdwg.mxu0
    %v4551 = vadd.f32 %v4379, %v4405
    %v4552 = vadd.f32 %v4382, %v4444
    %v4553 = vadd.f32 %v4385, %v4483
    %v4554 = vadd.f32 %v4388, %v4522
    %v4555 = vxor.u32 %v4551, 2147483648
    %v4556 = vxor.u32 %v4552, 2147483648
    %v4557 = vxor.u32 %v4553, 2147483648
    %v4558 = vxor.u32 %v4554, 2147483648
    %v4559 = vmul.f32 %v4555, 1.442695
    %v4560 = vpow.pop %v4559
    %v4561 = vmul.f32 %v4556, 1.442695
    %v4562 = vpow.pop %v4561
    %v4563 = vmul.f32 %v4557, 1.442695
    %v4564 = vpow.pop %v4563
    %v4565 = vmul.f32 %v4558, 1.442695
    %v4566 = vpow.pop %v4565
    %v4567 = vadd.f32 %v4560, 1.0
    %v4568 = vadd.f32 %v4562, 1.0
    %v4569 = vadd.f32 %v4564, 1.0
    %v4570 = vadd.f32 %v4566, 1.0
    %v4571 = vrcp.pop %v4567
    %v4572 = vmul.f32 %v4567, %v4571
    %v4573 = vsub.f32 1.0, %v4572
    %v4574 = vmul.f32 %v4571, %v4573
    %v4575 = vadd.f32 %v4571, %v4574
    %vm4576 = vweird.f32 %v4567
    %vm4577 = vweird.f32 %v4571
    %vm4578 = vmor %vm4576, %vm4577
    %v4579 = vsel %vm4578, %v4571, %v4575
    %v4580 = vand.u32 2147483647, %v4567
    %vm4581 = vcmp.eq.f32.partialorder %v4580, 8.507059e+37
    %v4582 = vand.u32 %v4567, 2147483648
    %v4583 = vor.u32 1.1754944e-38, %v4582
    %v4584 = vsel %vm4581, %v4583, %v4579
    %v4585 = vmul.f32 1.0, %v4584
    %v4586 = vrcp.pop %v4568
    %v4587 = vmul.f32 %v4568, %v4586
    %v4588 = vsub.f32 1.0, %v4587
    %v4589 = vmul.f32 %v4586, %v4588
    %v4590 = vadd.f32 %v4586, %v4589
    %vm4591 = vweird.f32 %v4568
    %vm4592 = vweird.f32 %v4586
    %vm4593 = vmor %vm4591, %vm4592
    %v4594 = vsel %vm4593, %v4586, %v4590
    %v4595 = vand.u32 2147483647, %v4568
    %vm4596 = vcmp.eq.f32.partialorder %v4595, 8.507059e+37
    %v4597 = vand.u32 %v4568, 2147483648
    %v4598 = vor.u32 1.1754944e-38, %v4597
    %v4599 = vsel %vm4596, %v4598, %v4594
    %v4600 = vmul.f32 1.0, %v4599
    %v4601 = vrcp.pop %v4569
    %v4602 = vmul.f32 %v4569, %v4601
    %v4603 = vsub.f32 1.0, %v4602
    %v4604 = vmul.f32 %v4601, %v4603
    %v4605 = vadd.f32 %v4601, %v4604
    %vm4606 = vweird.f32 %v4569
    %vm4607 = vweird.f32 %v4601
    %vm4608 = vmor %vm4606, %vm4607
    %v4609 = vsel %vm4608, %v4601, %v4605
    %v4610 = vand.u32 2147483647, %v4569
    %vm4611 = vcmp.eq.f32.partialorder %v4610, 8.507059e+37
    %v4612 = vand.u32 %v4569, 2147483648
    %v4613 = vor.u32 1.1754944e-38, %v4612
    %v4614 = vsel %vm4611, %v4613, %v4609
    %v4615 = vmul.f32 1.0, %v4614
    %v4616 = vrcp.pop %v4570
    %v4617 = vmul.f32 %v4570, %v4616
    %v4618 = vsub.f32 1.0, %v4617
    %v4619 = vmul.f32 %v4616, %v4618
    %v4620 = vadd.f32 %v4616, %v4619
    %vm4621 = vweird.f32 %v4570
    %vm4622 = vweird.f32 %v4616
    %vm4623 = vmor %vm4621, %vm4622
    %v4624 = vsel %vm4623, %v4616, %v4620
    %v4625 = vand.u32 2147483647, %v4570
    %vm4626 = vcmp.eq.f32.partialorder %v4625, 8.507059e+37
    %v4627 = vand.u32 %v4570, 2147483648
    %v4628 = vor.u32 1.1754944e-38, %v4627
    %v4629 = vsel %vm4626, %v4628, %v4624
    %v4630 = vmul.f32 1.0, %v4629
    %v4631 = vadd.f32 %v4380, %v4418
    %v4632 = vadd.f32 %v4383, %v4457
    %v4633 = vadd.f32 %v4386, %v4496
    %v4634 = vadd.f32 %v4389, %v4535
    %v4635 = vxor.u32 %v4631, 2147483648
    %v4636 = vxor.u32 %v4632, 2147483648
    %v4637 = vxor.u32 %v4633, 2147483648
    %v4638 = vxor.u32 %v4634, 2147483648
    %v4639 = vmul.f32 %v4635, 1.442695
    %v4640 = vpow.pop %v4639
    %v4641 = vmul.f32 %v4636, 1.442695
    %v4642 = vpow.pop %v4641
    %v4643 = vmul.f32 %v4637, 1.442695
    %v4644 = vpow.pop %v4643
    %v4645 = vmul.f32 %v4638, 1.442695
    %v4646 = vpow.pop %v4645
    %v4647 = vadd.f32 %v4640, 1.0
    %v4648 = vadd.f32 %v4642, 1.0
    %v4649 = vadd.f32 %v4644, 1.0
    %v4650 = vadd.f32 %v4646, 1.0
    %v4651 = vrcp.pop %v4647
    %v4652 = vmul.f32 %v4647, %v4651
    %v4653 = vsub.f32 1.0, %v4652
    %v4654 = vmul.f32 %v4651, %v4653
    %v4655 = vadd.f32 %v4651, %v4654
    %vm4656 = vweird.f32 %v4647
    %vm4657 = vweird.f32 %v4651
    %vm4658 = vmor %vm4656, %vm4657
    %v4659 = vsel %vm4658, %v4651, %v4655
    %v4660 = vand.u32 2147483647, %v4647
    %vm4661 = vcmp.eq.f32.partialorder %v4660, 8.507059e+37
    %v4662 = vand.u32 %v4647, 2147483648
    %v4663 = vor.u32 1.1754944e-38, %v4662
    %v4664 = vsel %vm4661, %v4663, %v4659
    %v4665 = vmul.f32 1.0, %v4664
    %v4666 = vrcp.pop %v4648
    %v4667 = vmul.f32 %v4648, %v4666
    %v4668 = vsub.f32 1.0, %v4667
    %v4669 = vmul.f32 %v4666, %v4668
    %v4670 = vadd.f32 %v4666, %v4669
    %vm4671 = vweird.f32 %v4648
    %vm4672 = vweird.f32 %v4666
    %vm4673 = vmor %vm4671, %vm4672
    %v4674 = vsel %vm4673, %v4666, %v4670
    %v4675 = vand.u32 2147483647, %v4648
    %vm4676 = vcmp.eq.f32.partialorder %v4675, 8.507059e+37
    %v4677 = vand.u32 %v4648, 2147483648
    %v4678 = vor.u32 1.1754944e-38, %v4677
    %v4679 = vsel %vm4676, %v4678, %v4674
    %v4680 = vmul.f32 1.0, %v4679
    %v4681 = vrcp.pop %v4649
    %v4682 = vmul.f32 %v4649, %v4681
    %v4683 = vsub.f32 1.0, %v4682
    %v4684 = vmul.f32 %v4681, %v4683
    %v4685 = vadd.f32 %v4681, %v4684
    %vm4686 = vweird.f32 %v4649
    %vm4687 = vweird.f32 %v4681
    %vm4688 = vmor %vm4686, %vm4687
    %v4689 = vsel %vm4688, %v4681, %v4685
    %v4690 = vand.u32 2147483647, %v4649
    %vm4691 = vcmp.eq.f32.partialorder %v4690, 8.507059e+37
    %v4692 = vand.u32 %v4649, 2147483648
    %v4693 = vor.u32 1.1754944e-38, %v4692
    %v4694 = vsel %vm4691, %v4693, %v4689
    %v4695 = vmul.f32 1.0, %v4694
    %v4696 = vrcp.pop %v4650
    %v4697 = vmul.f32 %v4650, %v4696
    %v4698 = vsub.f32 1.0, %v4697
    %v4699 = vmul.f32 %v4696, %v4698
    %v4700 = vadd.f32 %v4696, %v4699
    %vm4701 = vweird.f32 %v4650
    %vm4702 = vweird.f32 %v4696
    %vm4703 = vmor %vm4701, %vm4702
    %v4704 = vsel %vm4703, %v4696, %v4700
    %v4705 = vand.u32 2147483647, %v4650
    %vm4706 = vcmp.eq.f32.partialorder %v4705, 8.507059e+37
    %v4707 = vand.u32 %v4650, 2147483648
    %v4708 = vor.u32 1.1754944e-38, %v4707
    %v4709 = vsel %vm4706, %v4708, %v4704
    %v4710 = vmul.f32 1.0, %v4709
    %v4711 = vadd.f32 %v4431, %v1490
    %v4712 = vadd.f32 %v4470, %v1491
    %v4713 = vadd.f32 %v4509, %v1492
    %v4714 = vadd.f32 %v4548, %v1493
    %v4715 = vmul.f32 %v4585, %v4711
    %v4716 = vmul.f32 %v4600, %v4712
    %v4717 = vmul.f32 %v4615, %v4713
    %v4718 = vmul.f32 %v4630, %v4714
    %v4719 = vadd.f32 %v4381, %v4715
    %v4720 = vadd.f32 %v4384, %v4716
    %v4721 = vadd.f32 %v4387, %v4717
    %v4722 = vadd.f32 %v4390, %v4718
    %v4723 = vtanh.pop %v4719
    %v4724 = vtanh.pop %v4720
    %v4725 = vtanh.pop %v4721
    %v4726 = vtanh.pop %v4722
    %v4727 = vsub.f32 1.0, %v4665
    %v4728 = vsub.f32 1.0, %v4680
    %v4729 = vsub.f32 1.0, %v4695
    %v4730 = vsub.f32 1.0, %v4710
    %v4731 = vmul.f32 %v4727, %v4723
    %v4732 = vmul.f32 %v4728, %v4724
    %v4733 = vmul.f32 %v4729, %v4725
    %v4734 = vmul.f32 %v4730, %v4726
    %v4735 = vmul.f32 %v4665, %v4372
    %v4736 = vmul.f32 %v4680, %v4373
    %v4737 = vmul.f32 %v4695, %v4374
    %v4738 = vmul.f32 %v4710, %v4375
    %v4739 = vadd.f32 %v4731, %v4735
    %v4740 = vadd.f32 %v4732, %v4736
    %v4741 = vadd.f32 %v4733, %v4737
    %v4742 = vadd.f32 %v4734, %v4738
    %vm4743 = vcmp.gt.s32.totalorder %v1478, 6
    %vm4744 = vcmp.gt.s32.totalorder %v1479, 6
    %vm4745 = vcmp.gt.s32.totalorder %v1480, 6
    %vm4746 = vcmp.gt.s32.totalorder %v1481, 6
    %v4747 = vsel %vm4743, 1, 0
    %v4748 = vsel %vm4744, 1, 0
    %v4749 = vsel %vm4745, 1, 0
    %v4750 = vsel %vm4746, 1, 0
    %4751 = vset.pattern.permute.xlu0 0
    %4752 = vperm.xlu0 %4751, %v4747
    %v4753 = vpop.permute.xlu0 %4752
    %4754 = vset.pattern.permute.xlu0 0
    %4755 = vperm.xlu0 %4754, %v4748
    %v4756 = vpop.permute.xlu0 %4755
    %4757 = vset.pattern.permute.xlu0 0
    %4758 = vperm.xlu0 %4757, %v4749
    %v4759 = vpop.permute.xlu0 %4758
    %4760 = vset.pattern.permute.xlu0 0
    %4761 = vperm.xlu0 %4760, %v4750
    %v4762 = vpop.permute.xlu0 %4761
    %vm4763 = vcmp.eq.s32.totalorder %v4753, 1
    %vm4764 = vcmp.eq.s32.totalorder %v4756, 1
    %vm4765 = vcmp.eq.s32.totalorder %v4759, 1
    %vm4766 = vcmp.eq.s32.totalorder %v4762, 1
    %v4767 = vsel %vm4763, %v4739, %v4372
    %v4768 = vsel %vm4764, %v4740, %v4373
    %v4769 = vsel %vm4765, %v4741, %v4374
    %v4770 = vsel %vm4766, %v4742, %v4375
    %s4771 = smul.u32 7, 3
    %s4772 = smul.addr %s4771, 8
    %s4773 = scalar_lea.vmem [#allocation2], %s4772
    %v4774 = vld [vmem:[%s4773] sm:$0xff]
    %v4775 = vld [vmem:[%s4773 + $0x8] sm:$0xff]
    %v4776 = vld [vmem:[%s4773 + $0x10] sm:$0xff]
    %v4777 = vld [vmem:[%s4773 + $0xc0] sm:$0xff]
    %v4778 = vld [vmem:[%s4773 + $0xc8] sm:$0xff]
    %v4779 = vld [vmem:[%s4773 + $0xd0] sm:$0xff]
    %v4780 = vld [vmem:[%s4773 + $0x180] sm:$0xff]
    %v4781 = vld [vmem:[%s4773 + $0x188] sm:$0xff]
    %v4782 = vld [vmem:[%s4773 + $0x190] sm:$0xff]
    %v4783 = vld [vmem:[%s4773 + $0x240] sm:$0xff]
    %v4784 = vld [vmem:[%s4773 + $0x248] sm:$0xff]
    %v4785 = vld [vmem:[%s4773 + $0x250] sm:$0xff]
    %v4786 = vpack.c.bf16 %v4767, %v4767
    %v4787 = vpack.c.bf16 %v4768, %v4768
    %v4788 = vpack.c.bf16 %v4769, %v4769
    %v4789 = vpack.c.bf16 %v4770, %v4770
    %4790 = vmatpush.bf16.msra.mxu0 %v1614
    %4791 = vmatpush.bf16.msra.mxu0 %v1611
    %4792 = vmatpush.bf16.msra.mxu0 %v1608
    %4793 = vmatpush.bf16.msra.mxu0 %v1605
    %4794 = vmatpush.bf16.msra.mxu0 %v1602
    %4795 = vmatpush.bf16.msra.mxu0 %v1599
    %4796 = vmatpush.bf16.msra.mxu0 %v1596
    %4797 = vmatpush.bf16.msra.mxu0 %v1593
    %4798 = vmatmul.bf16.gmra.mxu0 %v4786
    %v4799 = vpop.f32.mrf.mxu0
    %v4800 = vadd.f32 0.0, %v4799
    %v4801 = vpop.f32.mrf.mxu0
    %4802 = vdwg.mxu0
    %4803 = vmatpush.bf16.msra.mxu0 %v1615
    %4804 = vmatpush.bf16.msra.mxu0 %v1612
    %4805 = vmatpush.bf16.msra.mxu0 %v1609
    %4806 = vmatpush.bf16.msra.mxu0 %v1606
    %4807 = vmatpush.bf16.msra.mxu0 %v1603
    %4808 = vmatpush.bf16.msra.mxu0 %v1600
    %4809 = vmatpush.bf16.msra.mxu0 %v1597
    %4810 = vmatpush.bf16.msra.mxu0 %v1594
    %4811 = vmatmul.bf16.gmra.mxu0 %v4786
    %v4812 = vpop.f32.mrf.mxu0
    %v4813 = vadd.f32 0.0, %v4812
    %v4814 = vpop.f32.mrf.mxu0
    %4815 = vdwg.mxu0
    %4816 = vmatpush.bf16.msra.mxu0 %v1616
    %4817 = vmatpush.bf16.msra.mxu0 %v1613
    %4818 = vmatpush.bf16.msra.mxu0 %v1610
    %4819 = vmatpush.bf16.msra.mxu0 %v1607
    %4820 = vmatpush.bf16.msra.mxu0 %v1604
    %4821 = vmatpush.bf16.msra.mxu0 %v1601
    %4822 = vmatpush.bf16.msra.mxu0 %v1598
    %4823 = vmatpush.bf16.msra.mxu0 %v1595
    %4824 = vmatmul.bf16.gmra.mxu0 %v4786
    %v4825 = vpop.f32.mrf.mxu0
    %v4826 = vadd.f32 0.0, %v4825
    %v4827 = vpop.f32.mrf.mxu0
    %4828 = vdwg.mxu0
    %4829 = vmatpush.bf16.msra.mxu0 %v1781
    %4830 = vmatpush.bf16.msra.mxu0 %v1778
    %4831 = vmatpush.bf16.msra.mxu0 %v1775
    %4832 = vmatpush.bf16.msra.mxu0 %v1772
    %4833 = vmatpush.bf16.msra.mxu0 %v1769
    %4834 = vmatpush.bf16.msra.mxu0 %v1766
    %4835 = vmatpush.bf16.msra.mxu0 %v1763
    %4836 = vmatpush.bf16.msra.mxu0 %v1760
    %4837 = vmatmul.bf16.gmra.mxu0 %v4787
    %v4838 = vpop.f32.mrf.mxu0
    %v4839 = vadd.f32 0.0, %v4838
    %v4840 = vpop.f32.mrf.mxu0
    %4841 = vdwg.mxu0
    %4842 = vmatpush.bf16.msra.mxu0 %v1782
    %4843 = vmatpush.bf16.msra.mxu0 %v1779
    %4844 = vmatpush.bf16.msra.mxu0 %v1776
    %4845 = vmatpush.bf16.msra.mxu0 %v1773
    %4846 = vmatpush.bf16.msra.mxu0 %v1770
    %4847 = vmatpush.bf16.msra.mxu0 %v1767
    %4848 = vmatpush.bf16.msra.mxu0 %v1764
    %4849 = vmatpush.bf16.msra.mxu0 %v1761
    %4850 = vmatmul.bf16.gmra.mxu0 %v4787
    %v4851 = vpop.f32.mrf.mxu0
    %v4852 = vadd.f32 0.0, %v4851
    %v4853 = vpop.f32.mrf.mxu0
    %4854 = vdwg.mxu0
    %4855 = vmatpush.bf16.msra.mxu0 %v1783
    %4856 = vmatpush.bf16.msra.mxu0 %v1780
    %4857 = vmatpush.bf16.msra.mxu0 %v1777
    %4858 = vmatpush.bf16.msra.mxu0 %v1774
    %4859 = vmatpush.bf16.msra.mxu0 %v1771
    %4860 = vmatpush.bf16.msra.mxu0 %v1768
    %4861 = vmatpush.bf16.msra.mxu0 %v1765
    %4862 = vmatpush.bf16.msra.mxu0 %v1762
    %4863 = vmatmul.bf16.gmra.mxu0 %v4787
    %v4864 = vpop.f32.mrf.mxu0
    %v4865 = vadd.f32 0.0, %v4864
    %v4866 = vpop.f32.mrf.mxu0
    %4867 = vdwg.mxu0
    %4868 = vmatpush.bf16.msra.mxu0 %v1948
    %4869 = vmatpush.bf16.msra.mxu0 %v1945
    %4870 = vmatpush.bf16.msra.mxu0 %v1942
    %4871 = vmatpush.bf16.msra.mxu0 %v1939
    %4872 = vmatpush.bf16.msra.mxu0 %v1936
    %4873 = vmatpush.bf16.msra.mxu0 %v1933
    %4874 = vmatpush.bf16.msra.mxu0 %v1930
    %4875 = vmatpush.bf16.msra.mxu0 %v1927
    %4876 = vmatmul.bf16.gmra.mxu0 %v4788
    %v4877 = vpop.f32.mrf.mxu0
    %v4878 = vadd.f32 0.0, %v4877
    %v4879 = vpop.f32.mrf.mxu0
    %4880 = vdwg.mxu0
    %4881 = vmatpush.bf16.msra.mxu0 %v1949
    %4882 = vmatpush.bf16.msra.mxu0 %v1946
    %4883 = vmatpush.bf16.msra.mxu0 %v1943
    %4884 = vmatpush.bf16.msra.mxu0 %v1940
    %4885 = vmatpush.bf16.msra.mxu0 %v1937
    %4886 = vmatpush.bf16.msra.mxu0 %v1934
    %4887 = vmatpush.bf16.msra.mxu0 %v1931
    %4888 = vmatpush.bf16.msra.mxu0 %v1928
    %4889 = vmatmul.bf16.gmra.mxu0 %v4788
    %v4890 = vpop.f32.mrf.mxu0
    %v4891 = vadd.f32 0.0, %v4890
    %v4892 = vpop.f32.mrf.mxu0
    %4893 = vdwg.mxu0
    %4894 = vmatpush.bf16.msra.mxu0 %v1950
    %4895 = vmatpush.bf16.msra.mxu0 %v1947
    %4896 = vmatpush.bf16.msra.mxu0 %v1944
    %4897 = vmatpush.bf16.msra.mxu0 %v1941
    %4898 = vmatpush.bf16.msra.mxu0 %v1938
    %4899 = vmatpush.bf16.msra.mxu0 %v1935
    %4900 = vmatpush.bf16.msra.mxu0 %v1932
    %4901 = vmatpush.bf16.msra.mxu0 %v1929
    %4902 = vmatmul.bf16.gmra.mxu0 %v4788
    %v4903 = vpop.f32.mrf.mxu0
    %v4904 = vadd.f32 0.0, %v4903
    %v4905 = vpop.f32.mrf.mxu0
    %4906 = vdwg.mxu0
    %4907 = vmatpush.bf16.msra.mxu0 %v2115
    %4908 = vmatpush.bf16.msra.mxu0 %v2112
    %4909 = vmatpush.bf16.msra.mxu0 %v2109
    %4910 = vmatpush.bf16.msra.mxu0 %v2106
    %4911 = vmatpush.bf16.msra.mxu0 %v2103
    %4912 = vmatpush.bf16.msra.mxu0 %v2100
    %4913 = vmatpush.bf16.msra.mxu0 %v2097
    %4914 = vmatpush.bf16.msra.mxu0 %v2094
    %4915 = vmatmul.bf16.gmra.mxu0 %v4789
    %v4916 = vpop.f32.mrf.mxu0
    %v4917 = vadd.f32 0.0, %v4916
    %v4918 = vpop.f32.mrf.mxu0
    %4919 = vdwg.mxu0
    %4920 = vmatpush.bf16.msra.mxu0 %v2116
    %4921 = vmatpush.bf16.msra.mxu0 %v2113
    %4922 = vmatpush.bf16.msra.mxu0 %v2110
    %4923 = vmatpush.bf16.msra.mxu0 %v2107
    %4924 = vmatpush.bf16.msra.mxu0 %v2104
    %4925 = vmatpush.bf16.msra.mxu0 %v2101
    %4926 = vmatpush.bf16.msra.mxu0 %v2098
    %4927 = vmatpush.bf16.msra.mxu0 %v2095
    %4928 = vmatmul.bf16.gmra.mxu0 %v4789
    %v4929 = vpop.f32.mrf.mxu0
    %v4930 = vadd.f32 0.0, %v4929
    %v4931 = vpop.f32.mrf.mxu0
    %4932 = vdwg.mxu0
    %4933 = vmatpush.bf16.msra.mxu0 %v2117
    %4934 = vmatpush.bf16.msra.mxu0 %v2114
    %4935 = vmatpush.bf16.msra.mxu0 %v2111
    %4936 = vmatpush.bf16.msra.mxu0 %v2108
    %4937 = vmatpush.bf16.msra.mxu0 %v2105
    %4938 = vmatpush.bf16.msra.mxu0 %v2102
    %4939 = vmatpush.bf16.msra.mxu0 %v2099
    %4940 = vmatpush.bf16.msra.mxu0 %v2096
    %4941 = vmatmul.bf16.gmra.mxu0 %v4789
    %v4942 = vpop.f32.mrf.mxu0
    %v4943 = vadd.f32 0.0, %v4942
    %v4944 = vpop.f32.mrf.mxu0
    %4945 = vdwg.mxu0
    %v4946 = vadd.f32 %v4774, %v4800
    %v4947 = vadd.f32 %v4777, %v4839
    %v4948 = vadd.f32 %v4780, %v4878
    %v4949 = vadd.f32 %v4783, %v4917
    %v4950 = vxor.u32 %v4946, 2147483648
    %v4951 = vxor.u32 %v4947, 2147483648
    %v4952 = vxor.u32 %v4948, 2147483648
    %v4953 = vxor.u32 %v4949, 2147483648
    %v4954 = vmul.f32 %v4950, 1.442695
    %v4955 = vpow.pop %v4954
    %v4956 = vmul.f32 %v4951, 1.442695
    %v4957 = vpow.pop %v4956
    %v4958 = vmul.f32 %v4952, 1.442695
    %v4959 = vpow.pop %v4958
    %v4960 = vmul.f32 %v4953, 1.442695
    %v4961 = vpow.pop %v4960
    %v4962 = vadd.f32 %v4955, 1.0
    %v4963 = vadd.f32 %v4957, 1.0
    %v4964 = vadd.f32 %v4959, 1.0
    %v4965 = vadd.f32 %v4961, 1.0
    %v4966 = vrcp.pop %v4962
    %v4967 = vmul.f32 %v4962, %v4966
    %v4968 = vsub.f32 1.0, %v4967
    %v4969 = vmul.f32 %v4966, %v4968
    %v4970 = vadd.f32 %v4966, %v4969
    %vm4971 = vweird.f32 %v4962
    %vm4972 = vweird.f32 %v4966
    %vm4973 = vmor %vm4971, %vm4972
    %v4974 = vsel %vm4973, %v4966, %v4970
    %v4975 = vand.u32 2147483647, %v4962
    %vm4976 = vcmp.eq.f32.partialorder %v4975, 8.507059e+37
    %v4977 = vand.u32 %v4962, 2147483648
    %v4978 = vor.u32 1.1754944e-38, %v4977
    %v4979 = vsel %vm4976, %v4978, %v4974
    %v4980 = vmul.f32 1.0, %v4979
    %v4981 = vrcp.pop %v4963
    %v4982 = vmul.f32 %v4963, %v4981
    %v4983 = vsub.f32 1.0, %v4982
    %v4984 = vmul.f32 %v4981, %v4983
    %v4985 = vadd.f32 %v4981, %v4984
    %vm4986 = vweird.f32 %v4963
    %vm4987 = vweird.f32 %v4981
    %vm4988 = vmor %vm4986, %vm4987
    %v4989 = vsel %vm4988, %v4981, %v4985
    %v4990 = vand.u32 2147483647, %v4963
    %vm4991 = vcmp.eq.f32.partialorder %v4990, 8.507059e+37
    %v4992 = vand.u32 %v4963, 2147483648
    %v4993 = vor.u32 1.1754944e-38, %v4992
    %v4994 = vsel %vm4991, %v4993, %v4989
    %v4995 = vmul.f32 1.0, %v4994
    %v4996 = vrcp.pop %v4964
    %v4997 = vmul.f32 %v4964, %v4996
    %v4998 = vsub.f32 1.0, %v4997
    %v4999 = vmul.f32 %v4996, %v4998
    %v5000 = vadd.f32 %v4996, %v4999
    %vm5001 = vweird.f32 %v4964
    %vm5002 = vweird.f32 %v4996
    %vm5003 = vmor %vm5001, %vm5002
    %v5004 = vsel %vm5003, %v4996, %v5000
    %v5005 = vand.u32 2147483647, %v4964
    %vm5006 = vcmp.eq.f32.partialorder %v5005, 8.507059e+37
    %v5007 = vand.u32 %v4964, 2147483648
    %v5008 = vor.u32 1.1754944e-38, %v5007
    %v5009 = vsel %vm5006, %v5008, %v5004
    %v5010 = vmul.f32 1.0, %v5009
    %v5011 = vrcp.pop %v4965
    %v5012 = vmul.f32 %v4965, %v5011
    %v5013 = vsub.f32 1.0, %v5012
    %v5014 = vmul.f32 %v5011, %v5013
    %v5015 = vadd.f32 %v5011, %v5014
    %vm5016 = vweird.f32 %v4965
    %vm5017 = vweird.f32 %v5011
    %vm5018 = vmor %vm5016, %vm5017
    %v5019 = vsel %vm5018, %v5011, %v5015
    %v5020 = vand.u32 2147483647, %v4965
    %vm5021 = vcmp.eq.f32.partialorder %v5020, 8.507059e+37
    %v5022 = vand.u32 %v4965, 2147483648
    %v5023 = vor.u32 1.1754944e-38, %v5022
    %v5024 = vsel %vm5021, %v5023, %v5019
    %v5025 = vmul.f32 1.0, %v5024
    %v5026 = vadd.f32 %v4775, %v4813
    %v5027 = vadd.f32 %v4778, %v4852
    %v5028 = vadd.f32 %v4781, %v4891
    %v5029 = vadd.f32 %v4784, %v4930
    %v5030 = vxor.u32 %v5026, 2147483648
    %v5031 = vxor.u32 %v5027, 2147483648
    %v5032 = vxor.u32 %v5028, 2147483648
    %v5033 = vxor.u32 %v5029, 2147483648
    %v5034 = vmul.f32 %v5030, 1.442695
    %v5035 = vpow.pop %v5034
    %v5036 = vmul.f32 %v5031, 1.442695
    %v5037 = vpow.pop %v5036
    %v5038 = vmul.f32 %v5032, 1.442695
    %v5039 = vpow.pop %v5038
    %v5040 = vmul.f32 %v5033, 1.442695
    %v5041 = vpow.pop %v5040
    %v5042 = vadd.f32 %v5035, 1.0
    %v5043 = vadd.f32 %v5037, 1.0
    %v5044 = vadd.f32 %v5039, 1.0
    %v5045 = vadd.f32 %v5041, 1.0
    %v5046 = vrcp.pop %v5042
    %v5047 = vmul.f32 %v5042, %v5046
    %v5048 = vsub.f32 1.0, %v5047
    %v5049 = vmul.f32 %v5046, %v5048
    %v5050 = vadd.f32 %v5046, %v5049
    %vm5051 = vweird.f32 %v5042
    %vm5052 = vweird.f32 %v5046
    %vm5053 = vmor %vm5051, %vm5052
    %v5054 = vsel %vm5053, %v5046, %v5050
    %v5055 = vand.u32 2147483647, %v5042
    %vm5056 = vcmp.eq.f32.partialorder %v5055, 8.507059e+37
    %v5057 = vand.u32 %v5042, 2147483648
    %v5058 = vor.u32 1.1754944e-38, %v5057
    %v5059 = vsel %vm5056, %v5058, %v5054
    %v5060 = vmul.f32 1.0, %v5059
    %v5061 = vrcp.pop %v5043
    %v5062 = vmul.f32 %v5043, %v5061
    %v5063 = vsub.f32 1.0, %v5062
    %v5064 = vmul.f32 %v5061, %v5063
    %v5065 = vadd.f32 %v5061, %v5064
    %vm5066 = vweird.f32 %v5043
    %vm5067 = vweird.f32 %v5061
    %vm5068 = vmor %vm5066, %vm5067
    %v5069 = vsel %vm5068, %v5061, %v5065
    %v5070 = vand.u32 2147483647, %v5043
    %vm5071 = vcmp.eq.f32.partialorder %v5070, 8.507059e+37
    %v5072 = vand.u32 %v5043, 2147483648
    %v5073 = vor.u32 1.1754944e-38, %v5072
    %v5074 = vsel %vm5071, %v5073, %v5069
    %v5075 = vmul.f32 1.0, %v5074
    %v5076 = vrcp.pop %v5044
    %v5077 = vmul.f32 %v5044, %v5076
    %v5078 = vsub.f32 1.0, %v5077
    %v5079 = vmul.f32 %v5076, %v5078
    %v5080 = vadd.f32 %v5076, %v5079
    %vm5081 = vweird.f32 %v5044
    %vm5082 = vweird.f32 %v5076
    %vm5083 = vmor %vm5081, %vm5082
    %v5084 = vsel %vm5083, %v5076, %v5080
    %v5085 = vand.u32 2147483647, %v5044
    %vm5086 = vcmp.eq.f32.partialorder %v5085, 8.507059e+37
    %v5087 = vand.u32 %v5044, 2147483648
    %v5088 = vor.u32 1.1754944e-38, %v5087
    %v5089 = vsel %vm5086, %v5088, %v5084
    %v5090 = vmul.f32 1.0, %v5089
    %v5091 = vrcp.pop %v5045
    %v5092 = vmul.f32 %v5045, %v5091
    %v5093 = vsub.f32 1.0, %v5092
    %v5094 = vmul.f32 %v5091, %v5093
    %v5095 = vadd.f32 %v5091, %v5094
    %vm5096 = vweird.f32 %v5045
    %vm5097 = vweird.f32 %v5091
    %vm5098 = vmor %vm5096, %vm5097
    %v5099 = vsel %vm5098, %v5091, %v5095
    %v5100 = vand.u32 2147483647, %v5045
    %vm5101 = vcmp.eq.f32.partialorder %v5100, 8.507059e+37
    %v5102 = vand.u32 %v5045, 2147483648
    %v5103 = vor.u32 1.1754944e-38, %v5102
    %v5104 = vsel %vm5101, %v5103, %v5099
    %v5105 = vmul.f32 1.0, %v5104
    %v5106 = vadd.f32 %v4826, %v1490
    %v5107 = vadd.f32 %v4865, %v1491
    %v5108 = vadd.f32 %v4904, %v1492
    %v5109 = vadd.f32 %v4943, %v1493
    %v5110 = vmul.f32 %v4980, %v5106
    %v5111 = vmul.f32 %v4995, %v5107
    %v5112 = vmul.f32 %v5010, %v5108
    %v5113 = vmul.f32 %v5025, %v5109
    %v5114 = vadd.f32 %v4776, %v5110
    %v5115 = vadd.f32 %v4779, %v5111
    %v5116 = vadd.f32 %v4782, %v5112
    %v5117 = vadd.f32 %v4785, %v5113
    %v5118 = vtanh.pop %v5114
    %v5119 = vtanh.pop %v5115
    %v5120 = vtanh.pop %v5116
    %v5121 = vtanh.pop %v5117
    %v5122 = vsub.f32 1.0, %v5060
    %v5123 = vsub.f32 1.0, %v5075
    %v5124 = vsub.f32 1.0, %v5090
    %v5125 = vsub.f32 1.0, %v5105
    %v5126 = vmul.f32 %v5122, %v5118
    %v5127 = vmul.f32 %v5123, %v5119
    %v5128 = vmul.f32 %v5124, %v5120
    %v5129 = vmul.f32 %v5125, %v5121
    %v5130 = vmul.f32 %v5060, %v4767
    %v5131 = vmul.f32 %v5075, %v4768
    %v5132 = vmul.f32 %v5090, %v4769
    %v5133 = vmul.f32 %v5105, %v4770
    %v5134 = vadd.f32 %v5126, %v5130
    %v5135 = vadd.f32 %v5127, %v5131
    %v5136 = vadd.f32 %v5128, %v5132
    %v5137 = vadd.f32 %v5129, %v5133
    %vm5138 = vcmp.gt.s32.totalorder %v1478, 7
    %vm5139 = vcmp.gt.s32.totalorder %v1479, 7
    %vm5140 = vcmp.gt.s32.totalorder %v1480, 7
    %vm5141 = vcmp.gt.s32.totalorder %v1481, 7
    %v5142 = vsel %vm5138, 1, 0
    %v5143 = vsel %vm5139, 1, 0
    %v5144 = vsel %vm5140, 1, 0
    %v5145 = vsel %vm5141, 1, 0
    %5146 = vset.pattern.permute.xlu0 0
    %5147 = vperm.xlu0 %5146, %v5142
    %v5148 = vpop.permute.xlu0 %5147
    %5149 = vset.pattern.permute.xlu0 0
    %5150 = vperm.xlu0 %5149, %v5143
    %v5151 = vpop.permute.xlu0 %5150
    %5152 = vset.pattern.permute.xlu0 0
    %5153 = vperm.xlu0 %5152, %v5144
    %v5154 = vpop.permute.xlu0 %5153
    %5155 = vset.pattern.permute.xlu0 0
    %5156 = vperm.xlu0 %5155, %v5145
    %v5157 = vpop.permute.xlu0 %5156
    %vm5158 = vcmp.eq.s32.totalorder %v5148, 1
    %vm5159 = vcmp.eq.s32.totalorder %v5151, 1
    %vm5160 = vcmp.eq.s32.totalorder %v5154, 1
    %vm5161 = vcmp.eq.s32.totalorder %v5157, 1
    %v5162 = vsel %vm5158, %v5134, %v4767
    %v5163 = vsel %vm5159, %v5135, %v4768
    %v5164 = vsel %vm5160, %v5136, %v4769
    %v5165 = vsel %vm5161, %v5137, %v4770
    %v5166 = vpack.c.bf16 %v5162, %v5162
    %v5167 = vld [vmem:[#allocation9] sm:$0xff]
    %v5168 = vld [vmem:[#allocation9 + $0x8] sm:$0xff]
    %v5169 = vld [vmem:[#allocation9 + $0x10] sm:$0xff]
    %v5170 = vld [vmem:[#allocation9 + $0x18] sm:$0xff]
    %v5171 = vld [vmem:[#allocation9 + $0x20] sm:$0xff]
    %v5172 = vld [vmem:[#allocation9 + $0x28] sm:$0xff]
    %v5173 = vld [vmem:[#allocation9 + $0x30] sm:$0xff]
    %v5174 = vld [vmem:[#allocation9 + $0x38] sm:$0xff]
    %v5175 = vld [vmem:[#allocation9 + $0x40] sm:$0xff]
    %v5176 = vld [vmem:[#allocation9 + $0x48] sm:$0xff]
    %v5177 = vld [vmem:[#allocation9 + $0x50] sm:$0xff]
    %v5178 = vld [vmem:[#allocation9 + $0x58] sm:$0xff]
    %v5179 = vld [vmem:[#allocation9 + $0x60] sm:$0xff]
    %v5180 = vld [vmem:[#allocation9 + $0x68] sm:$0xff]
    %v5181 = vld [vmem:[#allocation9 + $0x70] sm:$0xff]
    %v5182 = vld [vmem:[#allocation9 + $0x78] sm:$0xff]
    %v5183 = vpack.c.bf16 %v5163, %v5163
    %s5184 = scalar_lea.vmem [#allocation9], 128
    %v5185 = vld [vmem:[%s5184] sm:$0xff]
    %v5186 = vld [vmem:[%s5184 + $0x8] sm:$0xff]
    %v5187 = vld [vmem:[%s5184 + $0x10] sm:$0xff]
    %v5188 = vld [vmem:[%s5184 + $0x18] sm:$0xff]
    %v5189 = vld [vmem:[%s5184 + $0x20] sm:$0xff]
    %v5190 = vld [vmem:[%s5184 + $0x28] sm:$0xff]
    %v5191 = vld [vmem:[%s5184 + $0x30] sm:$0xff]
    %v5192 = vld [vmem:[%s5184 + $0x38] sm:$0xff]
    %v5193 = vld [vmem:[%s5184 + $0x40] sm:$0xff]
    %v5194 = vld [vmem:[%s5184 + $0x48] sm:$0xff]
    %v5195 = vld [vmem:[%s5184 + $0x50] sm:$0xff]
    %v5196 = vld [vmem:[%s5184 + $0x58] sm:$0xff]
    %v5197 = vld [vmem:[%s5184 + $0x60] sm:$0xff]
    %v5198 = vld [vmem:[%s5184 + $0x68] sm:$0xff]
    %v5199 = vld [vmem:[%s5184 + $0x70] sm:$0xff]
    %v5200 = vld [vmem:[%s5184 + $0x78] sm:$0xff]
    %v5217 = vunpack.c.l.b16 %v5185
    %v5218 = vunpack.c.h.b16 %v5185
    %v5219 = vunpack.c.l.b16 %v5186
    %v5220 = vunpack.c.h.b16 %v5186
    %v5221 = vunpack.c.l.b16 %v5187
    %v5222 = vunpack.c.h.b16 %v5187
    %v5223 = vunpack.c.l.b16 %v5188
    %v5224 = vunpack.c.h.b16 %v5188
    %v5225 = vunpack.c.l.b16 %v5189
    %v5226 = vunpack.c.h.b16 %v5189
    %v5227 = vunpack.c.l.b16 %v5190
    %v5228 = vunpack.c.h.b16 %v5190
    %v5229 = vunpack.c.l.b16 %v5191
    %v5230 = vunpack.c.h.b16 %v5191
    %v5231 = vunpack.c.l.b16 %v5192
    %v5232 = vunpack.c.h.b16 %v5192
    %v5233 = vunpack.c.l.b16 %v5193
    %v5234 = vunpack.c.h.b16 %v5193
    %v5235 = vunpack.c.l.b16 %v5194
    %v5236 = vunpack.c.h.b16 %v5194
    %v5237 = vunpack.c.l.b16 %v5195
    %v5238 = vunpack.c.h.b16 %v5195
    %v5239 = vunpack.c.l.b16 %v5196
    %v5240 = vunpack.c.h.b16 %v5196
    %v5241 = vunpack.c.l.b16 %v5197
    %v5242 = vunpack.c.h.b16 %v5197
    %v5243 = vunpack.c.l.b16 %v5198
    %v5244 = vunpack.c.h.b16 %v5198
    %v5245 = vunpack.c.l.b16 %v5199
    %v5246 = vunpack.c.h.b16 %v5199
    %v5247 = vunpack.c.l.b16 %v5200
    %v5248 = vunpack.c.h.b16 %v5200
    %v5249 = vpack.c.b16 %v5219, %v5217
    %v5250 = vpack.c.b16 %v5220, %v5218
    %v5251 = vpack.c.b16 %v5223, %v5221
    %v5252 = vpack.c.b16 %v5224, %v5222
    %v5253 = vpack.c.b16 %v5227, %v5225
    %v5254 = vpack.c.b16 %v5228, %v5226
    %v5255 = vpack.c.b16 %v5231, %v5229
    %v5256 = vpack.c.b16 %v5232, %v5230
    %v5257 = vpack.c.b16 %v5235, %v5233
    %v5258 = vpack.c.b16 %v5236, %v5234
    %v5259 = vpack.c.b16 %v5239, %v5237
    %v5260 = vpack.c.b16 %v5240, %v5238
    %v5261 = vpack.c.b16 %v5243, %v5241
    %v5262 = vpack.c.b16 %v5244, %v5242
    %v5263 = vpack.c.b16 %v5247, %v5245
    %v5264 = vpack.c.b16 %v5248, %v5246
    %5281 = vmatpush.bf16.msra.mxu0 %v5263
    %5282 = vmatpush.bf16.msra.mxu0 %v5261
    %5283 = vmatpush.bf16.msra.mxu0 %v5259
    %5284 = vmatpush.bf16.msra.mxu0 %v5257
    %5285 = vmatpush.bf16.msra.mxu0 %v5255
    %5286 = vmatpush.bf16.msra.mxu0 %v5253
    %5287 = vmatpush.bf16.msra.mxu0 %v5251
    %5288 = vmatpush.bf16.msra.mxu0 %v5249
    %5289 = vmatmul.bf16.gmra.mxu0 %v5183
    %v5290 = vpop.f32.mrf.mxu0
    %v5291 = vadd.f32 0.0, %v5290
    %v5292 = vpop.f32.mrf.mxu0
    %5293 = vdwg.mxu0
    %5294 = vmatpush.bf16.msra.mxu0 %v5264
    %5295 = vmatpush.bf16.msra.mxu0 %v5262
    %5296 = vmatpush.bf16.msra.mxu0 %v5260
    %5297 = vmatpush.bf16.msra.mxu0 %v5258
    %5298 = vmatpush.bf16.msra.mxu0 %v5256
    %5299 = vmatpush.bf16.msra.mxu0 %v5254
    %5300 = vmatpush.bf16.msra.mxu0 %v5252
    %5301 = vmatpush.bf16.msra.mxu0 %v5250
    %5302 = vmatmul.bf16.gmra.mxu0 %v5183
    %v5303 = vpop.f32.mrf.mxu0
    %v5304 = vadd.f32 0.0, %v5303
    %v5305 = vpop.f32.mrf.mxu0
    %5306 = vdwg.mxu0
    %v5323 = vunpack.c.l.b16 %v5167
    %v5324 = vunpack.c.h.b16 %v5167
    %v5325 = vunpack.c.l.b16 %v5168
    %v5326 = vunpack.c.h.b16 %v5168
    %v5327 = vunpack.c.l.b16 %v5169
    %v5328 = vunpack.c.h.b16 %v5169
    %v5329 = vunpack.c.l.b16 %v5170
    %v5330 = vunpack.c.h.b16 %v5170
    %v5331 = vunpack.c.l.b16 %v5171
    %v5332 = vunpack.c.h.b16 %v5171
    %v5333 = vunpack.c.l.b16 %v5172
    %v5334 = vunpack.c.h.b16 %v5172
    %v5335 = vunpack.c.l.b16 %v5173
    %v5336 = vunpack.c.h.b16 %v5173
    %v5337 = vunpack.c.l.b16 %v5174
    %v5338 = vunpack.c.h.b16 %v5174
    %v5339 = vunpack.c.l.b16 %v5175
    %v5340 = vunpack.c.h.b16 %v5175
    %v5341 = vunpack.c.l.b16 %v5176
    %v5342 = vunpack.c.h.b16 %v5176
    %v5343 = vunpack.c.l.b16 %v5177
    %v5344 = vunpack.c.h.b16 %v5177
    %v5345 = vunpack.c.l.b16 %v5178
    %v5346 = vunpack.c.h.b16 %v5178
    %v5347 = vunpack.c.l.b16 %v5179
    %v5348 = vunpack.c.h.b16 %v5179
    %v5349 = vunpack.c.l.b16 %v5180
    %v5350 = vunpack.c.h.b16 %v5180
    %v5351 = vunpack.c.l.b16 %v5181
    %v5352 = vunpack.c.h.b16 %v5181
    %v5353 = vunpack.c.l.b16 %v5182
    %v5354 = vunpack.c.h.b16 %v5182
    %v5355 = vpack.c.b16 %v5325, %v5323
    %v5356 = vpack.c.b16 %v5326, %v5324
    %v5357 = vpack.c.b16 %v5329, %v5327
    %v5358 = vpack.c.b16 %v5330, %v5328
    %v5359 = vpack.c.b16 %v5333, %v5331
    %v5360 = vpack.c.b16 %v5334, %v5332
    %v5361 = vpack.c.b16 %v5337, %v5335
    %v5362 = vpack.c.b16 %v5338, %v5336
    %v5363 = vpack.c.b16 %v5341, %v5339
    %v5364 = vpack.c.b16 %v5342, %v5340
    %v5365 = vpack.c.b16 %v5345, %v5343
    %v5366 = vpack.c.b16 %v5346, %v5344
    %v5367 = vpack.c.b16 %v5349, %v5347
    %v5368 = vpack.c.b16 %v5350, %v5348
    %v5369 = vpack.c.b16 %v5353, %v5351
    %v5370 = vpack.c.b16 %v5354, %v5352
    %5387 = vmatpush.bf16.msra.mxu0 %v5369
    %5388 = vmatpush.bf16.msra.mxu0 %v5367
    %5389 = vmatpush.bf16.msra.mxu0 %v5365
    %5390 = vmatpush.bf16.msra.mxu0 %v5363
    %5391 = vmatpush.bf16.msra.mxu0 %v5361
    %5392 = vmatpush.bf16.msra.mxu0 %v5359
    %5393 = vmatpush.bf16.msra.mxu0 %v5357
    %5394 = vmatpush.bf16.msra.mxu0 %v5355
    %5395 = vmatmul.bf16.gmra.mxu0 %v5166
    %v5396 = vpop.f32.mrf.mxu0
    %v5397 = vadd.f32 %v5291, %v5396
    %v5398 = vpop.f32.mrf.mxu0
    %5399 = vdwg.mxu0
    %5400 = vmatpush.bf16.msra.mxu0 %v5370
    %5401 = vmatpush.bf16.msra.mxu0 %v5368
    %5402 = vmatpush.bf16.msra.mxu0 %v5366
    %5403 = vmatpush.bf16.msra.mxu0 %v5364
    %5404 = vmatpush.bf16.msra.mxu0 %v5362
    %5405 = vmatpush.bf16.msra.mxu0 %v5360
    %5406 = vmatpush.bf16.msra.mxu0 %v5358
    %5407 = vmatpush.bf16.msra.mxu0 %v5356
    %5408 = vmatmul.bf16.gmra.mxu0 %v5166
    %v5409 = vpop.f32.mrf.mxu0
    %v5410 = vadd.f32 %v5304, %v5409
    %v5411 = vpop.f32.mrf.mxu0
    %5412 = vdwg.mxu0
    %v5413 = vpack.c.bf16 %v5164, %v5164
    %s5414 = scalar_lea.vmem [#allocation9], 256
    %v5415 = vld [vmem:[%s5414] sm:$0xff]
    %v5416 = vld [vmem:[%s5414 + $0x8] sm:$0xff]
    %v5417 = vld [vmem:[%s5414 + $0x10] sm:$0xff]
    %v5418 = vld [vmem:[%s5414 + $0x18] sm:$0xff]
    %v5419 = vld [vmem:[%s5414 + $0x20] sm:$0xff]
    %v5420 = vld [vmem:[%s5414 + $0x28] sm:$0xff]
    %v5421 = vld [vmem:[%s5414 + $0x30] sm:$0xff]
    %v5422 = vld [vmem:[%s5414 + $0x38] sm:$0xff]
    %v5423 = vld [vmem:[%s5414 + $0x40] sm:$0xff]
    %v5424 = vld [vmem:[%s5414 + $0x48] sm:$0xff]
    %v5425 = vld [vmem:[%s5414 + $0x50] sm:$0xff]
    %v5426 = vld [vmem:[%s5414 + $0x58] sm:$0xff]
    %v5427 = vld [vmem:[%s5414 + $0x60] sm:$0xff]
    %v5428 = vld [vmem:[%s5414 + $0x68] sm:$0xff]
    %v5429 = vld [vmem:[%s5414 + $0x70] sm:$0xff]
    %v5430 = vld [vmem:[%s5414 + $0x78] sm:$0xff]
    %v5447 = vunpack.c.l.b16 %v5415
    %v5448 = vunpack.c.h.b16 %v5415
    %v5449 = vunpack.c.l.b16 %v5416
    %v5450 = vunpack.c.h.b16 %v5416
    %v5451 = vunpack.c.l.b16 %v5417
    %v5452 = vunpack.c.h.b16 %v5417
    %v5453 = vunpack.c.l.b16 %v5418
    %v5454 = vunpack.c.h.b16 %v5418
    %v5455 = vunpack.c.l.b16 %v5419
    %v5456 = vunpack.c.h.b16 %v5419
    %v5457 = vunpack.c.l.b16 %v5420
    %v5458 = vunpack.c.h.b16 %v5420
    %v5459 = vunpack.c.l.b16 %v5421
    %v5460 = vunpack.c.h.b16 %v5421
    %v5461 = vunpack.c.l.b16 %v5422
    %v5462 = vunpack.c.h.b16 %v5422
    %v5463 = vunpack.c.l.b16 %v5423
    %v5464 = vunpack.c.h.b16 %v5423
    %v5465 = vunpack.c.l.b16 %v5424
    %v5466 = vunpack.c.h.b16 %v5424
    %v5467 = vunpack.c.l.b16 %v5425
    %v5468 = vunpack.c.h.b16 %v5425
    %v5469 = vunpack.c.l.b16 %v5426
    %v5470 = vunpack.c.h.b16 %v5426
    %v5471 = vunpack.c.l.b16 %v5427
    %v5472 = vunpack.c.h.b16 %v5427
    %v5473 = vunpack.c.l.b16 %v5428
    %v5474 = vunpack.c.h.b16 %v5428
    %v5475 = vunpack.c.l.b16 %v5429
    %v5476 = vunpack.c.h.b16 %v5429
    %v5477 = vunpack.c.l.b16 %v5430
    %v5478 = vunpack.c.h.b16 %v5430
    %v5479 = vpack.c.b16 %v5449, %v5447
    %v5480 = vpack.c.b16 %v5450, %v5448
    %v5481 = vpack.c.b16 %v5453, %v5451
    %v5482 = vpack.c.b16 %v5454, %v5452
    %v5483 = vpack.c.b16 %v5457, %v5455
    %v5484 = vpack.c.b16 %v5458, %v5456
    %v5485 = vpack.c.b16 %v5461, %v5459
    %v5486 = vpack.c.b16 %v5462, %v5460
    %v5487 = vpack.c.b16 %v5465, %v5463
    %v5488 = vpack.c.b16 %v5466, %v5464
    %v5489 = vpack.c.b16 %v5469, %v5467
    %v5490 = vpack.c.b16 %v5470, %v5468
    %v5491 = vpack.c.b16 %v5473, %v5471
    %v5492 = vpack.c.b16 %v5474, %v5472
    %v5493 = vpack.c.b16 %v5477, %v5475
    %v5494 = vpack.c.b16 %v5478, %v5476
    %5511 = vmatpush.bf16.msra.mxu0 %v5493
    %5512 = vmatpush.bf16.msra.mxu0 %v5491
    %5513 = vmatpush.bf16.msra.mxu0 %v5489
    %5514 = vmatpush.bf16.msra.mxu0 %v5487
    %5515 = vmatpush.bf16.msra.mxu0 %v5485
    %5516 = vmatpush.bf16.msra.mxu0 %v5483
    %5517 = vmatpush.bf16.msra.mxu0 %v5481
    %5518 = vmatpush.bf16.msra.mxu0 %v5479
    %5519 = vmatmul.bf16.gmra.mxu0 %v5413
    %v5520 = vpop.f32.mrf.mxu0
    %v5521 = vadd.f32 0.0, %v5520
    %v5522 = vpop.f32.mrf.mxu0
    %5523 = vdwg.mxu0
    %5524 = vmatpush.bf16.msra.mxu0 %v5494
    %5525 = vmatpush.bf16.msra.mxu0 %v5492
    %5526 = vmatpush.bf16.msra.mxu0 %v5490
    %5527 = vmatpush.bf16.msra.mxu0 %v5488
    %5528 = vmatpush.bf16.msra.mxu0 %v5486
    %5529 = vmatpush.bf16.msra.mxu0 %v5484
    %5530 = vmatpush.bf16.msra.mxu0 %v5482
    %5531 = vmatpush.bf16.msra.mxu0 %v5480
    %5532 = vmatmul.bf16.gmra.mxu0 %v5413
    %v5533 = vpop.f32.mrf.mxu0
    %v5534 = vadd.f32 0.0, %v5533
    %v5535 = vpop.f32.mrf.mxu0
    %5536 = vdwg.mxu0
    %v5537 = vadd.f32 %v5397, %v5521
    %v5538 = vadd.f32 %v5410, %v5534
    %v5539 = vpack.c.bf16 %v5165, %v5165
    %s5540 = scalar_lea.vmem [#allocation9], 384
    %v5541 = vld [vmem:[%s5540] sm:$0xff]
    %v5542 = vld [vmem:[%s5540 + $0x8] sm:$0xff]
    %v5543 = vld [vmem:[%s5540 + $0x10] sm:$0xff]
    %v5544 = vld [vmem:[%s5540 + $0x18] sm:$0xff]
    %v5545 = vld [vmem:[%s5540 + $0x20] sm:$0xff]
    %v5546 = vld [vmem:[%s5540 + $0x28] sm:$0xff]
    %v5547 = vld [vmem:[%s5540 + $0x30] sm:$0xff]
    %v5548 = vld [vmem:[%s5540 + $0x38] sm:$0xff]
    %v5549 = vld [vmem:[%s5540 + $0x40] sm:$0xff]
    %v5550 = vld [vmem:[%s5540 + $0x48] sm:$0xff]
    %v5551 = vld [vmem:[%s5540 + $0x50] sm:$0xff]
    %v5552 = vld [vmem:[%s5540 + $0x58] sm:$0xff]
    %v5553 = vld [vmem:[%s5540 + $0x60] sm:$0xff]
    %v5554 = vld [vmem:[%s5540 + $0x68] sm:$0xff]
    %v5555 = vld [vmem:[%s5540 + $0x70] sm:$0xff]
    %v5556 = vld [vmem:[%s5540 + $0x78] sm:$0xff]
    %v5573 = vunpack.c.l.b16 %v5541
    %v5574 = vunpack.c.h.b16 %v5541
    %v5575 = vunpack.c.l.b16 %v5542
    %v5576 = vunpack.c.h.b16 %v5542
    %v5577 = vunpack.c.l.b16 %v5543
    %v5578 = vunpack.c.h.b16 %v5543
    %v5579 = vunpack.c.l.b16 %v5544
    %v5580 = vunpack.c.h.b16 %v5544
    %v5581 = vunpack.c.l.b16 %v5545
    %v5582 = vunpack.c.h.b16 %v5545
    %v5583 = vunpack.c.l.b16 %v5546
    %v5584 = vunpack.c.h.b16 %v5546
    %v5585 = vunpack.c.l.b16 %v5547
    %v5586 = vunpack.c.h.b16 %v5547
    %v5587 = vunpack.c.l.b16 %v5548
    %v5588 = vunpack.c.h.b16 %v5548
    %v5589 = vunpack.c.l.b16 %v5549
    %v5590 = vunpack.c.h.b16 %v5549
    %v5591 = vunpack.c.l.b16 %v5550
    %v5592 = vunpack.c.h.b16 %v5550
    %v5593 = vunpack.c.l.b16 %v5551
    %v5594 = vunpack.c.h.b16 %v5551
    %v5595 = vunpack.c.l.b16 %v5552
    %v5596 = vunpack.c.h.b16 %v5552
    %v5597 = vunpack.c.l.b16 %v5553
    %v5598 = vunpack.c.h.b16 %v5553
    %v5599 = vunpack.c.l.b16 %v5554
    %v5600 = vunpack.c.h.b16 %v5554
    %v5601 = vunpack.c.l.b16 %v5555
    %v5602 = vunpack.c.h.b16 %v5555
    %v5603 = vunpack.c.l.b16 %v5556
    %v5604 = vunpack.c.h.b16 %v5556
    %v5605 = vpack.c.b16 %v5575, %v5573
    %v5606 = vpack.c.b16 %v5576, %v5574
    %v5607 = vpack.c.b16 %v5579, %v5577
    %v5608 = vpack.c.b16 %v5580, %v5578
    %v5609 = vpack.c.b16 %v5583, %v5581
    %v5610 = vpack.c.b16 %v5584, %v5582
    %v5611 = vpack.c.b16 %v5587, %v5585
    %v5612 = vpack.c.b16 %v5588, %v5586
    %v5613 = vpack.c.b16 %v5591, %v5589
    %v5614 = vpack.c.b16 %v5592, %v5590
    %v5615 = vpack.c.b16 %v5595, %v5593
    %v5616 = vpack.c.b16 %v5596, %v5594
    %v5617 = vpack.c.b16 %v5599, %v5597
    %v5618 = vpack.c.b16 %v5600, %v5598
    %v5619 = vpack.c.b16 %v5603, %v5601
    %v5620 = vpack.c.b16 %v5604, %v5602
    %5637 = vmatpush.bf16.msra.mxu0 %v5619
    %5638 = vmatpush.bf16.msra.mxu0 %v5617
    %5639 = vmatpush.bf16.msra.mxu0 %v5615
    %5640 = vmatpush.bf16.msra.mxu0 %v5613
    %5641 = vmatpush.bf16.msra.mxu0 %v5611
    %5642 = vmatpush.bf16.msra.mxu0 %v5609
    %5643 = vmatpush.bf16.msra.mxu0 %v5607
    %5644 = vmatpush.bf16.msra.mxu0 %v5605
    %5645 = vmatmul.bf16.gmra.mxu0 %v5539
    %v5646 = vpop.f32.mrf.mxu0
    %v5647 = vadd.f32 0.0, %v5646
    %v5648 = vpop.f32.mrf.mxu0
    %5649 = vdwg.mxu0
    %5650 = vmatpush.bf16.msra.mxu0 %v5620
    %5651 = vmatpush.bf16.msra.mxu0 %v5618
    %5652 = vmatpush.bf16.msra.mxu0 %v5616
    %5653 = vmatpush.bf16.msra.mxu0 %v5614
    %5654 = vmatpush.bf16.msra.mxu0 %v5612
    %5655 = vmatpush.bf16.msra.mxu0 %v5610
    %5656 = vmatpush.bf16.msra.mxu0 %v5608
    %5657 = vmatpush.bf16.msra.mxu0 %v5606
    %5658 = vmatmul.bf16.gmra.mxu0 %v5539
    %v5659 = vpop.f32.mrf.mxu0
    %v5660 = vadd.f32 0.0, %v5659
    %v5661 = vpop.f32.mrf.mxu0
    %5662 = vdwg.mxu0
    %v5663 = vadd.f32 %v5537, %v5647
    %v5664 = vadd.f32 %v5538, %v5660
    %v5665 = vld [vmem:[%s7] sm:$0x3]
    %v5667 = vperm.slane %v5665, 0
    %v5668 = vperm.slane %v5665, 1
    %v5671 = vadd.f32 %v5663, %v5667
    %v5672 = vadd.f32 %v5664, %v5668
    %v5673 = vmax.f32 %v5671, 0.0
    %v5674 = vmax.f32 %v5672, 0.0
    %5675 = vst [vmem:[#allocation11] sm:$0xff] %v5673
    %5676 = vst [vmem:[#allocation11 + $0x8] sm:$0xff] %v5674
    // Predicated region
    $region50: #{tpu_custom_call.1} parent=1 // pred_check
      _
    $region51: #{tpu_custom_call.1} parent=1 // pred_check_branch
      %5678 = sbr.rel (0) target = $region53
    $region52: #{tpu_custom_call.1} parent=1 // pred_region
      %5680 = vsyncadd [#allocation5], 0
      %s5682 = sshll.u32 [#allocation11], 4
      %s5683 = int_to_ptr.vmem [resolvable:$true] %s5682
      %s5684 = sshll.u32 %s8, 4
      %s5685 = int_to_ptr.hbm [resolvable:$true] %s5684
      %5687 = dma.vmem_to_hbm [thread:$0]  %s5683, 256, %s5685, [#allocation5]
    $region53: #{tpu_custom_call.1} parent=1 // pred_fallthru
      _
    // Predicated region
    $region54: #{tpu_custom_call.1} parent=1 // pred_check
      _
    $region55: #{tpu_custom_call.1} parent=1 // pred_check_branch
      %5689 = sbr.rel (0) target = $region57
    $region56: #{tpu_custom_call.1} parent=1 // pred_region
      %5691 = dma.done [#allocation5], 256
    $region57: #{tpu_custom_call.1} parent=1 // pred_fallthru
      _
    %5692 = vsyncpa [#allocation4], 1
    %5693 = vsyncpa [#allocation7], 1
    %5694 = vsyncpa [#allocation10], 1
    %5695 = vsyncpa [#allocation5], 1

</llo_original>
